<compile_context>
chip_gen: v7x
topology: tpu7x:2x2x1
jax: 0.10.0
libtpu: 0.0.40
codegen_flags: <defaults>
</compile_context>

<pallas_src>
import functools

import jax
import jax.numpy as jnp
from jax.experimental import pallas as pl
from jax.experimental.pallas import tpu as pltpu

# ----- small synthetic CLIP-text config -------------------------------------
VOCAB = 64     # vocab size (EOT token = VOCAB - 1, the max id -> argmax pooling)
S = 8          # max_length analogue
D = 32         # hidden_size
H = 4          # num attention heads
DH = D // H    # head dim
FF = 4 * D     # MLP intermediate size
LAYERS = 2     # transformer layers
PROJ = 16      # projection_dim (text_projection output)
EPS = 1e-5
NEG = -1e9


def _layernorm(x, g, b):
    mu = jnp.mean(x, axis=-1, keepdims=True)
    var = jnp.mean(jnp.square(x - mu), axis=-1, keepdims=True)
    return (x - mu) * jax.lax.rsqrt(var + EPS) * g + b


def _mm(a, w):
    # bf16 operands on the MXU, f32 accumulation.
    return jnp.dot(a.astype(jnp.bfloat16), w.astype(jnp.bfloat16),
                   preferred_element_type=jnp.float32)


# ----- fused encoder kernel ---------------------------------------------------
def clip_text_kernel(eot_ref,                     # scalar prefetch: (B,) int32 in SMEM
                     x_ref, bias_ref,             # (B,S,D) f32, (B,S,S) f32
                     ln1g_ref, ln1b_ref,          # (L,1,D)
                     wqkv_ref, bqkv_ref,          # (L,D,3D) bf16, (L,1,3D) f32
                     wo_ref, bo_ref,              # (L,D,D) bf16, (L,1,D) f32
                     ln2g_ref, ln2b_ref,          # (L,1,D)
                     w1_ref, b1_ref,              # (L,D,FF) bf16, (L,1,FF) f32
                     w2_ref, b2_ref,              # (L,FF,D) bf16, (L,1,D) f32
                     lnfg_ref, lnfb_ref,          # (1,D)
                     proj_ref,                    # (D,PROJ) bf16
                     out_ref,                     # (B,PROJ) f32
                     hid_ref):                    # VMEM scratch (B*S, D) f32
    B = x_ref.shape[0]

    x = x_ref[...].reshape(B * S, D)              # (BS, D) f32, resident for all layers
    bias = bias_ref[...]                          # (B, S, S) additive attention bias
    scale = DH ** -0.5

    for l in range(LAYERS):                       # static layer loop, weights in VMEM
        # ---- self-attention block (pre-LN) ----
        h = _layernorm(x, ln1g_ref[l], ln1b_ref[l])
        qkv = _mm(h, wqkv_ref[l]) + bqkv_ref[l]   # fused QKV: (BS, 3D)
        q = qkv[:, :D] * scale
        k = qkv[:, D:2 * D]
        v = qkv[:, 2 * D:]

        wo_l = wo_ref[l]                          # (D, D), loaded once per layer
        attn = jnp.zeros((B * S, D), jnp.float32)
        for hh in range(H):                       # static per-head loop, batched over B
            sl = slice(hh * DH, (hh + 1) * DH)
            qh = q[:, sl].reshape(B, S, DH)
            kh = k[:, sl].reshape(B, S, DH)
            vh = v[:, sl].reshape(B, S, DH)
            sc = jnp.einsum('bqd,bkd->bqk',
                            qh.astype(jnp.bfloat16), kh.astype(jnp.bfloat16),
                            preferred_element_type=jnp.float32) + bias
            sc = sc - jnp.max(sc, axis=-1, keepdims=True)
            p = jnp.exp(sc)
            p = p * pl.reciprocal(jnp.sum(p, axis=-1, keepdims=True), approx=True)
            ctx = jnp.einsum('bqk,bkd->bqd',
                             p.astype(jnp.bfloat16), vh.astype(jnp.bfloat16),
                             preferred_element_type=jnp.float32)      # (B, S, DH)
            # fold this head through its rows of the output projection
            # (equivalent to concat(heads) @ Wo, without the lane concat)
            attn = attn + _mm(ctx.reshape(B * S, DH), wo_l[sl, :])
        x = x + attn + bo_ref[l]

        # ---- MLP block (pre-LN, quickGELU) ----
        h2 = _layernorm(x, ln2g_ref[l], ln2b_ref[l])
        ff = _mm(h2, w1_ref[l]) + b1_ref[l]
        ff = ff * jax.nn.sigmoid(1.702 * ff)      # quick_gelu
        x = x + _mm(ff, w2_ref[l]) + b2_ref[l]

    # ---- final layer norm ----
    x = _layernorm(x, lnfg_ref[...], lnfb_ref[...])
    hid_ref[...] = x

    # ---- EOT pooling (SMEM-indexed row reads) + text projection ----
    rows = []
    for b in range(B):
        start = b * S + eot_ref[b]
        rows.append(hid_ref[pl.ds(start, 1), :])  # (1, D)
    pooled = jnp.concatenate(rows, axis=0)        # (B, D)
    out_ref[...] = _mm(pooled, proj_ref[...])     # (B, PROJ)


# ----- wrapper ----------------------------------------------------------------
def run_encoder(x_emb, bias, eot_pos, params):
    B = x_emb.shape[0]
    bf = jnp.bfloat16

    # per-layer weights are stacked with a leading layer dim; matmul weights pre-cast
    # to bf16 (halves their DMA bytes), LN params / biases stay f32.
    weights = [
        params["ln1_g"], params["ln1_b"],
        params["wqkv"].astype(bf), params["bqkv"],
        params["wo"].astype(bf), params["bo"],
        params["ln2_g"], params["ln2_b"],
        params["w1"].astype(bf), params["b1"],
        params["w2"].astype(bf), params["b2"],
        params["lnf_g"], params["lnf_b"],
        params["text_proj"].astype(bf),
    ]

    def full_spec(a):
        nd = a.ndim
        return pl.BlockSpec(a.shape, lambda i, eot, _nd=nd: (0,) * _nd)

    in_specs = ([pl.BlockSpec((B, S, D), lambda i, eot: (0, 0, 0)),
                 pl.BlockSpec((B, S, S), lambda i, eot: (0, 0, 0))]
                + [full_spec(w) for w in weights])

    grid_spec = pltpu.PrefetchScalarGridSpec(
        num_scalar_prefetch=1,
        grid=(1,),
        in_specs=in_specs,
        out_specs=pl.BlockSpec((B, PROJ), lambda i, eot: (0, 0)),
        scratch_shapes=[pltpu.VMEM((B * S, D), jnp.float32)],
    )

    return pl.pallas_call(
        clip_text_kernel,
        out_shape=jax.ShapeDtypeStruct((B, PROJ), jnp.float32),
        grid_spec=grid_spec,
        compiler_params=pltpu.CompilerParams(
            dimension_semantics=("arbitrary",),
            vmem_limit_bytes=32 * 1024 * 1024),
    )(eot_pos, x_emb, bias, *weights)


# ----- parameter construction -------------------------------------------------
def init_params(key):
    ks = iter(jax.random.split(key, 8))

    def w(shape, scale=0.02):
        return (scale * jax.random.normal(next(ks), shape)).astype(jnp.float32)

    return {
        "tok_emb": w((VOCAB, D)),
        "pos_emb": w((S, D)),
        "ln1_g": jnp.ones((LAYERS, 1, D), jnp.float32),
        "ln1_b": jnp.zeros((LAYERS, 1, D), jnp.float32),
        "wqkv": w((LAYERS, D, 3 * D)),
        "bqkv": jnp.zeros((LAYERS, 1, 3 * D), jnp.float32),
        "wo": w((LAYERS, D, D)),
        "bo": jnp.zeros((LAYERS, 1, D), jnp.float32),
        "ln2_g": jnp.ones((LAYERS, 1, D), jnp.float32),
        "ln2_b": jnp.zeros((LAYERS, 1, D), jnp.float32),
        "w1": w((LAYERS, D, FF)),
        "b1": jnp.zeros((LAYERS, 1, FF), jnp.float32),
        "w2": w((LAYERS, FF, D)),
        "b2": jnp.zeros((LAYERS, 1, D), jnp.float32),
        "lnf_g": jnp.ones((1, D), jnp.float32),
        "lnf_b": jnp.zeros((1, D), jnp.float32),
        "text_proj": w((D, PROJ)),
    }


# ----- full forward (get_text_features, return_cls_only) -----------------------
@functools.partial(jax.jit, static_argnames=("return_cls_only",))
def clip_text_encoder_forward(params, token_ids, attn_mask, return_cls_only=True):
    B = token_ids.shape[0]

    # embeddings (XLA glue: table gather + position add)
    x = jnp.take(params["tok_emb"], token_ids, axis=0) + params["pos_emb"][None]

    # additive attention bias: causal AND key-not-padded, computed once for all layers
    qi = jax.lax.broadcasted_iota(jnp.int32, (S, S), 0)
    ki = jax.lax.broadcasted_iota(jnp.int32, (S, S), 1)
    keep = (ki <= qi)[None] & (attn_mask[:, None, :] > 0.5)
    bias = jnp.where(keep, 0.0, NEG).astype(jnp.float32)        # (B, S, S)

    # EOT position = argmax(token id) per sequence (EOT has the largest id)
    eot_pos = jnp.argmax(token_ids, axis=-1).astype(jnp.int32)  # (B,)

    text_embeds = run_encoder(x, bias, eot_pos, params)         # (B, PROJ)

    if return_cls_only:
        return text_embeds
    return text_embeds[:, None, :]


if __name__ == "__main__":
    key = jax.random.PRNGKey(0)
    pkey, tkey = jax.random.split(key)

    params = init_params(pkey)

    B = 2
    # synthetic "tokenized" batch: ids in [1, VOCAB-2], EOT token = VOCAB-1,
    # sequence 1 is padded after position 5 (pad id 0, mask 0).
    ids = jax.random.randint(tkey, (B, S), 1, VOCAB - 1).astype(jnp.int32)
    ids = ids.at[0, S - 1].set(VOCAB - 1)
    ids = ids.at[1, 5].set(VOCAB - 1)
    ids = ids.at[1, 6:].set(0)
    attn_mask = jnp.ones((B, S), jnp.float32).at[1, 6:].set(0.0)

    out = clip_text_encoder_forward(params, ids, attn_mask, return_cls_only=True)
    out = jax.block_until_ready(out)
    assert out.shape == (B, PROJ) and out.dtype == jnp.float32
    assert bool(jnp.all(jnp.isfinite(out)))

    out_seq = jax.block_until_ready(
        clip_text_encoder_forward(params, ids, attn_mask, return_cls_only=False))
    assert out_seq.shape == (B, 1, PROJ)

    print("KERNEL_OK")
</pallas_src>

<mosaic_0001>
module attributes {stable_mosaic.version = 11 : i64} {
  func.func @clip_text_kernel(%arg0: i32, %arg1: memref<2xi32, #tpu.memory_space<smem>>, %arg2: memref<2x8x32xf32, #tpu.memory_space<vmem>>, %arg3: memref<2x8x8xf32, #tpu.memory_space<vmem>>, %arg4: memref<2x1x32xf32, #tpu.memory_space<vmem>>, %arg5: memref<2x1x32xf32, #tpu.memory_space<vmem>>, %arg6: memref<2x32x96xbf16, #tpu.memory_space<vmem>>, %arg7: memref<2x1x96xf32, #tpu.memory_space<vmem>>, %arg8: memref<2x32x32xbf16, #tpu.memory_space<vmem>>, %arg9: memref<2x1x32xf32, #tpu.memory_space<vmem>>, %arg10: memref<2x1x32xf32, #tpu.memory_space<vmem>>, %arg11: memref<2x1x32xf32, #tpu.memory_space<vmem>>, %arg12: memref<2x32x128xbf16, #tpu.memory_space<vmem>>, %arg13: memref<2x1x128xf32, #tpu.memory_space<vmem>>, %arg14: memref<2x128x32xbf16, #tpu.memory_space<vmem>>, %arg15: memref<2x1x32xf32, #tpu.memory_space<vmem>>, %arg16: memref<1x32xf32, #tpu.memory_space<vmem>>, %arg17: memref<1x32xf32, #tpu.memory_space<vmem>>, %arg18: memref<32x16xbf16, #tpu.memory_space<vmem>>, %arg19: memref<2x16xf32, #tpu.memory_space<vmem>>, %arg20: memref<16x32xf32, #tpu.memory_space<vmem>>) attributes {dimension_semantics = [#tpu.dimension_semantics<arbitrary>], iteration_bounds = array<i64: 1>, scalar_prefetch = 1 : i64, scratch_operands = 1 : i64, tpu.core_type = #tpu.core_type<tc>, window_params = [{pipeline_mode = #tpu.pipeline_mode<synchronous>, transform_indices = @transform_0, window_bounds = array<i64: 2, 8, 32>}, {pipeline_mode = #tpu.pipeline_mode<synchronous>, transform_indices = @transform_1, window_bounds = array<i64: 2, 8, 8>}, {pipeline_mode = #tpu.pipeline_mode<synchronous>, transform_indices = @transform_2, window_bounds = array<i64: 2, 1, 32>}, {pipeline_mode = #tpu.pipeline_mode<synchronous>, transform_indices = @transform_3, window_bounds = array<i64: 2, 1, 32>}, {pipeline_mode = #tpu.pipeline_mode<synchronous>, transform_indices = @transform_4, window_bounds = array<i64: 2, 32, 96>}, {pipeline_mode = #tpu.pipeline_mode<synchronous>, transform_indices = @transform_5, window_bounds = array<i64: 2, 1, 96>}, {pipeline_mode = #tpu.pipeline_mode<synchronous>, transform_indices = @transform_6, window_bounds = array<i64: 2, 32, 32>}, {pipeline_mode = #tpu.pipeline_mode<synchronous>, transform_indices = @transform_7, window_bounds = array<i64: 2, 1, 32>}, {pipeline_mode = #tpu.pipeline_mode<synchronous>, transform_indices = @transform_8, window_bounds = array<i64: 2, 1, 32>}, {pipeline_mode = #tpu.pipeline_mode<synchronous>, transform_indices = @transform_9, window_bounds = array<i64: 2, 1, 32>}, {pipeline_mode = #tpu.pipeline_mode<synchronous>, transform_indices = @transform_10, window_bounds = array<i64: 2, 32, 128>}, {pipeline_mode = #tpu.pipeline_mode<synchronous>, transform_indices = @transform_11, window_bounds = array<i64: 2, 1, 128>}, {pipeline_mode = #tpu.pipeline_mode<synchronous>, transform_indices = @transform_12, window_bounds = array<i64: 2, 128, 32>}, {pipeline_mode = #tpu.pipeline_mode<synchronous>, transform_indices = @transform_13, window_bounds = array<i64: 2, 1, 32>}, {pipeline_mode = #tpu.pipeline_mode<synchronous>, transform_indices = @transform_14, window_bounds = array<i64: 1, 32>}, {pipeline_mode = #tpu.pipeline_mode<synchronous>, transform_indices = @transform_15, window_bounds = array<i64: 1, 32>}, {pipeline_mode = #tpu.pipeline_mode<synchronous>, transform_indices = @transform_16, window_bounds = array<i64: 32, 16>}, {pipeline_mode = #tpu.pipeline_mode<synchronous>, transform_indices = @transform_17, window_bounds = array<i64: 2, 16>}]} {
    %c0 = arith.constant 0 : index
    %c0_0 = arith.constant 0 : index
    %c0_1 = arith.constant 0 : index
    %0 = vector.load %arg2[%c0, %c0_0, %c0_1] : memref<2x8x32xf32, #tpu.memory_space<vmem>>, vector<2x8x32xf32>
    %1 = vector.shape_cast %0 : vector<2x8x32xf32> to vector<16x32xf32>
    %c0_2 = arith.constant 0 : index
    %c0_3 = arith.constant 0 : index
    %c0_4 = arith.constant 0 : index
    %2 = vector.load %arg3[%c0_2, %c0_3, %c0_4] : memref<2x8x8xf32, #tpu.memory_space<vmem>>, vector<2x8x8xf32>
    %c0_5 = arith.constant 0 : index
    %c0_6 = arith.constant 0 : index
    %c0_7 = arith.constant 0 : index
    %3 = vector.load %arg4[%c0_5, %c0_6, %c0_7] : memref<2x1x32xf32, #tpu.memory_space<vmem>>, vector<1x1x32xf32>
    %4 = vector.shape_cast %3 : vector<1x1x32xf32> to vector<1x32xf32>
    %c0_8 = arith.constant 0 : index
    %c0_9 = arith.constant 0 : index
    %c0_10 = arith.constant 0 : index
    %5 = vector.load %arg5[%c0_8, %c0_9, %c0_10] : memref<2x1x32xf32, #tpu.memory_space<vmem>>, vector<1x1x32xf32>
    %6 = vector.shape_cast %5 : vector<1x1x32xf32> to vector<1x32xf32>
    %cst = arith.constant dense<0.000000e+00> : vector<16xf32>
    %7 = vector.multi_reduction <add>, %1, %cst [1] : vector<16x32xf32> to vector<16xf32>
    %8 = vector.shape_cast %7 : vector<16xf32> to vector<16x1xf32>
    %cst_11 = arith.constant 3.200000e+01 : f32
    %9 = vector.broadcast %cst_11 : f32 to vector<16x1xf32>
    %10 = arith.divf %8, %9 : vector<16x1xf32>
    %11 = vector.broadcast %10 : vector<16x1xf32> to vector<16x32xf32>
    %12 = arith.subf %1, %11 : vector<16x32xf32>
    %13 = arith.mulf %12, %12 : vector<16x32xf32>
    %cst_12 = arith.constant dense<0.000000e+00> : vector<16xf32>
    %14 = vector.multi_reduction <add>, %13, %cst_12 [1] : vector<16x32xf32> to vector<16xf32>
    %15 = vector.shape_cast %14 : vector<16xf32> to vector<16x1xf32>
    %cst_13 = arith.constant 3.200000e+01 : f32
    %16 = vector.broadcast %cst_13 : f32 to vector<16x1xf32>
    %17 = arith.divf %15, %16 : vector<16x1xf32>
    %18 = vector.broadcast %10 : vector<16x1xf32> to vector<16x32xf32>
    %19 = arith.subf %1, %18 : vector<16x32xf32>
    %cst_14 = arith.constant 9.99999974E-6 : f32
    %20 = vector.broadcast %cst_14 : f32 to vector<16x1xf32>
    %21 = arith.addf %17, %20 : vector<16x1xf32>
    %22 = math.rsqrt %21 : vector<16x1xf32>
    %23 = vector.broadcast %22 : vector<16x1xf32> to vector<16x32xf32>
    %24 = arith.mulf %19, %23 : vector<16x32xf32>
    %25 = vector.broadcast %4 : vector<1x32xf32> to vector<16x32xf32>
    %26 = arith.mulf %24, %25 : vector<16x32xf32>
    %27 = vector.broadcast %6 : vector<1x32xf32> to vector<16x32xf32>
    %28 = arith.addf %26, %27 : vector<16x32xf32>
    %c0_15 = arith.constant 0 : index
    %c0_16 = arith.constant 0 : index
    %c0_17 = arith.constant 0 : index
    %29 = vector.load %arg6[%c0_15, %c0_16, %c0_17] : memref<2x32x96xbf16, #tpu.memory_space<vmem>>, vector<1x32x96xbf16>
    %30 = vector.shape_cast %29 : vector<1x32x96xbf16> to vector<32x96xbf16>
    %31 = arith.truncf %28 : vector<16x32xf32> to vector<16x32xbf16>
    %cst_18 = arith.constant dense<0.000000e+00> : vector<16x96xf32>
    %32 = tpu.matmul %31, %30, %cst_18 {dimension_numbers = #tpu.dot_dimension_numbers<[1], [0], [0], [1], [0, 0, 1, 1], [], []>} : vector<16x32xbf16>, vector<32x96xbf16>, vector<16x96xf32> -> vector<16x96xf32>
    %c0_19 = arith.constant 0 : index
    %c0_20 = arith.constant 0 : index
    %c0_21 = arith.constant 0 : index
    %33 = vector.load %arg7[%c0_19, %c0_20, %c0_21] : memref<2x1x96xf32, #tpu.memory_space<vmem>>, vector<1x1x96xf32>
    %34 = vector.shape_cast %33 : vector<1x1x96xf32> to vector<1x96xf32>
    %35 = vector.broadcast %34 : vector<1x96xf32> to vector<16x96xf32>
    %36 = arith.addf %32, %35 : vector<16x96xf32>
    %37 = vector.extract_strided_slice %36 {offsets = [0, 0], sizes = [16, 32], strides = [1, 1]} : vector<16x96xf32> to vector<16x32xf32>
    %cst_22 = arith.constant 0.353553385 : f32
    %38 = vector.broadcast %cst_22 : f32 to vector<16x32xf32>
    %39 = arith.mulf %37, %38 : vector<16x32xf32>
    %40 = vector.extract_strided_slice %36 {offsets = [0, 32], sizes = [16, 32], strides = [1, 1]} : vector<16x96xf32> to vector<16x32xf32>
    %41 = vector.extract_strided_slice %36 {offsets = [0, 64], sizes = [16, 32], strides = [1, 1]} : vector<16x96xf32> to vector<16x32xf32>
    %c0_23 = arith.constant 0 : index
    %c0_24 = arith.constant 0 : index
    %c0_25 = arith.constant 0 : index
    %42 = vector.load %arg8[%c0_23, %c0_24, %c0_25] : memref<2x32x32xbf16, #tpu.memory_space<vmem>>, vector<1x32x32xbf16>
    %43 = vector.shape_cast %42 : vector<1x32x32xbf16> to vector<32x32xbf16>
    %cst_26 = arith.constant 0.000000e+00 : f32
    %44 = vector.broadcast %cst_26 : f32 to vector<16x32xf32>
    %45 = vector.extract_strided_slice %39 {offsets = [0, 0], sizes = [16, 8], strides = [1, 1]} : vector<16x32xf32> to vector<16x8xf32>
    %46 = vector.shape_cast %45 : vector<16x8xf32> to vector<2x8x8xf32>
    %47 = vector.extract_strided_slice %40 {offsets = [0, 0], sizes = [16, 8], strides = [1, 1]} : vector<16x32xf32> to vector<16x8xf32>
    %48 = vector.shape_cast %47 : vector<16x8xf32> to vector<2x8x8xf32>
    %49 = vector.extract_strided_slice %41 {offsets = [0, 0], sizes = [16, 8], strides = [1, 1]} : vector<16x32xf32> to vector<16x8xf32>
    %50 = vector.shape_cast %49 : vector<16x8xf32> to vector<2x8x8xf32>
    %51 = arith.truncf %46 : vector<2x8x8xf32> to vector<2x8x8xbf16>
    %52 = arith.truncf %48 : vector<2x8x8xf32> to vector<2x8x8xbf16>
    "tpu.trace_start"() <{level = 10 : i32, message = "bqd,bkd->bqk"}> : () -> ()
    %cst_27 = arith.constant dense<0.000000e+00> : vector<2x8x8xf32>
    %53 = tpu.matmul %51, %52, %cst_27 {dimension_numbers = #tpu.dot_dimension_numbers<[2], [2], [1], [1], [0, 0, 0, 1, 1, 1], [0], [0]>} : vector<2x8x8xbf16>, vector<2x8x8xbf16>, vector<2x8x8xf32> -> vector<2x8x8xf32>
    "tpu.trace_stop"() : () -> ()
    %54 = arith.addf %53, %2 : vector<2x8x8xf32>
    %cst_28 = arith.constant dense<0xFF800000> : vector<2x8xf32>
    %55 = vector.multi_reduction <maximumf>, %54, %cst_28 [2] : vector<2x8x8xf32> to vector<2x8xf32>
    %56 = vector.shape_cast %55 : vector<2x8xf32> to vector<2x8x1xf32>
    %57 = vector.broadcast %56 : vector<2x8x1xf32> to vector<2x8x8xf32>
    %58 = arith.subf %54, %57 : vector<2x8x8xf32>
    %59 = math.exp %58 : vector<2x8x8xf32>
    %cst_29 = arith.constant dense<0.000000e+00> : vector<2x8xf32>
    %60 = vector.multi_reduction <add>, %59, %cst_29 [2] : vector<2x8x8xf32> to vector<2x8xf32>
    %61 = vector.shape_cast %60 : vector<2x8xf32> to vector<2x8x1xf32>
    %62 = tpu.reciprocal %61 {approx = true} : vector<2x8x1xf32> -> vector<2x8x1xf32>
    %63 = vector.broadcast %62 : vector<2x8x1xf32> to vector<2x8x8xf32>
    %64 = arith.mulf %59, %63 : vector<2x8x8xf32>
    %65 = arith.truncf %64 : vector<2x8x8xf32> to vector<2x8x8xbf16>
    %66 = arith.truncf %50 : vector<2x8x8xf32> to vector<2x8x8xbf16>
    "tpu.trace_start"() <{level = 10 : i32, message = "bqk,bkd->bqd"}> : () -> ()
    %cst_30 = arith.constant dense<0.000000e+00> : vector<2x8x8xf32>
    %67 = tpu.matmul %65, %66, %cst_30 {dimension_numbers = #tpu.dot_dimension_numbers<[2], [1], [1], [2], [0, 0, 0, 1, 1, 2], [0], [0]>} : vector<2x8x8xbf16>, vector<2x8x8xbf16>, vector<2x8x8xf32> -> vector<2x8x8xf32>
    "tpu.trace_stop"() : () -> ()
    %68 = vector.shape_cast %67 : vector<2x8x8xf32> to vector<16x8xf32>
    %69 = vector.extract_strided_slice %43 {offsets = [0, 0], sizes = [8, 32], strides = [1, 1]} : vector<32x32xbf16> to vector<8x32xbf16>
    %70 = arith.truncf %68 : vector<16x8xf32> to vector<16x8xbf16>
    %cst_31 = arith.constant dense<0.000000e+00> : vector<16x32xf32>
    %71 = tpu.matmul %70, %69, %cst_31 {dimension_numbers = #tpu.dot_dimension_numbers<[1], [0], [0], [1], [0, 0, 1, 1], [], []>} : vector<16x8xbf16>, vector<8x32xbf16>, vector<16x32xf32> -> vector<16x32xf32>
    %72 = arith.addf %44, %71 : vector<16x32xf32>
    %73 = vector.extract_strided_slice %39 {offsets = [0, 8], sizes = [16, 8], strides = [1, 1]} : vector<16x32xf32> to vector<16x8xf32>
    %74 = vector.shape_cast %73 : vector<16x8xf32> to vector<2x8x8xf32>
    %75 = vector.extract_strided_slice %40 {offsets = [0, 8], sizes = [16, 8], strides = [1, 1]} : vector<16x32xf32> to vector<16x8xf32>
    %76 = vector.shape_cast %75 : vector<16x8xf32> to vector<2x8x8xf32>
    %77 = vector.extract_strided_slice %41 {offsets = [0, 8], sizes = [16, 8], strides = [1, 1]} : vector<16x32xf32> to vector<16x8xf32>
    %78 = vector.shape_cast %77 : vector<16x8xf32> to vector<2x8x8xf32>
    %79 = arith.truncf %74 : vector<2x8x8xf32> to vector<2x8x8xbf16>
    %80 = arith.truncf %76 : vector<2x8x8xf32> to vector<2x8x8xbf16>
    "tpu.trace_start"() <{level = 10 : i32, message = "bqd,bkd->bqk"}> : () -> ()
    %cst_32 = arith.constant dense<0.000000e+00> : vector<2x8x8xf32>
    %81 = tpu.matmul %79, %80, %cst_32 {dimension_numbers = #tpu.dot_dimension_numbers<[2], [2], [1], [1], [0, 0, 0, 1, 1, 1], [0], [0]>} : vector<2x8x8xbf16>, vector<2x8x8xbf16>, vector<2x8x8xf32> -> vector<2x8x8xf32>
    "tpu.trace_stop"() : () -> ()
    %82 = arith.addf %81, %2 : vector<2x8x8xf32>
    %cst_33 = arith.constant dense<0xFF800000> : vector<2x8xf32>
    %83 = vector.multi_reduction <maximumf>, %82, %cst_33 [2] : vector<2x8x8xf32> to vector<2x8xf32>
    %84 = vector.shape_cast %83 : vector<2x8xf32> to vector<2x8x1xf32>
    %85 = vector.broadcast %84 : vector<2x8x1xf32> to vector<2x8x8xf32>
    %86 = arith.subf %82, %85 : vector<2x8x8xf32>
    %87 = math.exp %86 : vector<2x8x8xf32>
    %cst_34 = arith.constant dense<0.000000e+00> : vector<2x8xf32>
    %88 = vector.multi_reduction <add>, %87, %cst_34 [2] : vector<2x8x8xf32> to vector<2x8xf32>
    %89 = vector.shape_cast %88 : vector<2x8xf32> to vector<2x8x1xf32>
    %90 = tpu.reciprocal %89 {approx = true} : vector<2x8x1xf32> -> vector<2x8x1xf32>
    %91 = vector.broadcast %90 : vector<2x8x1xf32> to vector<2x8x8xf32>
    %92 = arith.mulf %87, %91 : vector<2x8x8xf32>
    %93 = arith.truncf %92 : vector<2x8x8xf32> to vector<2x8x8xbf16>
    %94 = arith.truncf %78 : vector<2x8x8xf32> to vector<2x8x8xbf16>
    "tpu.trace_start"() <{level = 10 : i32, message = "bqk,bkd->bqd"}> : () -> ()
    %cst_35 = arith.constant dense<0.000000e+00> : vector<2x8x8xf32>
    %95 = tpu.matmul %93, %94, %cst_35 {dimension_numbers = #tpu.dot_dimension_numbers<[2], [1], [1], [2], [0, 0, 0, 1, 1, 2], [0], [0]>} : vector<2x8x8xbf16>, vector<2x8x8xbf16>, vector<2x8x8xf32> -> vector<2x8x8xf32>
    "tpu.trace_stop"() : () -> ()
    %96 = vector.shape_cast %95 : vector<2x8x8xf32> to vector<16x8xf32>
    %97 = vector.extract_strided_slice %43 {offsets = [8, 0], sizes = [8, 32], strides = [1, 1]} : vector<32x32xbf16> to vector<8x32xbf16>
    %98 = arith.truncf %96 : vector<16x8xf32> to vector<16x8xbf16>
    %cst_36 = arith.constant dense<0.000000e+00> : vector<16x32xf32>
    %99 = tpu.matmul %98, %97, %cst_36 {dimension_numbers = #tpu.dot_dimension_numbers<[1], [0], [0], [1], [0, 0, 1, 1], [], []>} : vector<16x8xbf16>, vector<8x32xbf16>, vector<16x32xf32> -> vector<16x32xf32>
    %100 = arith.addf %72, %99 : vector<16x32xf32>
    %101 = vector.extract_strided_slice %39 {offsets = [0, 16], sizes = [16, 8], strides = [1, 1]} : vector<16x32xf32> to vector<16x8xf32>
    %102 = vector.shape_cast %101 : vector<16x8xf32> to vector<2x8x8xf32>
    %103 = vector.extract_strided_slice %40 {offsets = [0, 16], sizes = [16, 8], strides = [1, 1]} : vector<16x32xf32> to vector<16x8xf32>
    %104 = vector.shape_cast %103 : vector<16x8xf32> to vector<2x8x8xf32>
    %105 = vector.extract_strided_slice %41 {offsets = [0, 16], sizes = [16, 8], strides = [1, 1]} : vector<16x32xf32> to vector<16x8xf32>
    %106 = vector.shape_cast %105 : vector<16x8xf32> to vector<2x8x8xf32>
    %107 = arith.truncf %102 : vector<2x8x8xf32> to vector<2x8x8xbf16>
    %108 = arith.truncf %104 : vector<2x8x8xf32> to vector<2x8x8xbf16>
    "tpu.trace_start"() <{level = 10 : i32, message = "bqd,bkd->bqk"}> : () -> ()
    %cst_37 = arith.constant dense<0.000000e+00> : vector<2x8x8xf32>
    %109 = tpu.matmul %107, %108, %cst_37 {dimension_numbers = #tpu.dot_dimension_numbers<[2], [2], [1], [1], [0, 0, 0, 1, 1, 1], [0], [0]>} : vector<2x8x8xbf16>, vector<2x8x8xbf16>, vector<2x8x8xf32> -> vector<2x8x8xf32>
    "tpu.trace_stop"() : () -> ()
    %110 = arith.addf %109, %2 : vector<2x8x8xf32>
    %cst_38 = arith.constant dense<0xFF800000> : vector<2x8xf32>
    %111 = vector.multi_reduction <maximumf>, %110, %cst_38 [2] : vector<2x8x8xf32> to vector<2x8xf32>
    %112 = vector.shape_cast %111 : vector<2x8xf32> to vector<2x8x1xf32>
    %113 = vector.broadcast %112 : vector<2x8x1xf32> to vector<2x8x8xf32>
    %114 = arith.subf %110, %113 : vector<2x8x8xf32>
    %115 = math.exp %114 : vector<2x8x8xf32>
    %cst_39 = arith.constant dense<0.000000e+00> : vector<2x8xf32>
    %116 = vector.multi_reduction <add>, %115, %cst_39 [2] : vector<2x8x8xf32> to vector<2x8xf32>
    %117 = vector.shape_cast %116 : vector<2x8xf32> to vector<2x8x1xf32>
    %118 = tpu.reciprocal %117 {approx = true} : vector<2x8x1xf32> -> vector<2x8x1xf32>
    %119 = vector.broadcast %118 : vector<2x8x1xf32> to vector<2x8x8xf32>
    %120 = arith.mulf %115, %119 : vector<2x8x8xf32>
    %121 = arith.truncf %120 : vector<2x8x8xf32> to vector<2x8x8xbf16>
    %122 = arith.truncf %106 : vector<2x8x8xf32> to vector<2x8x8xbf16>
    "tpu.trace_start"() <{level = 10 : i32, message = "bqk,bkd->bqd"}> : () -> ()
    %cst_40 = arith.constant dense<0.000000e+00> : vector<2x8x8xf32>
    %123 = tpu.matmul %121, %122, %cst_40 {dimension_numbers = #tpu.dot_dimension_numbers<[2], [1], [1], [2], [0, 0, 0, 1, 1, 2], [0], [0]>} : vector<2x8x8xbf16>, vector<2x8x8xbf16>, vector<2x8x8xf32> -> vector<2x8x8xf32>
    "tpu.trace_stop"() : () -> ()
    %124 = vector.shape_cast %123 : vector<2x8x8xf32> to vector<16x8xf32>
    %125 = vector.extract_strided_slice %43 {offsets = [16, 0], sizes = [8, 32], strides = [1, 1]} : vector<32x32xbf16> to vector<8x32xbf16>
    %126 = arith.truncf %124 : vector<16x8xf32> to vector<16x8xbf16>
    %cst_41 = arith.constant dense<0.000000e+00> : vector<16x32xf32>
    %127 = tpu.matmul %126, %125, %cst_41 {dimension_numbers = #tpu.dot_dimension_numbers<[1], [0], [0], [1], [0, 0, 1, 1], [], []>} : vector<16x8xbf16>, vector<8x32xbf16>, vector<16x32xf32> -> vector<16x32xf32>
    %128 = arith.addf %100, %127 : vector<16x32xf32>
    %129 = vector.extract_strided_slice %39 {offsets = [0, 24], sizes = [16, 8], strides = [1, 1]} : vector<16x32xf32> to vector<16x8xf32>
    %130 = vector.shape_cast %129 : vector<16x8xf32> to vector<2x8x8xf32>
    %131 = vector.extract_strided_slice %40 {offsets = [0, 24], sizes = [16, 8], strides = [1, 1]} : vector<16x32xf32> to vector<16x8xf32>
    %132 = vector.shape_cast %131 : vector<16x8xf32> to vector<2x8x8xf32>
    %133 = vector.extract_strided_slice %41 {offsets = [0, 24], sizes = [16, 8], strides = [1, 1]} : vector<16x32xf32> to vector<16x8xf32>
    %134 = vector.shape_cast %133 : vector<16x8xf32> to vector<2x8x8xf32>
    %135 = arith.truncf %130 : vector<2x8x8xf32> to vector<2x8x8xbf16>
    %136 = arith.truncf %132 : vector<2x8x8xf32> to vector<2x8x8xbf16>
    "tpu.trace_start"() <{level = 10 : i32, message = "bqd,bkd->bqk"}> : () -> ()
    %cst_42 = arith.constant dense<0.000000e+00> : vector<2x8x8xf32>
    %137 = tpu.matmul %135, %136, %cst_42 {dimension_numbers = #tpu.dot_dimension_numbers<[2], [2], [1], [1], [0, 0, 0, 1, 1, 1], [0], [0]>} : vector<2x8x8xbf16>, vector<2x8x8xbf16>, vector<2x8x8xf32> -> vector<2x8x8xf32>
    "tpu.trace_stop"() : () -> ()
    %138 = arith.addf %137, %2 : vector<2x8x8xf32>
    %cst_43 = arith.constant dense<0xFF800000> : vector<2x8xf32>
    %139 = vector.multi_reduction <maximumf>, %138, %cst_43 [2] : vector<2x8x8xf32> to vector<2x8xf32>
    %140 = vector.shape_cast %139 : vector<2x8xf32> to vector<2x8x1xf32>
    %141 = vector.broadcast %140 : vector<2x8x1xf32> to vector<2x8x8xf32>
    %142 = arith.subf %138, %141 : vector<2x8x8xf32>
    %143 = math.exp %142 : vector<2x8x8xf32>
    %cst_44 = arith.constant dense<0.000000e+00> : vector<2x8xf32>
    %144 = vector.multi_reduction <add>, %143, %cst_44 [2] : vector<2x8x8xf32> to vector<2x8xf32>
    %145 = vector.shape_cast %144 : vector<2x8xf32> to vector<2x8x1xf32>
    %146 = tpu.reciprocal %145 {approx = true} : vector<2x8x1xf32> -> vector<2x8x1xf32>
    %147 = vector.broadcast %146 : vector<2x8x1xf32> to vector<2x8x8xf32>
    %148 = arith.mulf %143, %147 : vector<2x8x8xf32>
    %149 = arith.truncf %148 : vector<2x8x8xf32> to vector<2x8x8xbf16>
    %150 = arith.truncf %134 : vector<2x8x8xf32> to vector<2x8x8xbf16>
    "tpu.trace_start"() <{level = 10 : i32, message = "bqk,bkd->bqd"}> : () -> ()
    %cst_45 = arith.constant dense<0.000000e+00> : vector<2x8x8xf32>
    %151 = tpu.matmul %149, %150, %cst_45 {dimension_numbers = #tpu.dot_dimension_numbers<[2], [1], [1], [2], [0, 0, 0, 1, 1, 2], [0], [0]>} : vector<2x8x8xbf16>, vector<2x8x8xbf16>, vector<2x8x8xf32> -> vector<2x8x8xf32>
    "tpu.trace_stop"() : () -> ()
    %152 = vector.shape_cast %151 : vector<2x8x8xf32> to vector<16x8xf32>
    %153 = vector.extract_strided_slice %43 {offsets = [24, 0], sizes = [8, 32], strides = [1, 1]} : vector<32x32xbf16> to vector<8x32xbf16>
    %154 = arith.truncf %152 : vector<16x8xf32> to vector<16x8xbf16>
    %cst_46 = arith.constant dense<0.000000e+00> : vector<16x32xf32>
    %155 = tpu.matmul %154, %153, %cst_46 {dimension_numbers = #tpu.dot_dimension_numbers<[1], [0], [0], [1], [0, 0, 1, 1], [], []>} : vector<16x8xbf16>, vector<8x32xbf16>, vector<16x32xf32> -> vector<16x32xf32>
    %156 = arith.addf %128, %155 : vector<16x32xf32>
    %157 = arith.addf %1, %156 : vector<16x32xf32>
    %c0_47 = arith.constant 0 : index
    %c0_48 = arith.constant 0 : index
    %c0_49 = arith.constant 0 : index
    %158 = vector.load %arg9[%c0_47, %c0_48, %c0_49] : memref<2x1x32xf32, #tpu.memory_space<vmem>>, vector<1x1x32xf32>
    %159 = vector.shape_cast %158 : vector<1x1x32xf32> to vector<1x32xf32>
    %160 = vector.broadcast %159 : vector<1x32xf32> to vector<16x32xf32>
    %161 = arith.addf %157, %160 : vector<16x32xf32>
    %c0_50 = arith.constant 0 : index
    %c0_51 = arith.constant 0 : index
    %c0_52 = arith.constant 0 : index
    %162 = vector.load %arg10[%c0_50, %c0_51, %c0_52] : memref<2x1x32xf32, #tpu.memory_space<vmem>>, vector<1x1x32xf32>
    %163 = vector.shape_cast %162 : vector<1x1x32xf32> to vector<1x32xf32>
    %c0_53 = arith.constant 0 : index
    %c0_54 = arith.constant 0 : index
    %c0_55 = arith.constant 0 : index
    %164 = vector.load %arg11[%c0_53, %c0_54, %c0_55] : memref<2x1x32xf32, #tpu.memory_space<vmem>>, vector<1x1x32xf32>
    %165 = vector.shape_cast %164 : vector<1x1x32xf32> to vector<1x32xf32>
    %cst_56 = arith.constant dense<0.000000e+00> : vector<16xf32>
    %166 = vector.multi_reduction <add>, %161, %cst_56 [1] : vector<16x32xf32> to vector<16xf32>
    %167 = vector.shape_cast %166 : vector<16xf32> to vector<16x1xf32>
    %cst_57 = arith.constant 3.200000e+01 : f32
    %168 = vector.broadcast %cst_57 : f32 to vector<16x1xf32>
    %169 = arith.divf %167, %168 : vector<16x1xf32>
    %170 = vector.broadcast %169 : vector<16x1xf32> to vector<16x32xf32>
    %171 = arith.subf %161, %170 : vector<16x32xf32>
    %172 = arith.mulf %171, %171 : vector<16x32xf32>
    %cst_58 = arith.constant dense<0.000000e+00> : vector<16xf32>
    %173 = vector.multi_reduction <add>, %172, %cst_58 [1] : vector<16x32xf32> to vector<16xf32>
    %174 = vector.shape_cast %173 : vector<16xf32> to vector<16x1xf32>
    %cst_59 = arith.constant 3.200000e+01 : f32
    %175 = vector.broadcast %cst_59 : f32 to vector<16x1xf32>
    %176 = arith.divf %174, %175 : vector<16x1xf32>
    %177 = vector.broadcast %169 : vector<16x1xf32> to vector<16x32xf32>
    %178 = arith.subf %161, %177 : vector<16x32xf32>
    %cst_60 = arith.constant 9.99999974E-6 : f32
    %179 = vector.broadcast %cst_60 : f32 to vector<16x1xf32>
    %180 = arith.addf %176, %179 : vector<16x1xf32>
    %181 = math.rsqrt %180 : vector<16x1xf32>
    %182 = vector.broadcast %181 : vector<16x1xf32> to vector<16x32xf32>
    %183 = arith.mulf %178, %182 : vector<16x32xf32>
    %184 = vector.broadcast %163 : vector<1x32xf32> to vector<16x32xf32>
    %185 = arith.mulf %183, %184 : vector<16x32xf32>
    %186 = vector.broadcast %165 : vector<1x32xf32> to vector<16x32xf32>
    %187 = arith.addf %185, %186 : vector<16x32xf32>
    %c0_61 = arith.constant 0 : index
    %c0_62 = arith.constant 0 : index
    %c0_63 = arith.constant 0 : index
    %188 = vector.load %arg12[%c0_61, %c0_62, %c0_63] : memref<2x32x128xbf16, #tpu.memory_space<vmem>>, vector<1x32x128xbf16>
    %189 = vector.shape_cast %188 : vector<1x32x128xbf16> to vector<32x128xbf16>
    %190 = arith.truncf %187 : vector<16x32xf32> to vector<16x32xbf16>
    %cst_64 = arith.constant dense<0.000000e+00> : vector<16x128xf32>
    %191 = tpu.matmul %190, %189, %cst_64 {dimension_numbers = #tpu.dot_dimension_numbers<[1], [0], [0], [1], [0, 0, 1, 1], [], []>} : vector<16x32xbf16>, vector<32x128xbf16>, vector<16x128xf32> -> vector<16x128xf32>
    %c0_65 = arith.constant 0 : index
    %c0_66 = arith.constant 0 : index
    %c0_67 = arith.constant 0 : index
    %192 = vector.load %arg13[%c0_65, %c0_66, %c0_67] : memref<2x1x128xf32, #tpu.memory_space<vmem>>, vector<1x1x128xf32>
    %193 = vector.shape_cast %192 : vector<1x1x128xf32> to vector<1x128xf32>
    %194 = vector.broadcast %193 : vector<1x128xf32> to vector<16x128xf32>
    %195 = arith.addf %191, %194 : vector<16x128xf32>
    %cst_68 = arith.constant 1.702000e+00 : f32
    %196 = vector.broadcast %cst_68 : f32 to vector<16x128xf32>
    %197 = arith.mulf %196, %195 : vector<16x128xf32>
    %198 = arith.negf %197 : vector<16x128xf32>
    %199 = math.exp %198 : vector<16x128xf32>
    %cst_69 = arith.constant 1.000000e+00 : f32
    %200 = vector.broadcast %cst_69 : f32 to vector<16x128xf32>
    %201 = arith.addf %200, %199 : vector<16x128xf32>
    %202 = arith.divf %200, %201 : vector<16x128xf32>
    %203 = arith.mulf %195, %202 : vector<16x128xf32>
    %c0_70 = arith.constant 0 : index
    %c0_71 = arith.constant 0 : index
    %c0_72 = arith.constant 0 : index
    %204 = vector.load %arg14[%c0_70, %c0_71, %c0_72] : memref<2x128x32xbf16, #tpu.memory_space<vmem>>, vector<1x128x32xbf16>
    %205 = vector.shape_cast %204 : vector<1x128x32xbf16> to vector<128x32xbf16>
    %206 = arith.truncf %203 : vector<16x128xf32> to vector<16x128xbf16>
    %cst_73 = arith.constant dense<0.000000e+00> : vector<16x32xf32>
    %207 = tpu.matmul %206, %205, %cst_73 {dimension_numbers = #tpu.dot_dimension_numbers<[1], [0], [0], [1], [0, 0, 1, 1], [], []>} : vector<16x128xbf16>, vector<128x32xbf16>, vector<16x32xf32> -> vector<16x32xf32>
    %208 = arith.addf %161, %207 : vector<16x32xf32>
    %c0_74 = arith.constant 0 : index
    %c0_75 = arith.constant 0 : index
    %c0_76 = arith.constant 0 : index
    %209 = vector.load %arg15[%c0_74, %c0_75, %c0_76] : memref<2x1x32xf32, #tpu.memory_space<vmem>>, vector<1x1x32xf32>
    %210 = vector.shape_cast %209 : vector<1x1x32xf32> to vector<1x32xf32>
    %211 = vector.broadcast %210 : vector<1x32xf32> to vector<16x32xf32>
    %212 = arith.addf %208, %211 : vector<16x32xf32>
    %c1 = arith.constant 1 : index
    %c0_77 = arith.constant 0 : index
    %c0_78 = arith.constant 0 : index
    %213 = vector.load %arg4[%c1, %c0_77, %c0_78] : memref<2x1x32xf32, #tpu.memory_space<vmem>>, vector<1x1x32xf32>
    %214 = vector.shape_cast %213 : vector<1x1x32xf32> to vector<1x32xf32>
    %c1_79 = arith.constant 1 : index
    %c0_80 = arith.constant 0 : index
    %c0_81 = arith.constant 0 : index
    %215 = vector.load %arg5[%c1_79, %c0_80, %c0_81] : memref<2x1x32xf32, #tpu.memory_space<vmem>>, vector<1x1x32xf32>
    %216 = vector.shape_cast %215 : vector<1x1x32xf32> to vector<1x32xf32>
    %cst_82 = arith.constant dense<0.000000e+00> : vector<16xf32>
    %217 = vector.multi_reduction <add>, %212, %cst_82 [1] : vector<16x32xf32> to vector<16xf32>
    %218 = vector.shape_cast %217 : vector<16xf32> to vector<16x1xf32>
    %cst_83 = arith.constant 3.200000e+01 : f32
    %219 = vector.broadcast %cst_83 : f32 to vector<16x1xf32>
    %220 = arith.divf %218, %219 : vector<16x1xf32>
    %221 = vector.broadcast %220 : vector<16x1xf32> to vector<16x32xf32>
    %222 = arith.subf %212, %221 : vector<16x32xf32>
    %223 = arith.mulf %222, %222 : vector<16x32xf32>
    %cst_84 = arith.constant dense<0.000000e+00> : vector<16xf32>
    %224 = vector.multi_reduction <add>, %223, %cst_84 [1] : vector<16x32xf32> to vector<16xf32>
    %225 = vector.shape_cast %224 : vector<16xf32> to vector<16x1xf32>
    %cst_85 = arith.constant 3.200000e+01 : f32
    %226 = vector.broadcast %cst_85 : f32 to vector<16x1xf32>
    %227 = arith.divf %225, %226 : vector<16x1xf32>
    %228 = vector.broadcast %220 : vector<16x1xf32> to vector<16x32xf32>
    %229 = arith.subf %212, %228 : vector<16x32xf32>
    %cst_86 = arith.constant 9.99999974E-6 : f32
    %230 = vector.broadcast %cst_86 : f32 to vector<16x1xf32>
    %231 = arith.addf %227, %230 : vector<16x1xf32>
    %232 = math.rsqrt %231 : vector<16x1xf32>
    %233 = vector.broadcast %232 : vector<16x1xf32> to vector<16x32xf32>
    %234 = arith.mulf %229, %233 : vector<16x32xf32>
    %235 = vector.broadcast %214 : vector<1x32xf32> to vector<16x32xf32>
    %236 = arith.mulf %234, %235 : vector<16x32xf32>
    %237 = vector.broadcast %216 : vector<1x32xf32> to vector<16x32xf32>
    %238 = arith.addf %236, %237 : vector<16x32xf32>
    %c1_87 = arith.constant 1 : index
    %c0_88 = arith.constant 0 : index
    %c0_89 = arith.constant 0 : index
    %239 = vector.load %arg6[%c1_87, %c0_88, %c0_89] : memref<2x32x96xbf16, #tpu.memory_space<vmem>>, vector<1x32x96xbf16>
    %240 = vector.shape_cast %239 : vector<1x32x96xbf16> to vector<32x96xbf16>
    %241 = arith.truncf %238 : vector<16x32xf32> to vector<16x32xbf16>
    %cst_90 = arith.constant dense<0.000000e+00> : vector<16x96xf32>
    %242 = tpu.matmul %241, %240, %cst_90 {dimension_numbers = #tpu.dot_dimension_numbers<[1], [0], [0], [1], [0, 0, 1, 1], [], []>} : vector<16x32xbf16>, vector<32x96xbf16>, vector<16x96xf32> -> vector<16x96xf32>
    %c1_91 = arith.constant 1 : index
    %c0_92 = arith.constant 0 : index
    %c0_93 = arith.constant 0 : index
    %243 = vector.load %arg7[%c1_91, %c0_92, %c0_93] : memref<2x1x96xf32, #tpu.memory_space<vmem>>, vector<1x1x96xf32>
    %244 = vector.shape_cast %243 : vector<1x1x96xf32> to vector<1x96xf32>
    %245 = vector.broadcast %244 : vector<1x96xf32> to vector<16x96xf32>
    %246 = arith.addf %242, %245 : vector<16x96xf32>
    %247 = vector.extract_strided_slice %246 {offsets = [0, 0], sizes = [16, 32], strides = [1, 1]} : vector<16x96xf32> to vector<16x32xf32>
    %cst_94 = arith.constant 0.353553385 : f32
    %248 = vector.broadcast %cst_94 : f32 to vector<16x32xf32>
    %249 = arith.mulf %247, %248 : vector<16x32xf32>
    %250 = vector.extract_strided_slice %246 {offsets = [0, 32], sizes = [16, 32], strides = [1, 1]} : vector<16x96xf32> to vector<16x32xf32>
    %251 = vector.extract_strided_slice %246 {offsets = [0, 64], sizes = [16, 32], strides = [1, 1]} : vector<16x96xf32> to vector<16x32xf32>
    %c1_95 = arith.constant 1 : index
    %c0_96 = arith.constant 0 : index
    %c0_97 = arith.constant 0 : index
    %252 = vector.load %arg8[%c1_95, %c0_96, %c0_97] : memref<2x32x32xbf16, #tpu.memory_space<vmem>>, vector<1x32x32xbf16>
    %253 = vector.shape_cast %252 : vector<1x32x32xbf16> to vector<32x32xbf16>
    %cst_98 = arith.constant 0.000000e+00 : f32
    %254 = vector.broadcast %cst_98 : f32 to vector<16x32xf32>
    %255 = vector.extract_strided_slice %249 {offsets = [0, 0], sizes = [16, 8], strides = [1, 1]} : vector<16x32xf32> to vector<16x8xf32>
    %256 = vector.shape_cast %255 : vector<16x8xf32> to vector<2x8x8xf32>
    %257 = vector.extract_strided_slice %250 {offsets = [0, 0], sizes = [16, 8], strides = [1, 1]} : vector<16x32xf32> to vector<16x8xf32>
    %258 = vector.shape_cast %257 : vector<16x8xf32> to vector<2x8x8xf32>
    %259 = vector.extract_strided_slice %251 {offsets = [0, 0], sizes = [16, 8], strides = [1, 1]} : vector<16x32xf32> to vector<16x8xf32>
    %260 = vector.shape_cast %259 : vector<16x8xf32> to vector<2x8x8xf32>
    %261 = arith.truncf %256 : vector<2x8x8xf32> to vector<2x8x8xbf16>
    %262 = arith.truncf %258 : vector<2x8x8xf32> to vector<2x8x8xbf16>
    "tpu.trace_start"() <{level = 10 : i32, message = "bqd,bkd->bqk"}> : () -> ()
    %cst_99 = arith.constant dense<0.000000e+00> : vector<2x8x8xf32>
    %263 = tpu.matmul %261, %262, %cst_99 {dimension_numbers = #tpu.dot_dimension_numbers<[2], [2], [1], [1], [0, 0, 0, 1, 1, 1], [0], [0]>} : vector<2x8x8xbf16>, vector<2x8x8xbf16>, vector<2x8x8xf32> -> vector<2x8x8xf32>
    "tpu.trace_stop"() : () -> ()
    %264 = arith.addf %263, %2 : vector<2x8x8xf32>
    %cst_100 = arith.constant dense<0xFF800000> : vector<2x8xf32>
    %265 = vector.multi_reduction <maximumf>, %264, %cst_100 [2] : vector<2x8x8xf32> to vector<2x8xf32>
    %266 = vector.shape_cast %265 : vector<2x8xf32> to vector<2x8x1xf32>
    %267 = vector.broadcast %266 : vector<2x8x1xf32> to vector<2x8x8xf32>
    %268 = arith.subf %264, %267 : vector<2x8x8xf32>
    %269 = math.exp %268 : vector<2x8x8xf32>
    %cst_101 = arith.constant dense<0.000000e+00> : vector<2x8xf32>
    %270 = vector.multi_reduction <add>, %269, %cst_101 [2] : vector<2x8x8xf32> to vector<2x8xf32>
    %271 = vector.shape_cast %270 : vector<2x8xf32> to vector<2x8x1xf32>
    %272 = tpu.reciprocal %271 {approx = true} : vector<2x8x1xf32> -> vector<2x8x1xf32>
    %273 = vector.broadcast %272 : vector<2x8x1xf32> to vector<2x8x8xf32>
    %274 = arith.mulf %269, %273 : vector<2x8x8xf32>
    %275 = arith.truncf %274 : vector<2x8x8xf32> to vector<2x8x8xbf16>
    %276 = arith.truncf %260 : vector<2x8x8xf32> to vector<2x8x8xbf16>
    "tpu.trace_start"() <{level = 10 : i32, message = "bqk,bkd->bqd"}> : () -> ()
    %cst_102 = arith.constant dense<0.000000e+00> : vector<2x8x8xf32>
    %277 = tpu.matmul %275, %276, %cst_102 {dimension_numbers = #tpu.dot_dimension_numbers<[2], [1], [1], [2], [0, 0, 0, 1, 1, 2], [0], [0]>} : vector<2x8x8xbf16>, vector<2x8x8xbf16>, vector<2x8x8xf32> -> vector<2x8x8xf32>
    "tpu.trace_stop"() : () -> ()
    %278 = vector.shape_cast %277 : vector<2x8x8xf32> to vector<16x8xf32>
    %279 = vector.extract_strided_slice %253 {offsets = [0, 0], sizes = [8, 32], strides = [1, 1]} : vector<32x32xbf16> to vector<8x32xbf16>
    %280 = arith.truncf %278 : vector<16x8xf32> to vector<16x8xbf16>
    %cst_103 = arith.constant dense<0.000000e+00> : vector<16x32xf32>
    %281 = tpu.matmul %280, %279, %cst_103 {dimension_numbers = #tpu.dot_dimension_numbers<[1], [0], [0], [1], [0, 0, 1, 1], [], []>} : vector<16x8xbf16>, vector<8x32xbf16>, vector<16x32xf32> -> vector<16x32xf32>
    %282 = arith.addf %254, %281 : vector<16x32xf32>
    %283 = vector.extract_strided_slice %249 {offsets = [0, 8], sizes = [16, 8], strides = [1, 1]} : vector<16x32xf32> to vector<16x8xf32>
    %284 = vector.shape_cast %283 : vector<16x8xf32> to vector<2x8x8xf32>
    %285 = vector.extract_strided_slice %250 {offsets = [0, 8], sizes = [16, 8], strides = [1, 1]} : vector<16x32xf32> to vector<16x8xf32>
    %286 = vector.shape_cast %285 : vector<16x8xf32> to vector<2x8x8xf32>
    %287 = vector.extract_strided_slice %251 {offsets = [0, 8], sizes = [16, 8], strides = [1, 1]} : vector<16x32xf32> to vector<16x8xf32>
    %288 = vector.shape_cast %287 : vector<16x8xf32> to vector<2x8x8xf32>
    %289 = arith.truncf %284 : vector<2x8x8xf32> to vector<2x8x8xbf16>
    %290 = arith.truncf %286 : vector<2x8x8xf32> to vector<2x8x8xbf16>
    "tpu.trace_start"() <{level = 10 : i32, message = "bqd,bkd->bqk"}> : () -> ()
    %cst_104 = arith.constant dense<0.000000e+00> : vector<2x8x8xf32>
    %291 = tpu.matmul %289, %290, %cst_104 {dimension_numbers = #tpu.dot_dimension_numbers<[2], [2], [1], [1], [0, 0, 0, 1, 1, 1], [0], [0]>} : vector<2x8x8xbf16>, vector<2x8x8xbf16>, vector<2x8x8xf32> -> vector<2x8x8xf32>
    "tpu.trace_stop"() : () -> ()
    %292 = arith.addf %291, %2 : vector<2x8x8xf32>
    %cst_105 = arith.constant dense<0xFF800000> : vector<2x8xf32>
    %293 = vector.multi_reduction <maximumf>, %292, %cst_105 [2] : vector<2x8x8xf32> to vector<2x8xf32>
    %294 = vector.shape_cast %293 : vector<2x8xf32> to vector<2x8x1xf32>
    %295 = vector.broadcast %294 : vector<2x8x1xf32> to vector<2x8x8xf32>
    %296 = arith.subf %292, %295 : vector<2x8x8xf32>
    %297 = math.exp %296 : vector<2x8x8xf32>
    %cst_106 = arith.constant dense<0.000000e+00> : vector<2x8xf32>
    %298 = vector.multi_reduction <add>, %297, %cst_106 [2] : vector<2x8x8xf32> to vector<2x8xf32>
    %299 = vector.shape_cast %298 : vector<2x8xf32> to vector<2x8x1xf32>
    %300 = tpu.reciprocal %299 {approx = true} : vector<2x8x1xf32> -> vector<2x8x1xf32>
    %301 = vector.broadcast %300 : vector<2x8x1xf32> to vector<2x8x8xf32>
    %302 = arith.mulf %297, %301 : vector<2x8x8xf32>
    %303 = arith.truncf %302 : vector<2x8x8xf32> to vector<2x8x8xbf16>
    %304 = arith.truncf %288 : vector<2x8x8xf32> to vector<2x8x8xbf16>
    "tpu.trace_start"() <{level = 10 : i32, message = "bqk,bkd->bqd"}> : () -> ()
    %cst_107 = arith.constant dense<0.000000e+00> : vector<2x8x8xf32>
    %305 = tpu.matmul %303, %304, %cst_107 {dimension_numbers = #tpu.dot_dimension_numbers<[2], [1], [1], [2], [0, 0, 0, 1, 1, 2], [0], [0]>} : vector<2x8x8xbf16>, vector<2x8x8xbf16>, vector<2x8x8xf32> -> vector<2x8x8xf32>
    "tpu.trace_stop"() : () -> ()
    %306 = vector.shape_cast %305 : vector<2x8x8xf32> to vector<16x8xf32>
    %307 = vector.extract_strided_slice %253 {offsets = [8, 0], sizes = [8, 32], strides = [1, 1]} : vector<32x32xbf16> to vector<8x32xbf16>
    %308 = arith.truncf %306 : vector<16x8xf32> to vector<16x8xbf16>
    %cst_108 = arith.constant dense<0.000000e+00> : vector<16x32xf32>
    %309 = tpu.matmul %308, %307, %cst_108 {dimension_numbers = #tpu.dot_dimension_numbers<[1], [0], [0], [1], [0, 0, 1, 1], [], []>} : vector<16x8xbf16>, vector<8x32xbf16>, vector<16x32xf32> -> vector<16x32xf32>
    %310 = arith.addf %282, %309 : vector<16x32xf32>
    %311 = vector.extract_strided_slice %249 {offsets = [0, 16], sizes = [16, 8], strides = [1, 1]} : vector<16x32xf32> to vector<16x8xf32>
    %312 = vector.shape_cast %311 : vector<16x8xf32> to vector<2x8x8xf32>
    %313 = vector.extract_strided_slice %250 {offsets = [0, 16], sizes = [16, 8], strides = [1, 1]} : vector<16x32xf32> to vector<16x8xf32>
    %314 = vector.shape_cast %313 : vector<16x8xf32> to vector<2x8x8xf32>
    %315 = vector.extract_strided_slice %251 {offsets = [0, 16], sizes = [16, 8], strides = [1, 1]} : vector<16x32xf32> to vector<16x8xf32>
    %316 = vector.shape_cast %315 : vector<16x8xf32> to vector<2x8x8xf32>
    %317 = arith.truncf %312 : vector<2x8x8xf32> to vector<2x8x8xbf16>
    %318 = arith.truncf %314 : vector<2x8x8xf32> to vector<2x8x8xbf16>
    "tpu.trace_start"() <{level = 10 : i32, message = "bqd,bkd->bqk"}> : () -> ()
    %cst_109 = arith.constant dense<0.000000e+00> : vector<2x8x8xf32>
    %319 = tpu.matmul %317, %318, %cst_109 {dimension_numbers = #tpu.dot_dimension_numbers<[2], [2], [1], [1], [0, 0, 0, 1, 1, 1], [0], [0]>} : vector<2x8x8xbf16>, vector<2x8x8xbf16>, vector<2x8x8xf32> -> vector<2x8x8xf32>
    "tpu.trace_stop"() : () -> ()
    %320 = arith.addf %319, %2 : vector<2x8x8xf32>
    %cst_110 = arith.constant dense<0xFF800000> : vector<2x8xf32>
    %321 = vector.multi_reduction <maximumf>, %320, %cst_110 [2] : vector<2x8x8xf32> to vector<2x8xf32>
    %322 = vector.shape_cast %321 : vector<2x8xf32> to vector<2x8x1xf32>
    %323 = vector.broadcast %322 : vector<2x8x1xf32> to vector<2x8x8xf32>
    %324 = arith.subf %320, %323 : vector<2x8x8xf32>
    %325 = math.exp %324 : vector<2x8x8xf32>
    %cst_111 = arith.constant dense<0.000000e+00> : vector<2x8xf32>
    %326 = vector.multi_reduction <add>, %325, %cst_111 [2] : vector<2x8x8xf32> to vector<2x8xf32>
    %327 = vector.shape_cast %326 : vector<2x8xf32> to vector<2x8x1xf32>
    %328 = tpu.reciprocal %327 {approx = true} : vector<2x8x1xf32> -> vector<2x8x1xf32>
    %329 = vector.broadcast %328 : vector<2x8x1xf32> to vector<2x8x8xf32>
    %330 = arith.mulf %325, %329 : vector<2x8x8xf32>
    %331 = arith.truncf %330 : vector<2x8x8xf32> to vector<2x8x8xbf16>
    %332 = arith.truncf %316 : vector<2x8x8xf32> to vector<2x8x8xbf16>
    "tpu.trace_start"() <{level = 10 : i32, message = "bqk,bkd->bqd"}> : () -> ()
    %cst_112 = arith.constant dense<0.000000e+00> : vector<2x8x8xf32>
    %333 = tpu.matmul %331, %332, %cst_112 {dimension_numbers = #tpu.dot_dimension_numbers<[2], [1], [1], [2], [0, 0, 0, 1, 1, 2], [0], [0]>} : vector<2x8x8xbf16>, vector<2x8x8xbf16>, vector<2x8x8xf32> -> vector<2x8x8xf32>
    "tpu.trace_stop"() : () -> ()
    %334 = vector.shape_cast %333 : vector<2x8x8xf32> to vector<16x8xf32>
    %335 = vector.extract_strided_slice %253 {offsets = [16, 0], sizes = [8, 32], strides = [1, 1]} : vector<32x32xbf16> to vector<8x32xbf16>
    %336 = arith.truncf %334 : vector<16x8xf32> to vector<16x8xbf16>
    %cst_113 = arith.constant dense<0.000000e+00> : vector<16x32xf32>
    %337 = tpu.matmul %336, %335, %cst_113 {dimension_numbers = #tpu.dot_dimension_numbers<[1], [0], [0], [1], [0, 0, 1, 1], [], []>} : vector<16x8xbf16>, vector<8x32xbf16>, vector<16x32xf32> -> vector<16x32xf32>
    %338 = arith.addf %310, %337 : vector<16x32xf32>
    %339 = vector.extract_strided_slice %249 {offsets = [0, 24], sizes = [16, 8], strides = [1, 1]} : vector<16x32xf32> to vector<16x8xf32>
    %340 = vector.shape_cast %339 : vector<16x8xf32> to vector<2x8x8xf32>
    %341 = vector.extract_strided_slice %250 {offsets = [0, 24], sizes = [16, 8], strides = [1, 1]} : vector<16x32xf32> to vector<16x8xf32>
    %342 = vector.shape_cast %341 : vector<16x8xf32> to vector<2x8x8xf32>
    %343 = vector.extract_strided_slice %251 {offsets = [0, 24], sizes = [16, 8], strides = [1, 1]} : vector<16x32xf32> to vector<16x8xf32>
    %344 = vector.shape_cast %343 : vector<16x8xf32> to vector<2x8x8xf32>
    %345 = arith.truncf %340 : vector<2x8x8xf32> to vector<2x8x8xbf16>
    %346 = arith.truncf %342 : vector<2x8x8xf32> to vector<2x8x8xbf16>
    "tpu.trace_start"() <{level = 10 : i32, message = "bqd,bkd->bqk"}> : () -> ()
    %cst_114 = arith.constant dense<0.000000e+00> : vector<2x8x8xf32>
    %347 = tpu.matmul %345, %346, %cst_114 {dimension_numbers = #tpu.dot_dimension_numbers<[2], [2], [1], [1], [0, 0, 0, 1, 1, 1], [0], [0]>} : vector<2x8x8xbf16>, vector<2x8x8xbf16>, vector<2x8x8xf32> -> vector<2x8x8xf32>
    "tpu.trace_stop"() : () -> ()
    %348 = arith.addf %347, %2 : vector<2x8x8xf32>
    %cst_115 = arith.constant dense<0xFF800000> : vector<2x8xf32>
    %349 = vector.multi_reduction <maximumf>, %348, %cst_115 [2] : vector<2x8x8xf32> to vector<2x8xf32>
    %350 = vector.shape_cast %349 : vector<2x8xf32> to vector<2x8x1xf32>
    %351 = vector.broadcast %350 : vector<2x8x1xf32> to vector<2x8x8xf32>
    %352 = arith.subf %348, %351 : vector<2x8x8xf32>
    %353 = math.exp %352 : vector<2x8x8xf32>
    %cst_116 = arith.constant dense<0.000000e+00> : vector<2x8xf32>
    %354 = vector.multi_reduction <add>, %353, %cst_116 [2] : vector<2x8x8xf32> to vector<2x8xf32>
    %355 = vector.shape_cast %354 : vector<2x8xf32> to vector<2x8x1xf32>
    %356 = tpu.reciprocal %355 {approx = true} : vector<2x8x1xf32> -> vector<2x8x1xf32>
    %357 = vector.broadcast %356 : vector<2x8x1xf32> to vector<2x8x8xf32>
    %358 = arith.mulf %353, %357 : vector<2x8x8xf32>
    %359 = arith.truncf %358 : vector<2x8x8xf32> to vector<2x8x8xbf16>
    %360 = arith.truncf %344 : vector<2x8x8xf32> to vector<2x8x8xbf16>
    "tpu.trace_start"() <{level = 10 : i32, message = "bqk,bkd->bqd"}> : () -> ()
    %cst_117 = arith.constant dense<0.000000e+00> : vector<2x8x8xf32>
    %361 = tpu.matmul %359, %360, %cst_117 {dimension_numbers = #tpu.dot_dimension_numbers<[2], [1], [1], [2], [0, 0, 0, 1, 1, 2], [0], [0]>} : vector<2x8x8xbf16>, vector<2x8x8xbf16>, vector<2x8x8xf32> -> vector<2x8x8xf32>
    "tpu.trace_stop"() : () -> ()
    %362 = vector.shape_cast %361 : vector<2x8x8xf32> to vector<16x8xf32>
    %363 = vector.extract_strided_slice %253 {offsets = [24, 0], sizes = [8, 32], strides = [1, 1]} : vector<32x32xbf16> to vector<8x32xbf16>
    %364 = arith.truncf %362 : vector<16x8xf32> to vector<16x8xbf16>
    %cst_118 = arith.constant dense<0.000000e+00> : vector<16x32xf32>
    %365 = tpu.matmul %364, %363, %cst_118 {dimension_numbers = #tpu.dot_dimension_numbers<[1], [0], [0], [1], [0, 0, 1, 1], [], []>} : vector<16x8xbf16>, vector<8x32xbf16>, vector<16x32xf32> -> vector<16x32xf32>
    %366 = arith.addf %338, %365 : vector<16x32xf32>
    %367 = arith.addf %212, %366 : vector<16x32xf32>
    %c1_119 = arith.constant 1 : index
    %c0_120 = arith.constant 0 : index
    %c0_121 = arith.constant 0 : index
    %368 = vector.load %arg9[%c1_119, %c0_120, %c0_121] : memref<2x1x32xf32, #tpu.memory_space<vmem>>, vector<1x1x32xf32>
    %369 = vector.shape_cast %368 : vector<1x1x32xf32> to vector<1x32xf32>
    %370 = vector.broadcast %369 : vector<1x32xf32> to vector<16x32xf32>
    %371 = arith.addf %367, %370 : vector<16x32xf32>
    %c1_122 = arith.constant 1 : index
    %c0_123 = arith.constant 0 : index
    %c0_124 = arith.constant 0 : index
    %372 = vector.load %arg10[%c1_122, %c0_123, %c0_124] : memref<2x1x32xf32, #tpu.memory_space<vmem>>, vector<1x1x32xf32>
    %373 = vector.shape_cast %372 : vector<1x1x32xf32> to vector<1x32xf32>
    %c1_125 = arith.constant 1 : index
    %c0_126 = arith.constant 0 : index
    %c0_127 = arith.constant 0 : index
    %374 = vector.load %arg11[%c1_125, %c0_126, %c0_127] : memref<2x1x32xf32, #tpu.memory_space<vmem>>, vector<1x1x32xf32>
    %375 = vector.shape_cast %374 : vector<1x1x32xf32> to vector<1x32xf32>
    %cst_128 = arith.constant dense<0.000000e+00> : vector<16xf32>
    %376 = vector.multi_reduction <add>, %371, %cst_128 [1] : vector<16x32xf32> to vector<16xf32>
    %377 = vector.shape_cast %376 : vector<16xf32> to vector<16x1xf32>
    %cst_129 = arith.constant 3.200000e+01 : f32
    %378 = vector.broadcast %cst_129 : f32 to vector<16x1xf32>
    %379 = arith.divf %377, %378 : vector<16x1xf32>
    %380 = vector.broadcast %379 : vector<16x1xf32> to vector<16x32xf32>
    %381 = arith.subf %371, %380 : vector<16x32xf32>
    %382 = arith.mulf %381, %381 : vector<16x32xf32>
    %cst_130 = arith.constant dense<0.000000e+00> : vector<16xf32>
    %383 = vector.multi_reduction <add>, %382, %cst_130 [1] : vector<16x32xf32> to vector<16xf32>
    %384 = vector.shape_cast %383 : vector<16xf32> to vector<16x1xf32>
    %cst_131 = arith.constant 3.200000e+01 : f32
    %385 = vector.broadcast %cst_131 : f32 to vector<16x1xf32>
    %386 = arith.divf %384, %385 : vector<16x1xf32>
    %387 = vector.broadcast %379 : vector<16x1xf32> to vector<16x32xf32>
    %388 = arith.subf %371, %387 : vector<16x32xf32>
    %cst_132 = arith.constant 9.99999974E-6 : f32
    %389 = vector.broadcast %cst_132 : f32 to vector<16x1xf32>
    %390 = arith.addf %386, %389 : vector<16x1xf32>
    %391 = math.rsqrt %390 : vector<16x1xf32>
    %392 = vector.broadcast %391 : vector<16x1xf32> to vector<16x32xf32>
    %393 = arith.mulf %388, %392 : vector<16x32xf32>
    %394 = vector.broadcast %373 : vector<1x32xf32> to vector<16x32xf32>
    %395 = arith.mulf %393, %394 : vector<16x32xf32>
    %396 = vector.broadcast %375 : vector<1x32xf32> to vector<16x32xf32>
    %397 = arith.addf %395, %396 : vector<16x32xf32>
    %c1_133 = arith.constant 1 : index
    %c0_134 = arith.constant 0 : index
    %c0_135 = arith.constant 0 : index
    %398 = vector.load %arg12[%c1_133, %c0_134, %c0_135] : memref<2x32x128xbf16, #tpu.memory_space<vmem>>, vector<1x32x128xbf16>
    %399 = vector.shape_cast %398 : vector<1x32x128xbf16> to vector<32x128xbf16>
    %400 = arith.truncf %397 : vector<16x32xf32> to vector<16x32xbf16>
    %cst_136 = arith.constant dense<0.000000e+00> : vector<16x128xf32>
    %401 = tpu.matmul %400, %399, %cst_136 {dimension_numbers = #tpu.dot_dimension_numbers<[1], [0], [0], [1], [0, 0, 1, 1], [], []>} : vector<16x32xbf16>, vector<32x128xbf16>, vector<16x128xf32> -> vector<16x128xf32>
    %c1_137 = arith.constant 1 : index
    %c0_138 = arith.constant 0 : index
    %c0_139 = arith.constant 0 : index
    %402 = vector.load %arg13[%c1_137, %c0_138, %c0_139] : memref<2x1x128xf32, #tpu.memory_space<vmem>>, vector<1x1x128xf32>
    %403 = vector.shape_cast %402 : vector<1x1x128xf32> to vector<1x128xf32>
    %404 = vector.broadcast %403 : vector<1x128xf32> to vector<16x128xf32>
    %405 = arith.addf %401, %404 : vector<16x128xf32>
    %cst_140 = arith.constant 1.702000e+00 : f32
    %406 = vector.broadcast %cst_140 : f32 to vector<16x128xf32>
    %407 = arith.mulf %406, %405 : vector<16x128xf32>
    %408 = arith.negf %407 : vector<16x128xf32>
    %409 = math.exp %408 : vector<16x128xf32>
    %cst_141 = arith.constant 1.000000e+00 : f32
    %410 = vector.broadcast %cst_141 : f32 to vector<16x128xf32>
    %411 = arith.addf %410, %409 : vector<16x128xf32>
    %412 = arith.divf %410, %411 : vector<16x128xf32>
    %413 = arith.mulf %405, %412 : vector<16x128xf32>
    %c1_142 = arith.constant 1 : index
    %c0_143 = arith.constant 0 : index
    %c0_144 = arith.constant 0 : index
    %414 = vector.load %arg14[%c1_142, %c0_143, %c0_144] : memref<2x128x32xbf16, #tpu.memory_space<vmem>>, vector<1x128x32xbf16>
    %415 = vector.shape_cast %414 : vector<1x128x32xbf16> to vector<128x32xbf16>
    %416 = arith.truncf %413 : vector<16x128xf32> to vector<16x128xbf16>
    %cst_145 = arith.constant dense<0.000000e+00> : vector<16x32xf32>
    %417 = tpu.matmul %416, %415, %cst_145 {dimension_numbers = #tpu.dot_dimension_numbers<[1], [0], [0], [1], [0, 0, 1, 1], [], []>} : vector<16x128xbf16>, vector<128x32xbf16>, vector<16x32xf32> -> vector<16x32xf32>
    %418 = arith.addf %371, %417 : vector<16x32xf32>
    %c1_146 = arith.constant 1 : index
    %c0_147 = arith.constant 0 : index
    %c0_148 = arith.constant 0 : index
    %419 = vector.load %arg15[%c1_146, %c0_147, %c0_148] : memref<2x1x32xf32, #tpu.memory_space<vmem>>, vector<1x1x32xf32>
    %420 = vector.shape_cast %419 : vector<1x1x32xf32> to vector<1x32xf32>
    %421 = vector.broadcast %420 : vector<1x32xf32> to vector<16x32xf32>
    %422 = arith.addf %418, %421 : vector<16x32xf32>
    %c0_149 = arith.constant 0 : index
    %c0_150 = arith.constant 0 : index
    %423 = vector.load %arg16[%c0_149, %c0_150] : memref<1x32xf32, #tpu.memory_space<vmem>>, vector<1x32xf32>
    %c0_151 = arith.constant 0 : index
    %c0_152 = arith.constant 0 : index
    %424 = vector.load %arg17[%c0_151, %c0_152] : memref<1x32xf32, #tpu.memory_space<vmem>>, vector<1x32xf32>
    %cst_153 = arith.constant dense<0.000000e+00> : vector<16xf32>
    %425 = vector.multi_reduction <add>, %422, %cst_153 [1] : vector<16x32xf32> to vector<16xf32>
    %426 = vector.shape_cast %425 : vector<16xf32> to vector<16x1xf32>
    %cst_154 = arith.constant 3.200000e+01 : f32
    %427 = vector.broadcast %cst_154 : f32 to vector<16x1xf32>
    %428 = arith.divf %426, %427 : vector<16x1xf32>
    %429 = vector.broadcast %428 : vector<16x1xf32> to vector<16x32xf32>
    %430 = arith.subf %422, %429 : vector<16x32xf32>
    %431 = arith.mulf %430, %430 : vector<16x32xf32>
    %cst_155 = arith.constant dense<0.000000e+00> : vector<16xf32>
    %432 = vector.multi_reduction <add>, %431, %cst_155 [1] : vector<16x32xf32> to vector<16xf32>
    %433 = vector.shape_cast %432 : vector<16xf32> to vector<16x1xf32>
    %cst_156 = arith.constant 3.200000e+01 : f32
    %434 = vector.broadcast %cst_156 : f32 to vector<16x1xf32>
    %435 = arith.divf %433, %434 : vector<16x1xf32>
    %436 = vector.broadcast %428 : vector<16x1xf32> to vector<16x32xf32>
    %437 = arith.subf %422, %436 : vector<16x32xf32>
    %cst_157 = arith.constant 9.99999974E-6 : f32
    %438 = vector.broadcast %cst_157 : f32 to vector<16x1xf32>
    %439 = arith.addf %435, %438 : vector<16x1xf32>
    %440 = math.rsqrt %439 : vector<16x1xf32>
    %441 = vector.broadcast %440 : vector<16x1xf32> to vector<16x32xf32>
    %442 = arith.mulf %437, %441 : vector<16x32xf32>
    %443 = vector.broadcast %423 : vector<1x32xf32> to vector<16x32xf32>
    %444 = arith.mulf %442, %443 : vector<16x32xf32>
    %445 = vector.broadcast %424 : vector<1x32xf32> to vector<16x32xf32>
    %446 = arith.addf %444, %445 : vector<16x32xf32>
    %c0_158 = arith.constant 0 : index
    %c0_159 = arith.constant 0 : index
    %447 = vector.load %arg20[%c0_158, %c0_159] : memref<16x32xf32, #tpu.memory_space<vmem>>, vector<16x32xf32>
    tpu.vector_store %arg20[%c0_158, %c0_159], %446 {strides = array<i32>} : memref<16x32xf32, #tpu.memory_space<vmem>>, vector<16x32xf32>,
    %c0_160 = arith.constant 0 : index
    %448 = memref.load %arg1[%c0_160] : memref<2xi32, #tpu.memory_space<smem>>
    %c0_i32 = arith.constant 0 : i32
    %449 = arith.addi %c0_i32, %448 : i32
    %450 = arith.index_cast %449 : i32 to index
    %c0_161 = arith.constant 0 : index
    %451 = vector.load %arg20[%450, %c0_161] : memref<16x32xf32, #tpu.memory_space<vmem>>, vector<1x32xf32>
    %c1_162 = arith.constant 1 : index
    %452 = memref.load %arg1[%c1_162] : memref<2xi32, #tpu.memory_space<smem>>
    %c8_i32 = arith.constant 8 : i32
    %453 = arith.addi %c8_i32, %452 : i32
    %454 = arith.index_cast %453 : i32 to index
    %c0_163 = arith.constant 0 : index
    %455 = vector.load %arg20[%454, %c0_163] : memref<16x32xf32, #tpu.memory_space<vmem>>, vector<1x32xf32>
    %456 = tpu.concatenate %451, %455 in 0 : vector<1x32xf32>, vector<1x32xf32> -> vector<2x32xf32>
    %c0_164 = arith.constant 0 : index
    %c0_165 = arith.constant 0 : index
    %457 = vector.load %arg18[%c0_164, %c0_165] : memref<32x16xbf16, #tpu.memory_space<vmem>>, vector<32x16xbf16>
    %458 = arith.truncf %456 : vector<2x32xf32> to vector<2x32xbf16>
    %cst_166 = arith.constant dense<0.000000e+00> : vector<2x16xf32>
    %459 = tpu.matmul %458, %457, %cst_166 {dimension_numbers = #tpu.dot_dimension_numbers<[1], [0], [0], [1], [0, 0, 1, 1], [], []>} : vector<2x32xbf16>, vector<32x16xbf16>, vector<2x16xf32> -> vector<2x16xf32>
    %c0_167 = arith.constant 0 : index
    %c0_168 = arith.constant 0 : index
    %460 = vector.load %arg19[%c0_167, %c0_168] : memref<2x16xf32, #tpu.memory_space<vmem>>, vector<2x16xf32>
    tpu.vector_store %arg19[%c0_167, %c0_168], %459 {strides = array<i32>} : memref<2x16xf32, #tpu.memory_space<vmem>>, vector<2x16xf32>,
    return
  }
  func.func @transform_0(%arg0: i32, %arg1: memref<2xi32, #tpu.memory_space<smem>>) -> (i32, i32, i32) {
    %c0_i32 = arith.constant 0 : i32
    %c0_i32_0 = arith.constant 0 : i32
    %c0_i32_1 = arith.constant 0 : i32
    %c0_i32_2 = arith.constant 0 : i32
    return %c0_i32, %c0_i32_0, %c0_i32_1 : i32, i32, i32
  }
  func.func @transform_1(%arg0: i32, %arg1: memref<2xi32, #tpu.memory_space<smem>>) -> (i32, i32, i32) {
    %c0_i32 = arith.constant 0 : i32
    %c0_i32_0 = arith.constant 0 : i32
    %c0_i32_1 = arith.constant 0 : i32
    %c0_i32_2 = arith.constant 0 : i32
    return %c0_i32, %c0_i32_0, %c0_i32_1 : i32, i32, i32
  }
  func.func @transform_2(%arg0: i32, %arg1: memref<2xi32, #tpu.memory_space<smem>>) -> (i32, i32, i32) {
    %c0_i32 = arith.constant 0 : i32
    %c0_i32_0 = arith.constant 0 : i32
    %c0_i32_1 = arith.constant 0 : i32
    %c0_i32_2 = arith.constant 0 : i32
    return %c0_i32, %c0_i32_0, %c0_i32_1 : i32, i32, i32
  }
  func.func @transform_3(%arg0: i32, %arg1: memref<2xi32, #tpu.memory_space<smem>>) -> (i32, i32, i32) {
    %c0_i32 = arith.constant 0 : i32
    %c0_i32_0 = arith.constant 0 : i32
    %c0_i32_1 = arith.constant 0 : i32
    %c0_i32_2 = arith.constant 0 : i32
    return %c0_i32, %c0_i32_0, %c0_i32_1 : i32, i32, i32
  }
  func.func @transform_4(%arg0: i32, %arg1: memref<2xi32, #tpu.memory_space<smem>>) -> (i32, i32, i32) {
    %c0_i32 = arith.constant 0 : i32
    %c0_i32_0 = arith.constant 0 : i32
    %c0_i32_1 = arith.constant 0 : i32
    %c0_i32_2 = arith.constant 0 : i32
    return %c0_i32, %c0_i32_0, %c0_i32_1 : i32, i32, i32
  }
  func.func @transform_5(%arg0: i32, %arg1: memref<2xi32, #tpu.memory_space<smem>>) -> (i32, i32, i32) {
    %c0_i32 = arith.constant 0 : i32
    %c0_i32_0 = arith.constant 0 : i32
    %c0_i32_1 = arith.constant 0 : i32
    %c0_i32_2 = arith.constant 0 : i32
    return %c0_i32, %c0_i32_0, %c0_i32_1 : i32, i32, i32
  }
  func.func @transform_6(%arg0: i32, %arg1: memref<2xi32, #tpu.memory_space<smem>>) -> (i32, i32, i32) {
    %c0_i32 = arith.constant 0 : i32
    %c0_i32_0 = arith.constant 0 : i32
    %c0_i32_1 = arith.constant 0 : i32
    %c0_i32_2 = arith.constant 0 : i32
    return %c0_i32, %c0_i32_0, %c0_i32_1 : i32, i32, i32
  }
  func.func @transform_7(%arg0: i32, %arg1: memref<2xi32, #tpu.memory_space<smem>>) -> (i32, i32, i32) {
    %c0_i32 = arith.constant 0 : i32
    %c0_i32_0 = arith.constant 0 : i32
    %c0_i32_1 = arith.constant 0 : i32
    %c0_i32_2 = arith.constant 0 : i32
    return %c0_i32, %c0_i32_0, %c0_i32_1 : i32, i32, i32
  }
  func.func @transform_8(%arg0: i32, %arg1: memref<2xi32, #tpu.memory_space<smem>>) -> (i32, i32, i32) {
    %c0_i32 = arith.constant 0 : i32
    %c0_i32_0 = arith.constant 0 : i32
    %c0_i32_1 = arith.constant 0 : i32
    %c0_i32_2 = arith.constant 0 : i32
    return %c0_i32, %c0_i32_0, %c0_i32_1 : i32, i32, i32
  }
  func.func @transform_9(%arg0: i32, %arg1: memref<2xi32, #tpu.memory_space<smem>>) -> (i32, i32, i32) {
    %c0_i32 = arith.constant 0 : i32
    %c0_i32_0 = arith.constant 0 : i32
    %c0_i32_1 = arith.constant 0 : i32
    %c0_i32_2 = arith.constant 0 : i32
    return %c0_i32, %c0_i32_0, %c0_i32_1 : i32, i32, i32
  }
  func.func @transform_10(%arg0: i32, %arg1: memref<2xi32, #tpu.memory_space<smem>>) -> (i32, i32, i32) {
    %c0_i32 = arith.constant 0 : i32
    %c0_i32_0 = arith.constant 0 : i32
    %c0_i32_1 = arith.constant 0 : i32
    %c0_i32_2 = arith.constant 0 : i32
    return %c0_i32, %c0_i32_0, %c0_i32_1 : i32, i32, i32
  }
  func.func @transform_11(%arg0: i32, %arg1: memref<2xi32, #tpu.memory_space<smem>>) -> (i32, i32, i32) {
    %c0_i32 = arith.constant 0 : i32
    %c0_i32_0 = arith.constant 0 : i32
    %c0_i32_1 = arith.constant 0 : i32
    %c0_i32_2 = arith.constant 0 : i32
    return %c0_i32, %c0_i32_0, %c0_i32_1 : i32, i32, i32
  }
  func.func @transform_12(%arg0: i32, %arg1: memref<2xi32, #tpu.memory_space<smem>>) -> (i32, i32, i32) {
    %c0_i32 = arith.constant 0 : i32
    %c0_i32_0 = arith.constant 0 : i32
    %c0_i32_1 = arith.constant 0 : i32
    %c0_i32_2 = arith.constant 0 : i32
    return %c0_i32, %c0_i32_0, %c0_i32_1 : i32, i32, i32
  }
  func.func @transform_13(%arg0: i32, %arg1: memref<2xi32, #tpu.memory_space<smem>>) -> (i32, i32, i32) {
    %c0_i32 = arith.constant 0 : i32
    %c0_i32_0 = arith.constant 0 : i32
    %c0_i32_1 = arith.constant 0 : i32
    %c0_i32_2 = arith.constant 0 : i32
    return %c0_i32, %c0_i32_0, %c0_i32_1 : i32, i32, i32
  }
  func.func @transform_14(%arg0: i32, %arg1: memref<2xi32, #tpu.memory_space<smem>>) -> (i32, i32) {
    %c0_i32 = arith.constant 0 : i32
    %c0_i32_0 = arith.constant 0 : i32
    %c0_i32_1 = arith.constant 0 : i32
    return %c0_i32, %c0_i32_0 : i32, i32
  }
  func.func @transform_15(%arg0: i32, %arg1: memref<2xi32, #tpu.memory_space<smem>>) -> (i32, i32) {
    %c0_i32 = arith.constant 0 : i32
    %c0_i32_0 = arith.constant 0 : i32
    %c0_i32_1 = arith.constant 0 : i32
    return %c0_i32, %c0_i32_0 : i32, i32
  }
  func.func @transform_16(%arg0: i32, %arg1: memref<2xi32, #tpu.memory_space<smem>>) -> (i32, i32) {
    %c0_i32 = arith.constant 0 : i32
    %c0_i32_0 = arith.constant 0 : i32
    %c0_i32_1 = arith.constant 0 : i32
    return %c0_i32, %c0_i32_0 : i32, i32
  }
  func.func @transform_17(%arg0: i32, %arg1: memref<2xi32, #tpu.memory_space<smem>>) -> (i32, i32) {
    %c0_i32 = arith.constant 0 : i32
    %c0_i32_0 = arith.constant 0 : i32
    %c0_i32_1 = arith.constant 0 : i32
    return %c0_i32, %c0_i32_0 : i32, i32
  }
}

</mosaic_0001>

<llo_original>
// kernel: clip_text_encoder_forward.1
$region0: #{clip_text_encoder_forward.1}
  #allocation0 [shape = 'u32[]', space=smem, size = 0x4, offset = 0x4, fixed_abs, tag = 'smem constant byte address 0x4 - core index']
  #allocation1 [shape = 'u32[144,128]{1,0:T(1,128)}', space=vmem, size = 0x12000, scoped, tag = 'internal scratch']
  #allocation2 [shape = 'f32[16,32]{1,0:T(8,128)}', space=vmem, size = 0x2000, scoped, tag = 'scratch operand']
  #allocation3 [shape = 's32[1]{0}', space=sflag, size = 0x4, scoped, tag = 'scoped memory for clip_text_encoder_forward.1']
  #allocation4 [shape = 'u8[512]{0}', space=smem, size = 0x200, scoped, tag = 'prefetched SMEM operand 0']
  %s0 = inlined_call_operand.vmem [shape: s32[2], index: 0, kind: input, shape index: {}]
  %s1 = inlined_call_operand.vmem [shape: f32[2,8,32], index: 1, kind: input, shape index: {}]
  %s2 = inlined_call_operand.vmem [shape: f32[2,8,8], index: 2, kind: input, shape index: {}]
  %s3 = inlined_call_operand.vmem [shape: f32[2,1,32], index: 3, kind: input, shape index: {}]
  %s4 = inlined_call_operand.vmem [shape: f32[2,1,32], index: 4, kind: input, shape index: {}]
  %s5 = inlined_call_operand.vmem [shape: bf16[2,32,96], index: 5, kind: input, shape index: {}]
  %s6 = inlined_call_operand.vmem [shape: f32[2,1,96], index: 6, kind: input, shape index: {}]
  %s7 = inlined_call_operand.vmem [shape: bf16[2,32,32], index: 7, kind: input, shape index: {}]
  %s8 = inlined_call_operand.vmem [shape: f32[2,1,32], index: 8, kind: input, shape index: {}]
  %s9 = inlined_call_operand.vmem [shape: f32[2,1,32], index: 9, kind: input, shape index: {}]
  %s10 = inlined_call_operand.vmem [shape: f32[2,1,32], index: 10, kind: input, shape index: {}]
  %s11 = inlined_call_operand.vmem [shape: bf16[2,32,128], index: 11, kind: input, shape index: {}]
  %s12 = inlined_call_operand.vmem [shape: f32[2,1,128], index: 12, kind: input, shape index: {}]
  %s13 = inlined_call_operand.vmem [shape: bf16[2,128,32], index: 13, kind: input, shape index: {}]
  %s14 = inlined_call_operand.vmem [shape: f32[2,1,32], index: 14, kind: input, shape index: {}]
  %s15 = inlined_call_operand.vmem [shape: f32[1,32], index: 15, kind: input, shape index: {}]
  %s16 = inlined_call_operand.vmem [shape: f32[1,32], index: 16, kind: input, shape index: {}]
  %s17 = inlined_call_operand.vmem [shape: bf16[32,16], index: 17, kind: input, shape index: {}]
  %s18 = inlined_call_operand.hbm [shape: f32[2,16], index: 18, kind: output, shape index: {}]
  %s19 = sld [smem:[#allocation0]]
  $region78: #{clip_text_encoder_forward.1} parent=0
    _
  %s21 = ssub.s32 1, %s19
  %s22 = scalar_select 0, %s21, %s19
  %s23 = sshll.u32 %s0, 4
  %s24 = int_to_ptr.vmem [resolvable:$true] %s23
  %26 = dma.vmem_to_smem %s24, 16, [#allocation4], [#allocation3]
  %27 = dma.done [#allocation3], 16
  %28 = sfence
  $region1: #{clip_text_encoder_forward.1} parent=0
    #allocation5 [shape = 'u8[1024]{0}', space=vmem, size = 0x400, scoped, tag = 'output window, operand 0, single buffered']
    #allocation6 [shape = 's32[1]{0}', space=sflag, size = 0x4, scoped, tag = 'scoped memory for clip_text_encoder_forward.1']
    %29 = vsyncpa [#allocation6], 0
    // Predicated region
    $region2: #{clip_text_encoder_forward.1} parent=1 // pred_check
      _
    $region3: #{clip_text_encoder_forward.1} parent=1 // pred_check_branch
      %31 = sbr.rel (0) target = $region5
    $region4: #{clip_text_encoder_forward.1} parent=1 // pred_region
      _
    $region5: #{clip_text_encoder_forward.1} parent=1 // pred_fallthru
      _
    // Predicated region
    $region6: #{clip_text_encoder_forward.1} parent=1 // pred_check
      _
    $region7: #{clip_text_encoder_forward.1} parent=1 // pred_check_branch
      %33 = sbr.rel (0) target = $region9
    $region8: #{clip_text_encoder_forward.1} parent=1 // pred_region
      _
    $region9: #{clip_text_encoder_forward.1} parent=1 // pred_fallthru
      _
    // Predicated region
    $region10: #{clip_text_encoder_forward.1} parent=1 // pred_check
      _
    $region11: #{clip_text_encoder_forward.1} parent=1 // pred_check_branch
      %35 = sbr.rel (0) target = $region13
    $region12: #{clip_text_encoder_forward.1} parent=1 // pred_region
      _
    $region13: #{clip_text_encoder_forward.1} parent=1 // pred_fallthru
      _
    // Predicated region
    $region14: #{clip_text_encoder_forward.1} parent=1 // pred_check
      _
    $region15: #{clip_text_encoder_forward.1} parent=1 // pred_check_branch
      %37 = sbr.rel (0) target = $region17
    $region16: #{clip_text_encoder_forward.1} parent=1 // pred_region
      _
    $region17: #{clip_text_encoder_forward.1} parent=1 // pred_fallthru
      _
    // Predicated region
    $region18: #{clip_text_encoder_forward.1} parent=1 // pred_check
      _
    $region19: #{clip_text_encoder_forward.1} parent=1 // pred_check_branch
      %39 = sbr.rel (0) target = $region21
    $region20: #{clip_text_encoder_forward.1} parent=1 // pred_region
      _
    $region21: #{clip_text_encoder_forward.1} parent=1 // pred_fallthru
      _
    // Predicated region
    $region22: #{clip_text_encoder_forward.1} parent=1 // pred_check
      _
    $region23: #{clip_text_encoder_forward.1} parent=1 // pred_check_branch
      %41 = sbr.rel (0) target = $region25
    $region24: #{clip_text_encoder_forward.1} parent=1 // pred_region
      _
    $region25: #{clip_text_encoder_forward.1} parent=1 // pred_fallthru
      _
    // Predicated region
    $region26: #{clip_text_encoder_forward.1} parent=1 // pred_check
      _
    $region27: #{clip_text_encoder_forward.1} parent=1 // pred_check_branch
      %43 = sbr.rel (0) target = $region29
    $region28: #{clip_text_encoder_forward.1} parent=1 // pred_region
      _
    $region29: #{clip_text_encoder_forward.1} parent=1 // pred_fallthru
      _
    // Predicated region
    $region30: #{clip_text_encoder_forward.1} parent=1 // pred_check
      _
    $region31: #{clip_text_encoder_forward.1} parent=1 // pred_check_branch
      %45 = sbr.rel (0) target = $region33
    $region32: #{clip_text_encoder_forward.1} parent=1 // pred_region
      _
    $region33: #{clip_text_encoder_forward.1} parent=1 // pred_fallthru
      _
    // Predicated region
    $region34: #{clip_text_encoder_forward.1} parent=1 // pred_check
      _
    $region35: #{clip_text_encoder_forward.1} parent=1 // pred_check_branch
      %47 = sbr.rel (0) target = $region37
    $region36: #{clip_text_encoder_forward.1} parent=1 // pred_region
      _
    $region37: #{clip_text_encoder_forward.1} parent=1 // pred_fallthru
      _
    // Predicated region
    $region38: #{clip_text_encoder_forward.1} parent=1 // pred_check
      _
    $region39: #{clip_text_encoder_forward.1} parent=1 // pred_check_branch
      %49 = sbr.rel (0) target = $region41
    $region40: #{clip_text_encoder_forward.1} parent=1 // pred_region
      _
    $region41: #{clip_text_encoder_forward.1} parent=1 // pred_fallthru
      _
    // Predicated region
    $region42: #{clip_text_encoder_forward.1} parent=1 // pred_check
      _
    $region43: #{clip_text_encoder_forward.1} parent=1 // pred_check_branch
      %51 = sbr.rel (0) target = $region45
    $region44: #{clip_text_encoder_forward.1} parent=1 // pred_region
      _
    $region45: #{clip_text_encoder_forward.1} parent=1 // pred_fallthru
      _
    // Predicated region
    $region46: #{clip_text_encoder_forward.1} parent=1 // pred_check
      _
    $region47: #{clip_text_encoder_forward.1} parent=1 // pred_check_branch
      %53 = sbr.rel (0) target = $region49
    $region48: #{clip_text_encoder_forward.1} parent=1 // pred_region
      _
    $region49: #{clip_text_encoder_forward.1} parent=1 // pred_fallthru
      _
    // Predicated region
    $region50: #{clip_text_encoder_forward.1} parent=1 // pred_check
      _
    $region51: #{clip_text_encoder_forward.1} parent=1 // pred_check_branch
      %55 = sbr.rel (0) target = $region53
    $region52: #{clip_text_encoder_forward.1} parent=1 // pred_region
      _
    $region53: #{clip_text_encoder_forward.1} parent=1 // pred_fallthru
      _
    // Predicated region
    $region54: #{clip_text_encoder_forward.1} parent=1 // pred_check
      _
    $region55: #{clip_text_encoder_forward.1} parent=1 // pred_check_branch
      %57 = sbr.rel (0) target = $region57
    $region56: #{clip_text_encoder_forward.1} parent=1 // pred_region
      _
    $region57: #{clip_text_encoder_forward.1} parent=1 // pred_fallthru
      _
    // Predicated region
    $region58: #{clip_text_encoder_forward.1} parent=1 // pred_check
      _
    $region59: #{clip_text_encoder_forward.1} parent=1 // pred_check_branch
      %59 = sbr.rel (0) target = $region61
    $region60: #{clip_text_encoder_forward.1} parent=1 // pred_region
      _
    $region61: #{clip_text_encoder_forward.1} parent=1 // pred_fallthru
      _
    // Predicated region
    $region62: #{clip_text_encoder_forward.1} parent=1 // pred_check
      _
    $region63: #{clip_text_encoder_forward.1} parent=1 // pred_check_branch
      %61 = sbr.rel (0) target = $region65
    $region64: #{clip_text_encoder_forward.1} parent=1 // pred_region
      _
    $region65: #{clip_text_encoder_forward.1} parent=1 // pred_fallthru
      _
    // Predicated region
    $region66: #{clip_text_encoder_forward.1} parent=1 // pred_check
      _
    $region67: #{clip_text_encoder_forward.1} parent=1 // pred_check_branch
      %63 = sbr.rel (0) target = $region69
    $region68: #{clip_text_encoder_forward.1} parent=1 // pred_region
      _
    $region69: #{clip_text_encoder_forward.1} parent=1 // pred_fallthru
      _
    %v65 = vld [vmem:[%s1] sm:$0xff]
    %v66 = vld [vmem:[%s1 + $0x8] sm:$0xff]
    %v67 = vld [vmem:[%s2] sm:$0xff]
    %v68 = vld [vmem:[%s2 + $0x8] sm:$0xff]
    %v69 = vld [vmem:[%s3] sm:$0x1]
    %v70 = vld [vmem:[%s4] sm:$0x1]
    %vm71 = vcmask 261120
    %v72 = vsel %vm71, %v65, 0.0
    %73 = vadd.xlane.f32.xlu0 %v72
    %v74 = vpop.xlane.xlu0 %73
    %v75 = vsel %vm71, %v66, 0.0
    %76 = vadd.xlane.f32.xlu0 %v75
    %v77 = vpop.xlane.xlu0 %76
    %v78 = vrcp.pop 32.0
    %v79 = vmul.f32 %v74, %v78
    %v80 = vmul.f32 %v77, %v78
    %v81 = vsub.f32 %v65, %v79
    %v82 = vsub.f32 %v66, %v80
    %v83 = vmul.f32 %v81, %v81
    %v84 = vmul.f32 %v82, %v82
    %v85 = vsel %vm71, %v83, 0.0
    %86 = vadd.xlane.f32.xlu0 %v85
    %v87 = vpop.xlane.xlu0 %86
    %v88 = vsel %vm71, %v84, 0.0
    %89 = vadd.xlane.f32.xlu0 %v88
    %v90 = vpop.xlane.xlu0 %89
    %v91 = vmul.f32 %v87, %v78
    %v92 = vmul.f32 %v90, %v78
    %v93 = vadd.f32 %v91, 1e-05
    %v94 = vadd.f32 %v92, 1e-05
    %v95 = vrsqrt.pop %v93
    %v96 = vrsqrt.pop %v94
    %v97 = vmul.f32 %v81, %v95
    %v98 = vmul.f32 %v82, %v96
    %v100 = vlaneseq
    %v101 = vshrl.u32 %v100, 7
    %v102 = vsub.s32 0, %v101
    %v103 = vrot.slane %v69, %v102
    %v105 = vmul.f32 %v97, %v103
    %v106 = vmul.f32 %v98, %v103
    %v108 = vlaneseq
    %v109 = vshrl.u32 %v108, 7
    %v110 = vsub.s32 0, %v109
    %v111 = vrot.slane %v70, %v110
    %v113 = vadd.f32 %v105, %v111
    %v114 = vadd.f32 %v106, %v111
    %v115 = vld [vmem:[%s5] sm:$0xf]
    %v116 = vld [vmem:[%s5 + $0x4] sm:$0xf]
    %v117 = vld [vmem:[%s5 + $0x8] sm:$0xf]
    %v118 = vld [vmem:[%s5 + $0xc] sm:$0xf]
    %v119 = vpack.c.bf16 %v114, %v113
    %v120 = vld [vmem:[%s6] sm:$0x1]
    %v122 = vlaneseq
    %v123 = vshrl.u32 %v122, 7
    %v124 = vsub.s32 0, %v123
    %v125 = vrot.slane %v120, %v124
    %v131 = vunpack.c.l.b16 %v115
    %v132 = vunpack.c.l.b16 %v116
    %v133 = vunpack.c.l.b16 %v117
    %v134 = vunpack.c.l.b16 %v118
    %v135 = vpack.c.b16 %v132, %v131
    %v136 = vpack.c.b16 %v134, %v133
    %v140 = vsel %vm71, %v119, 0
    %142 = vmatprep.subr.bf16.mxu0 0
    %143 = vmatpush1.bf16.msra.mxu0 %v135
    %144 = vmatprep.subr.bf16.mxu0 0
    %145 = vmatpush1.bf16.msra.mxu0 %v136
    %146 = vmatprep.subr.bf16.mxu0 0
    %147 = vmatpush1.bf16.msra.mxu0 0
    %148 = vmatprep.subr.bf16.mxu0 0
    %149 = vmatpush1.bf16.msra.mxu0 0
    %150 = vmatprep.subr.bf16.mxu0 0
    %151 = vmatpush1.bf16.msra.mxu0 0
    %152 = vmatprep.subr.bf16.mxu0 0
    %153 = vmatpush1.bf16.msra.mxu0 0
    %154 = vmatprep.subr.bf16.mxu0 0
    %155 = vmatpush1.bf16.msra.mxu0 0
    %156 = vmatprep.subr.bf16.mxu0 0
    %157 = vmatpush1.bf16.msra.mxu0 0
    %158 = vmatprep.subr.bf16.mxu0 0
    %159 = vmatpush1.bf16.msra.mxu0 0
    %160 = vmatprep.subr.bf16.mxu0 0
    %161 = vmatpush1.bf16.msra.mxu0 0
    %162 = vmatprep.subr.bf16.mxu0 0
    %163 = vmatpush1.bf16.msra.mxu0 0
    %164 = vmatprep.subr.bf16.mxu0 0
    %165 = vmatpush1.bf16.msra.mxu0 0
    %166 = vmatprep.subr.bf16.mxu0 0
    %167 = vmatpush1.bf16.msra.mxu0 0
    %168 = vmatprep.subr.bf16.mxu0 0
    %169 = vmatpush1.bf16.msra.mxu0 0
    %170 = vmatprep.subr.bf16.mxu0 0
    %171 = vmatpush1.bf16.msra.mxu0 0
    %172 = vmatprep.subr.bf16.mxu0 0
    %173 = vmatpush1.bf16.msra.mxu0 0
    %174 = vmatprep.mubr.bf16.mxu0 0
    %175 = vmatmul.mubr.bf16.gmra.mrb[0].mxu0 %v140
    %v176 = vpop.f32.mrb[0].mxu0
    %v177 = vadd.f32 %v125, %v176
    %v178 = vpop.f32.mrb[0].mxu0
    %v179 = vpop.f32.mrb[0].mxu0
    %v180 = vadd.f32 %v125, %v179
    %v181 = vpop.f32.mrb[0].mxu0
    %182 = vdwg.mxu0
    %v183 = vmul.f32 %v177, 0.35355338
    %v184 = vmul.f32 %v180, 0.35355338
    %v185 = vld [vmem:[%s7] sm:$0xf]
    %v186 = vld [vmem:[%s7 + $0x4] sm:$0xf]
    %v187 = vld [vmem:[%s7 + $0x8] sm:$0xf]
    %v188 = vld [vmem:[%s7 + $0xc] sm:$0xf]
    %v189 = vpack.c.bf16 %v183, %v183
    %v190 = vpack.c.bf16 %v184, %v184
    %v191 = vpack.c.bf16 %v177, %v177
    %v192 = vpack.c.bf16 %v180, %v180
    %194 = vrot.lane.b32.xlu0 %v191, 96
    %v195 = vpop.permute.xlu0 %194
    %vm196 = vcmask 64512
    %v198 = vsel %vm196, %v189, 0
    %v201 = vsel %vm196, %v195, 0
    %203 = vmatprep.subr.bf16.mxu0 0
    %204 = vmatpush1.bf16.xpose.msra.mxu0 %v201
    %205 = vmatprep.subr.bf16.mxu0 0
    %206 = vmatpush1.bf16.xpose.msra.mxu0 0
    %207 = vmatprep.subr.bf16.mxu0 0
    %208 = vmatpush1.bf16.xpose.msra.mxu0 0
    %209 = vmatprep.subr.bf16.mxu0 0
    %210 = vmatpush1.bf16.xpose.msra.mxu0 0
    %211 = vmatprep.subr.bf16.mxu0 0
    %212 = vmatpush1.bf16.xpose.msra.mxu0 0
    %213 = vmatprep.subr.bf16.mxu0 0
    %214 = vmatpush1.bf16.xpose.msra.mxu0 0
    %215 = vmatprep.subr.bf16.mxu0 0
    %216 = vmatpush1.bf16.xpose.msra.mxu0 0
    %217 = vmatprep.subr.bf16.mxu0 0
    %218 = vmatpush1.bf16.xpose.msra.mxu0 0
    %219 = vmatprep.subr.bf16.mxu0 0
    %220 = vmatpush1.bf16.xpose.msra.mxu0 0
    %221 = vmatprep.subr.bf16.mxu0 0
    %222 = vmatpush1.bf16.xpose.msra.mxu0 0
    %223 = vmatprep.subr.bf16.mxu0 0
    %224 = vmatpush1.bf16.xpose.msra.mxu0 0
    %225 = vmatprep.subr.bf16.mxu0 0
    %226 = vmatpush1.bf16.xpose.msra.mxu0 0
    %227 = vmatprep.subr.bf16.mxu0 0
    %228 = vmatpush1.bf16.xpose.msra.mxu0 0
    %229 = vmatprep.subr.bf16.mxu0 0
    %230 = vmatpush1.bf16.xpose.msra.mxu0 0
    %231 = vmatprep.subr.bf16.mxu0 0
    %232 = vmatpush1.bf16.xpose.msra.mxu0 0
    %233 = vmatprep.subr.bf16.mxu0 0
    %234 = vmatpush1.bf16.xpose.msra.mxu0 0
    %235 = vmatprep.mubr.bf16.mxu0 0
    %236 = vmatmul.mubr.bf16.gmra.mrb[0].mxu0 %v198
    %v237 = vpop.f32.mrb[0].mxu0
    %v238 = vadd.f32 %v67, %v237
    %v239 = vpop.f32.mrb[0].mxu0
    %v240 = vpop.f32.mrb[0].mxu0
    %v241 = vpop.f32.mrb[0].mxu0
    %242 = vdwg.mxu0
    %244 = vrot.lane.b32.xlu0 %v192, 96
    %v245 = vpop.permute.xlu0 %244
    %v247 = vsel %vm196, %v190, 0
    %v250 = vsel %vm196, %v245, 0
    %252 = vmatprep.subr.bf16.mxu0 0
    %253 = vmatpush1.bf16.xpose.msra.mxu0 %v250
    %254 = vmatprep.subr.bf16.mxu0 0
    %255 = vmatpush1.bf16.xpose.msra.mxu0 0
    %256 = vmatprep.subr.bf16.mxu0 0
    %257 = vmatpush1.bf16.xpose.msra.mxu0 0
    %258 = vmatprep.subr.bf16.mxu0 0
    %259 = vmatpush1.bf16.xpose.msra.mxu0 0
    %260 = vmatprep.subr.bf16.mxu0 0
    %261 = vmatpush1.bf16.xpose.msra.mxu0 0
    %262 = vmatprep.subr.bf16.mxu0 0
    %263 = vmatpush1.bf16.xpose.msra.mxu0 0
    %264 = vmatprep.subr.bf16.mxu0 0
    %265 = vmatpush1.bf16.xpose.msra.mxu0 0
    %266 = vmatprep.subr.bf16.mxu0 0
    %267 = vmatpush1.bf16.xpose.msra.mxu0 0
    %268 = vmatprep.subr.bf16.mxu0 0
    %269 = vmatpush1.bf16.xpose.msra.mxu0 0
    %270 = vmatprep.subr.bf16.mxu0 0
    %271 = vmatpush1.bf16.xpose.msra.mxu0 0
    %272 = vmatprep.subr.bf16.mxu0 0
    %273 = vmatpush1.bf16.xpose.msra.mxu0 0
    %274 = vmatprep.subr.bf16.mxu0 0
    %275 = vmatpush1.bf16.xpose.msra.mxu0 0
    %276 = vmatprep.subr.bf16.mxu0 0
    %277 = vmatpush1.bf16.xpose.msra.mxu0 0
    %278 = vmatprep.subr.bf16.mxu0 0
    %279 = vmatpush1.bf16.xpose.msra.mxu0 0
    %280 = vmatprep.subr.bf16.mxu0 0
    %281 = vmatpush1.bf16.xpose.msra.mxu0 0
    %282 = vmatprep.subr.bf16.mxu0 0
    %283 = vmatpush1.bf16.xpose.msra.mxu0 0
    %284 = vmatprep.mubr.bf16.mxu0 0
    %285 = vmatmul.mubr.bf16.gmra.mrb[0].mxu0 %v247
    %v286 = vpop.f32.mrb[0].mxu0
    %v287 = vadd.f32 %v68, %v286
    %v288 = vpop.f32.mrb[0].mxu0
    %v289 = vpop.f32.mrb[0].mxu0
    %v290 = vpop.f32.mrb[0].mxu0
    %291 = vdwg.mxu0
    %v292 = vsel %vm196, %v238, -inf
    %293 = vmax.xlane.f32.xlu0 %v292
    %v294 = vpop.xlane.xlu0 %293
    %v295 = vsel %vm196, %v287, -inf
    %296 = vmax.xlane.f32.xlu0 %v295
    %v297 = vpop.xlane.xlu0 %296
    %v298 = vsub.f32 %v238, %v294
    %v299 = vsub.f32 %v287, %v297
    %v300 = vmul.f32 %v298, 1.442695
    %v301 = vpow.pop %v300
    %v302 = vmul.f32 %v299, 1.442695
    %v303 = vpow.pop %v302
    %v304 = vsel %vm196, %v301, 0.0
    %305 = vadd.xlane.f32.xlu0 %v304
    %v306 = vpop.xlane.xlu0 %305
    %v307 = vsel %vm196, %v303, 0.0
    %308 = vadd.xlane.f32.xlu0 %v307
    %v309 = vpop.xlane.xlu0 %308
    %v310 = vrcp.pop %v306
    %v311 = vrcp.pop %v309
    %v312 = vmul.f32 %v301, %v310
    %v313 = vmul.f32 %v303, %v311
    %v314 = vpack.c.bf16 %v312, %v312
    %v315 = vpack.c.bf16 %v313, %v313
    %316 = vrot.lane.b32.xlu0 %v191, 64
    %v317 = vpop.permute.xlu0 %316
    %v319 = vsel %vm196, %v314, 0
    %vm321 = vcmask 1043456
    %v323 = vsel %vm321, %v317, 0
    %325 = vmatprep.subr.bf16.mxu0 0
    %326 = vmatpush1.bf16.msra.mxu0 %v323
    %327 = vmatprep.subr.bf16.mxu0 0
    %328 = vmatpush1.bf16.msra.mxu0 0
    %329 = vmatprep.subr.bf16.mxu0 0
    %330 = vmatpush1.bf16.msra.mxu0 0
    %331 = vmatprep.subr.bf16.mxu0 0
    %332 = vmatpush1.bf16.msra.mxu0 0
    %333 = vmatprep.subr.bf16.mxu0 0
    %334 = vmatpush1.bf16.msra.mxu0 0
    %335 = vmatprep.subr.bf16.mxu0 0
    %336 = vmatpush1.bf16.msra.mxu0 0
    %337 = vmatprep.subr.bf16.mxu0 0
    %338 = vmatpush1.bf16.msra.mxu0 0
    %339 = vmatprep.subr.bf16.mxu0 0
    %340 = vmatpush1.bf16.msra.mxu0 0
    %341 = vmatprep.subr.bf16.mxu0 0
    %342 = vmatpush1.bf16.msra.mxu0 0
    %343 = vmatprep.subr.bf16.mxu0 0
    %344 = vmatpush1.bf16.msra.mxu0 0
    %345 = vmatprep.subr.bf16.mxu0 0
    %346 = vmatpush1.bf16.msra.mxu0 0
    %347 = vmatprep.subr.bf16.mxu0 0
    %348 = vmatpush1.bf16.msra.mxu0 0
    %349 = vmatprep.subr.bf16.mxu0 0
    %350 = vmatpush1.bf16.msra.mxu0 0
    %351 = vmatprep.subr.bf16.mxu0 0
    %352 = vmatpush1.bf16.msra.mxu0 0
    %353 = vmatprep.subr.bf16.mxu0 0
    %354 = vmatpush1.bf16.msra.mxu0 0
    %355 = vmatprep.subr.bf16.mxu0 0
    %356 = vmatpush1.bf16.msra.mxu0 0
    %357 = vmatprep.mubr.bf16.mxu0 0
    %358 = vmatmul.mubr.bf16.gmra.mrb[0].mxu0 %v319
    %v359 = vpop.f32.mrb[0].mxu0
    %v360 = vadd.f32 0.0, %v359
    %v361 = vpop.f32.mrb[0].mxu0
    %v362 = vpop.f32.mrb[0].mxu0
    %v363 = vpop.f32.mrb[0].mxu0
    %364 = vdwg.mxu0
    %365 = vrot.lane.b32.xlu0 %v192, 64
    %v366 = vpop.permute.xlu0 %365
    %v368 = vsel %vm196, %v315, 0
    %v371 = vsel %vm321, %v366, 0
    %373 = vmatprep.subr.bf16.mxu0 0
    %374 = vmatpush1.bf16.msra.mxu0 %v371
    %375 = vmatprep.subr.bf16.mxu0 0
    %376 = vmatpush1.bf16.msra.mxu0 0
    %377 = vmatprep.subr.bf16.mxu0 0
    %378 = vmatpush1.bf16.msra.mxu0 0
    %379 = vmatprep.subr.bf16.mxu0 0
    %380 = vmatpush1.bf16.msra.mxu0 0
    %381 = vmatprep.subr.bf16.mxu0 0
    %382 = vmatpush1.bf16.msra.mxu0 0
    %383 = vmatprep.subr.bf16.mxu0 0
    %384 = vmatpush1.bf16.msra.mxu0 0
    %385 = vmatprep.subr.bf16.mxu0 0
    %386 = vmatpush1.bf16.msra.mxu0 0
    %387 = vmatprep.subr.bf16.mxu0 0
    %388 = vmatpush1.bf16.msra.mxu0 0
    %389 = vmatprep.subr.bf16.mxu0 0
    %390 = vmatpush1.bf16.msra.mxu0 0
    %391 = vmatprep.subr.bf16.mxu0 0
    %392 = vmatpush1.bf16.msra.mxu0 0
    %393 = vmatprep.subr.bf16.mxu0 0
    %394 = vmatpush1.bf16.msra.mxu0 0
    %395 = vmatprep.subr.bf16.mxu0 0
    %396 = vmatpush1.bf16.msra.mxu0 0
    %397 = vmatprep.subr.bf16.mxu0 0
    %398 = vmatpush1.bf16.msra.mxu0 0
    %399 = vmatprep.subr.bf16.mxu0 0
    %400 = vmatpush1.bf16.msra.mxu0 0
    %401 = vmatprep.subr.bf16.mxu0 0
    %402 = vmatpush1.bf16.msra.mxu0 0
    %403 = vmatprep.subr.bf16.mxu0 0
    %404 = vmatpush1.bf16.msra.mxu0 0
    %405 = vmatprep.mubr.bf16.mxu0 0
    %406 = vmatmul.mubr.bf16.gmra.mrb[0].mxu0 %v368
    %v407 = vpop.f32.mrb[0].mxu0
    %v408 = vadd.f32 0.0, %v407
    %v409 = vpop.f32.mrb[0].mxu0
    %v410 = vpop.f32.mrb[0].mxu0
    %v411 = vpop.f32.mrb[0].mxu0
    %412 = vdwg.mxu0
    %v413 = vpack.c.bf16 %v408, %v360
    %415 = vrot.lane.b32.xlu0 %v189, 120
    %v416 = vpop.permute.xlu0 %415
    %417 = vrot.lane.b32.xlu0 %v191, 88
    %v418 = vpop.permute.xlu0 %417
    %v420 = vsel %vm196, %v416, 0
    %v423 = vsel %vm196, %v418, 0
    %425 = vmatprep.subr.bf16.mxu0 0
    %426 = vmatpush1.bf16.xpose.msra.mxu0 %v423
    %427 = vmatprep.subr.bf16.mxu0 0
    %428 = vmatpush1.bf16.xpose.msra.mxu0 0
    %429 = vmatprep.subr.bf16.mxu0 0
    %430 = vmatpush1.bf16.xpose.msra.mxu0 0
    %431 = vmatprep.subr.bf16.mxu0 0
    %432 = vmatpush1.bf16.xpose.msra.mxu0 0
    %433 = vmatprep.subr.bf16.mxu0 0
    %434 = vmatpush1.bf16.xpose.msra.mxu0 0
    %435 = vmatprep.subr.bf16.mxu0 0
    %436 = vmatpush1.bf16.xpose.msra.mxu0 0
    %437 = vmatprep.subr.bf16.mxu0 0
    %438 = vmatpush1.bf16.xpose.msra.mxu0 0
    %439 = vmatprep.subr.bf16.mxu0 0
    %440 = vmatpush1.bf16.xpose.msra.mxu0 0
    %441 = vmatprep.subr.bf16.mxu0 0
    %442 = vmatpush1.bf16.xpose.msra.mxu0 0
    %443 = vmatprep.subr.bf16.mxu0 0
    %444 = vmatpush1.bf16.xpose.msra.mxu0 0
    %445 = vmatprep.subr.bf16.mxu0 0
    %446 = vmatpush1.bf16.xpose.msra.mxu0 0
    %447 = vmatprep.subr.bf16.mxu0 0
    %448 = vmatpush1.bf16.xpose.msra.mxu0 0
    %449 = vmatprep.subr.bf16.mxu0 0
    %450 = vmatpush1.bf16.xpose.msra.mxu0 0
    %451 = vmatprep.subr.bf16.mxu0 0
    %452 = vmatpush1.bf16.xpose.msra.mxu0 0
    %453 = vmatprep.subr.bf16.mxu0 0
    %454 = vmatpush1.bf16.xpose.msra.mxu0 0
    %455 = vmatprep.subr.bf16.mxu0 0
    %456 = vmatpush1.bf16.xpose.msra.mxu0 0
    %457 = vmatprep.mubr.bf16.mxu0 0
    %458 = vmatmul.mubr.bf16.gmra.mrb[0].mxu0 %v420
    %v459 = vpop.f32.mrb[0].mxu0
    %v460 = vadd.f32 %v67, %v459
    %v461 = vpop.f32.mrb[0].mxu0
    %v462 = vpop.f32.mrb[0].mxu0
    %v463 = vpop.f32.mrb[0].mxu0
    %464 = vdwg.mxu0
    %466 = vrot.lane.b32.xlu0 %v190, 120
    %v467 = vpop.permute.xlu0 %466
    %468 = vrot.lane.b32.xlu0 %v192, 88
    %v469 = vpop.permute.xlu0 %468
    %v471 = vsel %vm196, %v467, 0
    %v474 = vsel %vm196, %v469, 0
    %476 = vmatprep.subr.bf16.mxu0 0
    %477 = vmatpush1.bf16.xpose.msra.mxu0 %v474
    %478 = vmatprep.subr.bf16.mxu0 0
    %479 = vmatpush1.bf16.xpose.msra.mxu0 0
    %480 = vmatprep.subr.bf16.mxu0 0
    %481 = vmatpush1.bf16.xpose.msra.mxu0 0
    %482 = vmatprep.subr.bf16.mxu0 0
    %483 = vmatpush1.bf16.xpose.msra.mxu0 0
    %484 = vmatprep.subr.bf16.mxu0 0
    %485 = vmatpush1.bf16.xpose.msra.mxu0 0
    %486 = vmatprep.subr.bf16.mxu0 0
    %487 = vmatpush1.bf16.xpose.msra.mxu0 0
    %488 = vmatprep.subr.bf16.mxu0 0
    %489 = vmatpush1.bf16.xpose.msra.mxu0 0
    %490 = vmatprep.subr.bf16.mxu0 0
    %491 = vmatpush1.bf16.xpose.msra.mxu0 0
    %492 = vmatprep.subr.bf16.mxu0 0
    %493 = vmatpush1.bf16.xpose.msra.mxu0 0
    %494 = vmatprep.subr.bf16.mxu0 0
    %495 = vmatpush1.bf16.xpose.msra.mxu0 0
    %496 = vmatprep.subr.bf16.mxu0 0
    %497 = vmatpush1.bf16.xpose.msra.mxu0 0
    %498 = vmatprep.subr.bf16.mxu0 0
    %499 = vmatpush1.bf16.xpose.msra.mxu0 0
    %500 = vmatprep.subr.bf16.mxu0 0
    %501 = vmatpush1.bf16.xpose.msra.mxu0 0
    %502 = vmatprep.subr.bf16.mxu0 0
    %503 = vmatpush1.bf16.xpose.msra.mxu0 0
    %504 = vmatprep.subr.bf16.mxu0 0
    %505 = vmatpush1.bf16.xpose.msra.mxu0 0
    %506 = vmatprep.subr.bf16.mxu0 0
    %507 = vmatpush1.bf16.xpose.msra.mxu0 0
    %508 = vmatprep.mubr.bf16.mxu0 0
    %509 = vmatmul.mubr.bf16.gmra.mrb[0].mxu0 %v471
    %v510 = vpop.f32.mrb[0].mxu0
    %v511 = vadd.f32 %v68, %v510
    %v512 = vpop.f32.mrb[0].mxu0
    %v513 = vpop.f32.mrb[0].mxu0
    %v514 = vpop.f32.mrb[0].mxu0
    %515 = vdwg.mxu0
    %v516 = vsel %vm196, %v460, -inf
    %517 = vmax.xlane.f32.xlu0 %v516
    %v518 = vpop.xlane.xlu0 %517
    %v519 = vsel %vm196, %v511, -inf
    %520 = vmax.xlane.f32.xlu0 %v519
    %v521 = vpop.xlane.xlu0 %520
    %v522 = vsub.f32 %v460, %v518
    %v523 = vsub.f32 %v511, %v521
    %v524 = vmul.f32 %v522, 1.442695
    %v525 = vpow.pop %v524
    %v526 = vmul.f32 %v523, 1.442695
    %v527 = vpow.pop %v526
    %v528 = vsel %vm196, %v525, 0.0
    %529 = vadd.xlane.f32.xlu0 %v528
    %v530 = vpop.xlane.xlu0 %529
    %v531 = vsel %vm196, %v527, 0.0
    %532 = vadd.xlane.f32.xlu0 %v531
    %v533 = vpop.xlane.xlu0 %532
    %v534 = vrcp.pop %v530
    %v535 = vrcp.pop %v533
    %v536 = vmul.f32 %v525, %v534
    %v537 = vmul.f32 %v527, %v535
    %v538 = vpack.c.bf16 %v536, %v536
    %v539 = vpack.c.bf16 %v537, %v537
    %540 = vrot.lane.b32.xlu0 %v191, 56
    %v541 = vpop.permute.xlu0 %540
    %v543 = vsel %vm196, %v538, 0
    %v546 = vsel %vm321, %v541, 0
    %548 = vmatprep.subr.bf16.mxu0 0
    %549 = vmatpush1.bf16.msra.mxu0 %v546
    %550 = vmatprep.subr.bf16.mxu0 0
    %551 = vmatpush1.bf16.msra.mxu0 0
    %552 = vmatprep.subr.bf16.mxu0 0
    %553 = vmatpush1.bf16.msra.mxu0 0
    %554 = vmatprep.subr.bf16.mxu0 0
    %555 = vmatpush1.bf16.msra.mxu0 0
    %556 = vmatprep.subr.bf16.mxu0 0
    %557 = vmatpush1.bf16.msra.mxu0 0
    %558 = vmatprep.subr.bf16.mxu0 0
    %559 = vmatpush1.bf16.msra.mxu0 0
    %560 = vmatprep.subr.bf16.mxu0 0
    %561 = vmatpush1.bf16.msra.mxu0 0
    %562 = vmatprep.subr.bf16.mxu0 0
    %563 = vmatpush1.bf16.msra.mxu0 0
    %564 = vmatprep.subr.bf16.mxu0 0
    %565 = vmatpush1.bf16.msra.mxu0 0
    %566 = vmatprep.subr.bf16.mxu0 0
    %567 = vmatpush1.bf16.msra.mxu0 0
    %568 = vmatprep.subr.bf16.mxu0 0
    %569 = vmatpush1.bf16.msra.mxu0 0
    %570 = vmatprep.subr.bf16.mxu0 0
    %571 = vmatpush1.bf16.msra.mxu0 0
    %572 = vmatprep.subr.bf16.mxu0 0
    %573 = vmatpush1.bf16.msra.mxu0 0
    %574 = vmatprep.subr.bf16.mxu0 0
    %575 = vmatpush1.bf16.msra.mxu0 0
    %576 = vmatprep.subr.bf16.mxu0 0
    %577 = vmatpush1.bf16.msra.mxu0 0
    %578 = vmatprep.subr.bf16.mxu0 0
    %579 = vmatpush1.bf16.msra.mxu0 0
    %580 = vmatprep.mubr.bf16.mxu0 0
    %581 = vmatmul.mubr.bf16.gmra.mrb[0].mxu0 %v543
    %v582 = vpop.f32.mrb[0].mxu0
    %v583 = vadd.f32 0.0, %v582
    %v584 = vpop.f32.mrb[0].mxu0
    %v585 = vpop.f32.mrb[0].mxu0
    %v586 = vpop.f32.mrb[0].mxu0
    %587 = vdwg.mxu0
    %588 = vrot.lane.b32.xlu0 %v192, 56
    %v589 = vpop.permute.xlu0 %588
    %v591 = vsel %vm196, %v539, 0
    %v594 = vsel %vm321, %v589, 0
    %596 = vmatprep.subr.bf16.mxu0 0
    %597 = vmatpush1.bf16.msra.mxu0 %v594
    %598 = vmatprep.subr.bf16.mxu0 0
    %599 = vmatpush1.bf16.msra.mxu0 0
    %600 = vmatprep.subr.bf16.mxu0 0
    %601 = vmatpush1.bf16.msra.mxu0 0
    %602 = vmatprep.subr.bf16.mxu0 0
    %603 = vmatpush1.bf16.msra.mxu0 0
    %604 = vmatprep.subr.bf16.mxu0 0
    %605 = vmatpush1.bf16.msra.mxu0 0
    %606 = vmatprep.subr.bf16.mxu0 0
    %607 = vmatpush1.bf16.msra.mxu0 0
    %608 = vmatprep.subr.bf16.mxu0 0
    %609 = vmatpush1.bf16.msra.mxu0 0
    %610 = vmatprep.subr.bf16.mxu0 0
    %611 = vmatpush1.bf16.msra.mxu0 0
    %612 = vmatprep.subr.bf16.mxu0 0
    %613 = vmatpush1.bf16.msra.mxu0 0
    %614 = vmatprep.subr.bf16.mxu0 0
    %615 = vmatpush1.bf16.msra.mxu0 0
    %616 = vmatprep.subr.bf16.mxu0 0
    %617 = vmatpush1.bf16.msra.mxu0 0
    %618 = vmatprep.subr.bf16.mxu0 0
    %619 = vmatpush1.bf16.msra.mxu0 0
    %620 = vmatprep.subr.bf16.mxu0 0
    %621 = vmatpush1.bf16.msra.mxu0 0
    %622 = vmatprep.subr.bf16.mxu0 0
    %623 = vmatpush1.bf16.msra.mxu0 0
    %624 = vmatprep.subr.bf16.mxu0 0
    %625 = vmatpush1.bf16.msra.mxu0 0
    %626 = vmatprep.subr.bf16.mxu0 0
    %627 = vmatpush1.bf16.msra.mxu0 0
    %628 = vmatprep.mubr.bf16.mxu0 0
    %629 = vmatmul.mubr.bf16.gmra.mrb[0].mxu0 %v591
    %v630 = vpop.f32.mrb[0].mxu0
    %v631 = vadd.f32 0.0, %v630
    %v632 = vpop.f32.mrb[0].mxu0
    %v633 = vpop.f32.mrb[0].mxu0
    %v634 = vpop.f32.mrb[0].mxu0
    %635 = vdwg.mxu0
    %v636 = vpack.c.bf16 %v631, %v583
    %v638 = vsel %vm196, %v636, 0
    %v641 = vsel %vm321, %v186, 0
    %643 = vmatprep.subr.bf16.mxu0 0
    %644 = vmatpush1.bf16.msra.mxu0 %v641
    %645 = vmatprep.subr.bf16.mxu0 0
    %646 = vmatpush1.bf16.msra.mxu0 0
    %647 = vmatprep.subr.bf16.mxu0 0
    %648 = vmatpush1.bf16.msra.mxu0 0
    %649 = vmatprep.subr.bf16.mxu0 0
    %650 = vmatpush1.bf16.msra.mxu0 0
    %651 = vmatprep.subr.bf16.mxu0 0
    %652 = vmatpush1.bf16.msra.mxu0 0
    %653 = vmatprep.subr.bf16.mxu0 0
    %654 = vmatpush1.bf16.msra.mxu0 0
    %655 = vmatprep.subr.bf16.mxu0 0
    %656 = vmatpush1.bf16.msra.mxu0 0
    %657 = vmatprep.subr.bf16.mxu0 0
    %658 = vmatpush1.bf16.msra.mxu0 0
    %659 = vmatprep.subr.bf16.mxu0 0
    %660 = vmatpush1.bf16.msra.mxu0 0
    %661 = vmatprep.subr.bf16.mxu0 0
    %662 = vmatpush1.bf16.msra.mxu0 0
    %663 = vmatprep.subr.bf16.mxu0 0
    %664 = vmatpush1.bf16.msra.mxu0 0
    %665 = vmatprep.subr.bf16.mxu0 0
    %666 = vmatpush1.bf16.msra.mxu0 0
    %667 = vmatprep.subr.bf16.mxu0 0
    %668 = vmatpush1.bf16.msra.mxu0 0
    %669 = vmatprep.subr.bf16.mxu0 0
    %670 = vmatpush1.bf16.msra.mxu0 0
    %671 = vmatprep.subr.bf16.mxu0 0
    %672 = vmatpush1.bf16.msra.mxu0 0
    %673 = vmatprep.subr.bf16.mxu0 0
    %674 = vmatpush1.bf16.msra.mxu0 0
    %675 = vmatprep.mubr.bf16.mxu0 0
    %676 = vmatmul.mubr.bf16.gmra.mrb[0].mxu0 %v638
    %v677 = vpop.f32.mrb[0].mxu0
    %v678 = vadd.f32 0.0, %v677
    %v679 = vpop.f32.mrb[0].mxu0
    %v680 = vpop.f32.mrb[0].mxu0
    %v681 = vadd.f32 0.0, %v680
    %v682 = vpop.f32.mrb[0].mxu0
    %683 = vdwg.mxu0
    %v685 = vsel %vm196, %v413, 0
    %v688 = vsel %vm321, %v185, 0
    %690 = vmatprep.subr.bf16.mxu0 0
    %691 = vmatpush1.bf16.msra.mxu0 %v688
    %692 = vmatprep.subr.bf16.mxu0 0
    %693 = vmatpush1.bf16.msra.mxu0 0
    %694 = vmatprep.subr.bf16.mxu0 0
    %695 = vmatpush1.bf16.msra.mxu0 0
    %696 = vmatprep.subr.bf16.mxu0 0
    %697 = vmatpush1.bf16.msra.mxu0 0
    %698 = vmatprep.subr.bf16.mxu0 0
    %699 = vmatpush1.bf16.msra.mxu0 0
    %700 = vmatprep.subr.bf16.mxu0 0
    %701 = vmatpush1.bf16.msra.mxu0 0
    %702 = vmatprep.subr.bf16.mxu0 0
    %703 = vmatpush1.bf16.msra.mxu0 0
    %704 = vmatprep.subr.bf16.mxu0 0
    %705 = vmatpush1.bf16.msra.mxu0 0
    %706 = vmatprep.subr.bf16.mxu0 0
    %707 = vmatpush1.bf16.msra.mxu0 0
    %708 = vmatprep.subr.bf16.mxu0 0
    %709 = vmatpush1.bf16.msra.mxu0 0
    %710 = vmatprep.subr.bf16.mxu0 0
    %711 = vmatpush1.bf16.msra.mxu0 0
    %712 = vmatprep.subr.bf16.mxu0 0
    %713 = vmatpush1.bf16.msra.mxu0 0
    %714 = vmatprep.subr.bf16.mxu0 0
    %715 = vmatpush1.bf16.msra.mxu0 0
    %716 = vmatprep.subr.bf16.mxu0 0
    %717 = vmatpush1.bf16.msra.mxu0 0
    %718 = vmatprep.subr.bf16.mxu0 0
    %719 = vmatpush1.bf16.msra.mxu0 0
    %720 = vmatprep.subr.bf16.mxu0 0
    %721 = vmatpush1.bf16.msra.mxu0 0
    %722 = vmatprep.mubr.bf16.mxu0 0
    %723 = vmatmul.mubr.bf16.gmra.mrb[0].mxu0 %v685
    %v724 = vpop.f32.mrb[0].mxu0
    %v725 = vadd.f32 %v678, %v724
    %v726 = vpop.f32.mrb[0].mxu0
    %v727 = vpop.f32.mrb[0].mxu0
    %v728 = vadd.f32 %v681, %v727
    %v729 = vpop.f32.mrb[0].mxu0
    %730 = vdwg.mxu0
    %731 = vrot.lane.b32.xlu0 %v189, 112
    %v732 = vpop.permute.xlu0 %731
    %733 = vrot.lane.b32.xlu0 %v191, 80
    %v734 = vpop.permute.xlu0 %733
    %v736 = vsel %vm196, %v732, 0
    %v739 = vsel %vm196, %v734, 0
    %741 = vmatprep.subr.bf16.mxu0 0
    %742 = vmatpush1.bf16.xpose.msra.mxu0 %v739
    %743 = vmatprep.subr.bf16.mxu0 0
    %744 = vmatpush1.bf16.xpose.msra.mxu0 0
    %745 = vmatprep.subr.bf16.mxu0 0
    %746 = vmatpush1.bf16.xpose.msra.mxu0 0
    %747 = vmatprep.subr.bf16.mxu0 0
    %748 = vmatpush1.bf16.xpose.msra.mxu0 0
    %749 = vmatprep.subr.bf16.mxu0 0
    %750 = vmatpush1.bf16.xpose.msra.mxu0 0
    %751 = vmatprep.subr.bf16.mxu0 0
    %752 = vmatpush1.bf16.xpose.msra.mxu0 0
    %753 = vmatprep.subr.bf16.mxu0 0
    %754 = vmatpush1.bf16.xpose.msra.mxu0 0
    %755 = vmatprep.subr.bf16.mxu0 0
    %756 = vmatpush1.bf16.xpose.msra.mxu0 0
    %757 = vmatprep.subr.bf16.mxu0 0
    %758 = vmatpush1.bf16.xpose.msra.mxu0 0
    %759 = vmatprep.subr.bf16.mxu0 0
    %760 = vmatpush1.bf16.xpose.msra.mxu0 0
    %761 = vmatprep.subr.bf16.mxu0 0
    %762 = vmatpush1.bf16.xpose.msra.mxu0 0
    %763 = vmatprep.subr.bf16.mxu0 0
    %764 = vmatpush1.bf16.xpose.msra.mxu0 0
    %765 = vmatprep.subr.bf16.mxu0 0
    %766 = vmatpush1.bf16.xpose.msra.mxu0 0
    %767 = vmatprep.subr.bf16.mxu0 0
    %768 = vmatpush1.bf16.xpose.msra.mxu0 0
    %769 = vmatprep.subr.bf16.mxu0 0
    %770 = vmatpush1.bf16.xpose.msra.mxu0 0
    %771 = vmatprep.subr.bf16.mxu0 0
    %772 = vmatpush1.bf16.xpose.msra.mxu0 0
    %773 = vmatprep.mubr.bf16.mxu0 0
    %774 = vmatmul.mubr.bf16.gmra.mrb[0].mxu0 %v736
    %v775 = vpop.f32.mrb[0].mxu0
    %v776 = vadd.f32 %v67, %v775
    %v777 = vpop.f32.mrb[0].mxu0
    %v778 = vpop.f32.mrb[0].mxu0
    %v779 = vpop.f32.mrb[0].mxu0
    %780 = vdwg.mxu0
    %781 = vrot.lane.b32.xlu0 %v190, 112
    %v782 = vpop.permute.xlu0 %781
    %783 = vrot.lane.b32.xlu0 %v192, 80
    %v784 = vpop.permute.xlu0 %783
    %v786 = vsel %vm196, %v782, 0
    %v789 = vsel %vm196, %v784, 0
    %791 = vmatprep.subr.bf16.mxu0 0
    %792 = vmatpush1.bf16.xpose.msra.mxu0 %v789
    %793 = vmatprep.subr.bf16.mxu0 0
    %794 = vmatpush1.bf16.xpose.msra.mxu0 0
    %795 = vmatprep.subr.bf16.mxu0 0
    %796 = vmatpush1.bf16.xpose.msra.mxu0 0
    %797 = vmatprep.subr.bf16.mxu0 0
    %798 = vmatpush1.bf16.xpose.msra.mxu0 0
    %799 = vmatprep.subr.bf16.mxu0 0
    %800 = vmatpush1.bf16.xpose.msra.mxu0 0
    %801 = vmatprep.subr.bf16.mxu0 0
    %802 = vmatpush1.bf16.xpose.msra.mxu0 0
    %803 = vmatprep.subr.bf16.mxu0 0
    %804 = vmatpush1.bf16.xpose.msra.mxu0 0
    %805 = vmatprep.subr.bf16.mxu0 0
    %806 = vmatpush1.bf16.xpose.msra.mxu0 0
    %807 = vmatprep.subr.bf16.mxu0 0
    %808 = vmatpush1.bf16.xpose.msra.mxu0 0
    %809 = vmatprep.subr.bf16.mxu0 0
    %810 = vmatpush1.bf16.xpose.msra.mxu0 0
    %811 = vmatprep.subr.bf16.mxu0 0
    %812 = vmatpush1.bf16.xpose.msra.mxu0 0
    %813 = vmatprep.subr.bf16.mxu0 0
    %814 = vmatpush1.bf16.xpose.msra.mxu0 0
    %815 = vmatprep.subr.bf16.mxu0 0
    %816 = vmatpush1.bf16.xpose.msra.mxu0 0
    %817 = vmatprep.subr.bf16.mxu0 0
    %818 = vmatpush1.bf16.xpose.msra.mxu0 0
    %819 = vmatprep.subr.bf16.mxu0 0
    %820 = vmatpush1.bf16.xpose.msra.mxu0 0
    %821 = vmatprep.subr.bf16.mxu0 0
    %822 = vmatpush1.bf16.xpose.msra.mxu0 0
    %823 = vmatprep.mubr.bf16.mxu0 0
    %824 = vmatmul.mubr.bf16.gmra.mrb[0].mxu0 %v786
    %v825 = vpop.f32.mrb[0].mxu0
    %v826 = vadd.f32 %v68, %v825
    %v827 = vpop.f32.mrb[0].mxu0
    %v828 = vpop.f32.mrb[0].mxu0
    %v829 = vpop.f32.mrb[0].mxu0
    %830 = vdwg.mxu0
    %v831 = vsel %vm196, %v776, -inf
    %832 = vmax.xlane.f32.xlu0 %v831
    %v833 = vpop.xlane.xlu0 %832
    %v834 = vsel %vm196, %v826, -inf
    %835 = vmax.xlane.f32.xlu0 %v834
    %v836 = vpop.xlane.xlu0 %835
    %v837 = vsub.f32 %v776, %v833
    %v838 = vsub.f32 %v826, %v836
    %v839 = vmul.f32 %v837, 1.442695
    %v840 = vpow.pop %v839
    %v841 = vmul.f32 %v838, 1.442695
    %v842 = vpow.pop %v841
    %v843 = vsel %vm196, %v840, 0.0
    %844 = vadd.xlane.f32.xlu0 %v843
    %v845 = vpop.xlane.xlu0 %844
    %v846 = vsel %vm196, %v842, 0.0
    %847 = vadd.xlane.f32.xlu0 %v846
    %v848 = vpop.xlane.xlu0 %847
    %v849 = vrcp.pop %v845
    %v850 = vrcp.pop %v848
    %v851 = vmul.f32 %v840, %v849
    %v852 = vmul.f32 %v842, %v850
    %v853 = vpack.c.bf16 %v851, %v851
    %v854 = vpack.c.bf16 %v852, %v852
    %855 = vrot.lane.b32.xlu0 %v191, 48
    %v856 = vpop.permute.xlu0 %855
    %v858 = vsel %vm196, %v853, 0
    %v861 = vsel %vm321, %v856, 0
    %863 = vmatprep.subr.bf16.mxu0 0
    %864 = vmatpush1.bf16.msra.mxu0 %v861
    %865 = vmatprep.subr.bf16.mxu0 0
    %866 = vmatpush1.bf16.msra.mxu0 0
    %867 = vmatprep.subr.bf16.mxu0 0
    %868 = vmatpush1.bf16.msra.mxu0 0
    %869 = vmatprep.subr.bf16.mxu0 0
    %870 = vmatpush1.bf16.msra.mxu0 0
    %871 = vmatprep.subr.bf16.mxu0 0
    %872 = vmatpush1.bf16.msra.mxu0 0
    %873 = vmatprep.subr.bf16.mxu0 0
    %874 = vmatpush1.bf16.msra.mxu0 0
    %875 = vmatprep.subr.bf16.mxu0 0
    %876 = vmatpush1.bf16.msra.mxu0 0
    %877 = vmatprep.subr.bf16.mxu0 0
    %878 = vmatpush1.bf16.msra.mxu0 0
    %879 = vmatprep.subr.bf16.mxu0 0
    %880 = vmatpush1.bf16.msra.mxu0 0
    %881 = vmatprep.subr.bf16.mxu0 0
    %882 = vmatpush1.bf16.msra.mxu0 0
    %883 = vmatprep.subr.bf16.mxu0 0
    %884 = vmatpush1.bf16.msra.mxu0 0
    %885 = vmatprep.subr.bf16.mxu0 0
    %886 = vmatpush1.bf16.msra.mxu0 0
    %887 = vmatprep.subr.bf16.mxu0 0
    %888 = vmatpush1.bf16.msra.mxu0 0
    %889 = vmatprep.subr.bf16.mxu0 0
    %890 = vmatpush1.bf16.msra.mxu0 0
    %891 = vmatprep.subr.bf16.mxu0 0
    %892 = vmatpush1.bf16.msra.mxu0 0
    %893 = vmatprep.subr.bf16.mxu0 0
    %894 = vmatpush1.bf16.msra.mxu0 0
    %895 = vmatprep.mubr.bf16.mxu0 0
    %896 = vmatmul.mubr.bf16.gmra.mrb[0].mxu0 %v858
    %v897 = vpop.f32.mrb[0].mxu0
    %v898 = vadd.f32 0.0, %v897
    %v899 = vpop.f32.mrb[0].mxu0
    %v900 = vpop.f32.mrb[0].mxu0
    %v901 = vpop.f32.mrb[0].mxu0
    %902 = vdwg.mxu0
    %903 = vrot.lane.b32.xlu0 %v192, 48
    %v904 = vpop.permute.xlu0 %903
    %v906 = vsel %vm196, %v854, 0
    %v909 = vsel %vm321, %v904, 0
    %911 = vmatprep.subr.bf16.mxu0 0
    %912 = vmatpush1.bf16.msra.mxu0 %v909
    %913 = vmatprep.subr.bf16.mxu0 0
    %914 = vmatpush1.bf16.msra.mxu0 0
    %915 = vmatprep.subr.bf16.mxu0 0
    %916 = vmatpush1.bf16.msra.mxu0 0
    %917 = vmatprep.subr.bf16.mxu0 0
    %918 = vmatpush1.bf16.msra.mxu0 0
    %919 = vmatprep.subr.bf16.mxu0 0
    %920 = vmatpush1.bf16.msra.mxu0 0
    %921 = vmatprep.subr.bf16.mxu0 0
    %922 = vmatpush1.bf16.msra.mxu0 0
    %923 = vmatprep.subr.bf16.mxu0 0
    %924 = vmatpush1.bf16.msra.mxu0 0
    %925 = vmatprep.subr.bf16.mxu0 0
    %926 = vmatpush1.bf16.msra.mxu0 0
    %927 = vmatprep.subr.bf16.mxu0 0
    %928 = vmatpush1.bf16.msra.mxu0 0
    %929 = vmatprep.subr.bf16.mxu0 0
    %930 = vmatpush1.bf16.msra.mxu0 0
    %931 = vmatprep.subr.bf16.mxu0 0
    %932 = vmatpush1.bf16.msra.mxu0 0
    %933 = vmatprep.subr.bf16.mxu0 0
    %934 = vmatpush1.bf16.msra.mxu0 0
    %935 = vmatprep.subr.bf16.mxu0 0
    %936 = vmatpush1.bf16.msra.mxu0 0
    %937 = vmatprep.subr.bf16.mxu0 0
    %938 = vmatpush1.bf16.msra.mxu0 0
    %939 = vmatprep.subr.bf16.mxu0 0
    %940 = vmatpush1.bf16.msra.mxu0 0
    %941 = vmatprep.subr.bf16.mxu0 0
    %942 = vmatpush1.bf16.msra.mxu0 0
    %943 = vmatprep.mubr.bf16.mxu0 0
    %944 = vmatmul.mubr.bf16.gmra.mrb[0].mxu0 %v906
    %v945 = vpop.f32.mrb[0].mxu0
    %v946 = vadd.f32 0.0, %v945
    %v947 = vpop.f32.mrb[0].mxu0
    %v948 = vpop.f32.mrb[0].mxu0
    %v949 = vpop.f32.mrb[0].mxu0
    %950 = vdwg.mxu0
    %v951 = vpack.c.bf16 %v946, %v898
    %v953 = vsel %vm196, %v951, 0
    %v956 = vsel %vm321, %v187, 0
    %958 = vmatprep.subr.bf16.mxu0 0
    %959 = vmatpush1.bf16.msra.mxu0 %v956
    %960 = vmatprep.subr.bf16.mxu0 0
    %961 = vmatpush1.bf16.msra.mxu0 0
    %962 = vmatprep.subr.bf16.mxu0 0
    %963 = vmatpush1.bf16.msra.mxu0 0
    %964 = vmatprep.subr.bf16.mxu0 0
    %965 = vmatpush1.bf16.msra.mxu0 0
    %966 = vmatprep.subr.bf16.mxu0 0
    %967 = vmatpush1.bf16.msra.mxu0 0
    %968 = vmatprep.subr.bf16.mxu0 0
    %969 = vmatpush1.bf16.msra.mxu0 0
    %970 = vmatprep.subr.bf16.mxu0 0
    %971 = vmatpush1.bf16.msra.mxu0 0
    %972 = vmatprep.subr.bf16.mxu0 0
    %973 = vmatpush1.bf16.msra.mxu0 0
    %974 = vmatprep.subr.bf16.mxu0 0
    %975 = vmatpush1.bf16.msra.mxu0 0
    %976 = vmatprep.subr.bf16.mxu0 0
    %977 = vmatpush1.bf16.msra.mxu0 0
    %978 = vmatprep.subr.bf16.mxu0 0
    %979 = vmatpush1.bf16.msra.mxu0 0
    %980 = vmatprep.subr.bf16.mxu0 0
    %981 = vmatpush1.bf16.msra.mxu0 0
    %982 = vmatprep.subr.bf16.mxu0 0
    %983 = vmatpush1.bf16.msra.mxu0 0
    %984 = vmatprep.subr.bf16.mxu0 0
    %985 = vmatpush1.bf16.msra.mxu0 0
    %986 = vmatprep.subr.bf16.mxu0 0
    %987 = vmatpush1.bf16.msra.mxu0 0
    %988 = vmatprep.subr.bf16.mxu0 0
    %989 = vmatpush1.bf16.msra.mxu0 0
    %990 = vmatprep.mubr.bf16.mxu0 0
    %991 = vmatmul.mubr.bf16.gmra.mrb[0].mxu0 %v953
    %v992 = vpop.f32.mrb[0].mxu0
    %v993 = vadd.f32 0.0, %v992
    %v994 = vpop.f32.mrb[0].mxu0
    %v995 = vpop.f32.mrb[0].mxu0
    %v996 = vadd.f32 0.0, %v995
    %v997 = vpop.f32.mrb[0].mxu0
    %998 = vdwg.mxu0
    %v999 = vadd.f32 %v725, %v993
    %v1000 = vadd.f32 %v728, %v996
    %1001 = vrot.lane.b32.xlu0 %v189, 104
    %v1002 = vpop.permute.xlu0 %1001
    %1003 = vrot.lane.b32.xlu0 %v191, 72
    %v1004 = vpop.permute.xlu0 %1003
    %v1006 = vsel %vm196, %v1002, 0
    %v1009 = vsel %vm196, %v1004, 0
    %1011 = vmatprep.subr.bf16.mxu0 0
    %1012 = vmatpush1.bf16.xpose.msra.mxu0 %v1009
    %1013 = vmatprep.subr.bf16.mxu0 0
    %1014 = vmatpush1.bf16.xpose.msra.mxu0 0
    %1015 = vmatprep.subr.bf16.mxu0 0
    %1016 = vmatpush1.bf16.xpose.msra.mxu0 0
    %1017 = vmatprep.subr.bf16.mxu0 0
    %1018 = vmatpush1.bf16.xpose.msra.mxu0 0
    %1019 = vmatprep.subr.bf16.mxu0 0
    %1020 = vmatpush1.bf16.xpose.msra.mxu0 0
    %1021 = vmatprep.subr.bf16.mxu0 0
    %1022 = vmatpush1.bf16.xpose.msra.mxu0 0
    %1023 = vmatprep.subr.bf16.mxu0 0
    %1024 = vmatpush1.bf16.xpose.msra.mxu0 0
    %1025 = vmatprep.subr.bf16.mxu0 0
    %1026 = vmatpush1.bf16.xpose.msra.mxu0 0
    %1027 = vmatprep.subr.bf16.mxu0 0
    %1028 = vmatpush1.bf16.xpose.msra.mxu0 0
    %1029 = vmatprep.subr.bf16.mxu0 0
    %1030 = vmatpush1.bf16.xpose.msra.mxu0 0
    %1031 = vmatprep.subr.bf16.mxu0 0
    %1032 = vmatpush1.bf16.xpose.msra.mxu0 0
    %1033 = vmatprep.subr.bf16.mxu0 0
    %1034 = vmatpush1.bf16.xpose.msra.mxu0 0
    %1035 = vmatprep.subr.bf16.mxu0 0
    %1036 = vmatpush1.bf16.xpose.msra.mxu0 0
    %1037 = vmatprep.subr.bf16.mxu0 0
    %1038 = vmatpush1.bf16.xpose.msra.mxu0 0
    %1039 = vmatprep.subr.bf16.mxu0 0
    %1040 = vmatpush1.bf16.xpose.msra.mxu0 0
    %1041 = vmatprep.subr.bf16.mxu0 0
    %1042 = vmatpush1.bf16.xpose.msra.mxu0 0
    %1043 = vmatprep.mubr.bf16.mxu0 0
    %1044 = vmatmul.mubr.bf16.gmra.mrb[0].mxu0 %v1006
    %v1045 = vpop.f32.mrb[0].mxu0
    %v1046 = vadd.f32 %v67, %v1045
    %v1047 = vpop.f32.mrb[0].mxu0
    %v1048 = vpop.f32.mrb[0].mxu0
    %v1049 = vpop.f32.mrb[0].mxu0
    %1050 = vdwg.mxu0
    %1051 = vrot.lane.b32.xlu0 %v190, 104
    %v1052 = vpop.permute.xlu0 %1051
    %1053 = vrot.lane.b32.xlu0 %v192, 72
    %v1054 = vpop.permute.xlu0 %1053
    %v1056 = vsel %vm196, %v1052, 0
    %v1059 = vsel %vm196, %v1054, 0
    %1061 = vmatprep.subr.bf16.mxu0 0
    %1062 = vmatpush1.bf16.xpose.msra.mxu0 %v1059
    %1063 = vmatprep.subr.bf16.mxu0 0
    %1064 = vmatpush1.bf16.xpose.msra.mxu0 0
    %1065 = vmatprep.subr.bf16.mxu0 0
    %1066 = vmatpush1.bf16.xpose.msra.mxu0 0
    %1067 = vmatprep.subr.bf16.mxu0 0
    %1068 = vmatpush1.bf16.xpose.msra.mxu0 0
    %1069 = vmatprep.subr.bf16.mxu0 0
    %1070 = vmatpush1.bf16.xpose.msra.mxu0 0
    %1071 = vmatprep.subr.bf16.mxu0 0
    %1072 = vmatpush1.bf16.xpose.msra.mxu0 0
    %1073 = vmatprep.subr.bf16.mxu0 0
    %1074 = vmatpush1.bf16.xpose.msra.mxu0 0
    %1075 = vmatprep.subr.bf16.mxu0 0
    %1076 = vmatpush1.bf16.xpose.msra.mxu0 0
    %1077 = vmatprep.subr.bf16.mxu0 0
    %1078 = vmatpush1.bf16.xpose.msra.mxu0 0
    %1079 = vmatprep.subr.bf16.mxu0 0
    %1080 = vmatpush1.bf16.xpose.msra.mxu0 0
    %1081 = vmatprep.subr.bf16.mxu0 0
    %1082 = vmatpush1.bf16.xpose.msra.mxu0 0
    %1083 = vmatprep.subr.bf16.mxu0 0
    %1084 = vmatpush1.bf16.xpose.msra.mxu0 0
    %1085 = vmatprep.subr.bf16.mxu0 0
    %1086 = vmatpush1.bf16.xpose.msra.mxu0 0
    %1087 = vmatprep.subr.bf16.mxu0 0
    %1088 = vmatpush1.bf16.xpose.msra.mxu0 0
    %1089 = vmatprep.subr.bf16.mxu0 0
    %1090 = vmatpush1.bf16.xpose.msra.mxu0 0
    %1091 = vmatprep.subr.bf16.mxu0 0
    %1092 = vmatpush1.bf16.xpose.msra.mxu0 0
    %1093 = vmatprep.mubr.bf16.mxu0 0
    %1094 = vmatmul.mubr.bf16.gmra.mrb[0].mxu0 %v1056
    %v1095 = vpop.f32.mrb[0].mxu0
    %v1096 = vadd.f32 %v68, %v1095
    %v1097 = vpop.f32.mrb[0].mxu0
    %v1098 = vpop.f32.mrb[0].mxu0
    %v1099 = vpop.f32.mrb[0].mxu0
    %1100 = vdwg.mxu0
    %v1101 = vsel %vm196, %v1046, -inf
    %1102 = vmax.xlane.f32.xlu0 %v1101
    %v1103 = vpop.xlane.xlu0 %1102
    %v1104 = vsel %vm196, %v1096, -inf
    %1105 = vmax.xlane.f32.xlu0 %v1104
    %v1106 = vpop.xlane.xlu0 %1105
    %v1107 = vsub.f32 %v1046, %v1103
    %v1108 = vsub.f32 %v1096, %v1106
    %v1109 = vmul.f32 %v1107, 1.442695
    %v1110 = vpow.pop %v1109
    %v1111 = vmul.f32 %v1108, 1.442695
    %v1112 = vpow.pop %v1111
    %v1113 = vsel %vm196, %v1110, 0.0
    %1114 = vadd.xlane.f32.xlu0 %v1113
    %v1115 = vpop.xlane.xlu0 %1114
    %v1116 = vsel %vm196, %v1112, 0.0
    %1117 = vadd.xlane.f32.xlu0 %v1116
    %v1118 = vpop.xlane.xlu0 %1117
    %v1119 = vrcp.pop %v1115
    %v1120 = vrcp.pop %v1118
    %v1121 = vmul.f32 %v1110, %v1119
    %v1122 = vmul.f32 %v1112, %v1120
    %v1123 = vpack.c.bf16 %v1121, %v1121
    %v1124 = vpack.c.bf16 %v1122, %v1122
    %1125 = vrot.lane.b32.xlu0 %v191, 40
    %v1126 = vpop.permute.xlu0 %1125
    %v1128 = vsel %vm196, %v1123, 0
    %v1131 = vsel %vm321, %v1126, 0
    %1133 = vmatprep.subr.bf16.mxu0 0
    %1134 = vmatpush1.bf16.msra.mxu0 %v1131
    %1135 = vmatprep.subr.bf16.mxu0 0
    %1136 = vmatpush1.bf16.msra.mxu0 0
    %1137 = vmatprep.subr.bf16.mxu0 0
    %1138 = vmatpush1.bf16.msra.mxu0 0
    %1139 = vmatprep.subr.bf16.mxu0 0
    %1140 = vmatpush1.bf16.msra.mxu0 0
    %1141 = vmatprep.subr.bf16.mxu0 0
    %1142 = vmatpush1.bf16.msra.mxu0 0
    %1143 = vmatprep.subr.bf16.mxu0 0
    %1144 = vmatpush1.bf16.msra.mxu0 0
    %1145 = vmatprep.subr.bf16.mxu0 0
    %1146 = vmatpush1.bf16.msra.mxu0 0
    %1147 = vmatprep.subr.bf16.mxu0 0
    %1148 = vmatpush1.bf16.msra.mxu0 0
    %1149 = vmatprep.subr.bf16.mxu0 0
    %1150 = vmatpush1.bf16.msra.mxu0 0
    %1151 = vmatprep.subr.bf16.mxu0 0
    %1152 = vmatpush1.bf16.msra.mxu0 0
    %1153 = vmatprep.subr.bf16.mxu0 0
    %1154 = vmatpush1.bf16.msra.mxu0 0
    %1155 = vmatprep.subr.bf16.mxu0 0
    %1156 = vmatpush1.bf16.msra.mxu0 0
    %1157 = vmatprep.subr.bf16.mxu0 0
    %1158 = vmatpush1.bf16.msra.mxu0 0
    %1159 = vmatprep.subr.bf16.mxu0 0
    %1160 = vmatpush1.bf16.msra.mxu0 0
    %1161 = vmatprep.subr.bf16.mxu0 0
    %1162 = vmatpush1.bf16.msra.mxu0 0
    %1163 = vmatprep.subr.bf16.mxu0 0
    %1164 = vmatpush1.bf16.msra.mxu0 0
    %1165 = vmatprep.mubr.bf16.mxu0 0
    %1166 = vmatmul.mubr.bf16.gmra.mrb[0].mxu0 %v1128
    %v1167 = vpop.f32.mrb[0].mxu0
    %v1168 = vadd.f32 0.0, %v1167
    %v1169 = vpop.f32.mrb[0].mxu0
    %v1170 = vpop.f32.mrb[0].mxu0
    %v1171 = vpop.f32.mrb[0].mxu0
    %1172 = vdwg.mxu0
    %1173 = vrot.lane.b32.xlu0 %v192, 40
    %v1174 = vpop.permute.xlu0 %1173
    %v1176 = vsel %vm196, %v1124, 0
    %v1179 = vsel %vm321, %v1174, 0
    %1181 = vmatprep.subr.bf16.mxu0 0
    %1182 = vmatpush1.bf16.msra.mxu0 %v1179
    %1183 = vmatprep.subr.bf16.mxu0 0
    %1184 = vmatpush1.bf16.msra.mxu0 0
    %1185 = vmatprep.subr.bf16.mxu0 0
    %1186 = vmatpush1.bf16.msra.mxu0 0
    %1187 = vmatprep.subr.bf16.mxu0 0
    %1188 = vmatpush1.bf16.msra.mxu0 0
    %1189 = vmatprep.subr.bf16.mxu0 0
    %1190 = vmatpush1.bf16.msra.mxu0 0
    %1191 = vmatprep.subr.bf16.mxu0 0
    %1192 = vmatpush1.bf16.msra.mxu0 0
    %1193 = vmatprep.subr.bf16.mxu0 0
    %1194 = vmatpush1.bf16.msra.mxu0 0
    %1195 = vmatprep.subr.bf16.mxu0 0
    %1196 = vmatpush1.bf16.msra.mxu0 0
    %1197 = vmatprep.subr.bf16.mxu0 0
    %1198 = vmatpush1.bf16.msra.mxu0 0
    %1199 = vmatprep.subr.bf16.mxu0 0
    %1200 = vmatpush1.bf16.msra.mxu0 0
    %1201 = vmatprep.subr.bf16.mxu0 0
    %1202 = vmatpush1.bf16.msra.mxu0 0
    %1203 = vmatprep.subr.bf16.mxu0 0
    %1204 = vmatpush1.bf16.msra.mxu0 0
    %1205 = vmatprep.subr.bf16.mxu0 0
    %1206 = vmatpush1.bf16.msra.mxu0 0
    %1207 = vmatprep.subr.bf16.mxu0 0
    %1208 = vmatpush1.bf16.msra.mxu0 0
    %1209 = vmatprep.subr.bf16.mxu0 0
    %1210 = vmatpush1.bf16.msra.mxu0 0
    %1211 = vmatprep.subr.bf16.mxu0 0
    %1212 = vmatpush1.bf16.msra.mxu0 0
    %1213 = vmatprep.mubr.bf16.mxu0 0
    %1214 = vmatmul.mubr.bf16.gmra.mrb[0].mxu0 %v1176
    %v1215 = vpop.f32.mrb[0].mxu0
    %v1216 = vadd.f32 0.0, %v1215
    %v1217 = vpop.f32.mrb[0].mxu0
    %v1218 = vpop.f32.mrb[0].mxu0
    %v1219 = vpop.f32.mrb[0].mxu0
    %1220 = vdwg.mxu0
    %v1221 = vpack.c.bf16 %v1216, %v1168
    %v1223 = vsel %vm196, %v1221, 0
    %v1226 = vsel %vm321, %v188, 0
    %1228 = vmatprep.subr.bf16.mxu0 0
    %1229 = vmatpush1.bf16.msra.mxu0 %v1226
    %1230 = vmatprep.subr.bf16.mxu0 0
    %1231 = vmatpush1.bf16.msra.mxu0 0
    %1232 = vmatprep.subr.bf16.mxu0 0
    %1233 = vmatpush1.bf16.msra.mxu0 0
    %1234 = vmatprep.subr.bf16.mxu0 0
    %1235 = vmatpush1.bf16.msra.mxu0 0
    %1236 = vmatprep.subr.bf16.mxu0 0
    %1237 = vmatpush1.bf16.msra.mxu0 0
    %1238 = vmatprep.subr.bf16.mxu0 0
    %1239 = vmatpush1.bf16.msra.mxu0 0
    %1240 = vmatprep.subr.bf16.mxu0 0
    %1241 = vmatpush1.bf16.msra.mxu0 0
    %1242 = vmatprep.subr.bf16.mxu0 0
    %1243 = vmatpush1.bf16.msra.mxu0 0
    %1244 = vmatprep.subr.bf16.mxu0 0
    %1245 = vmatpush1.bf16.msra.mxu0 0
    %1246 = vmatprep.subr.bf16.mxu0 0
    %1247 = vmatpush1.bf16.msra.mxu0 0
    %1248 = vmatprep.subr.bf16.mxu0 0
    %1249 = vmatpush1.bf16.msra.mxu0 0
    %1250 = vmatprep.subr.bf16.mxu0 0
    %1251 = vmatpush1.bf16.msra.mxu0 0
    %1252 = vmatprep.subr.bf16.mxu0 0
    %1253 = vmatpush1.bf16.msra.mxu0 0
    %1254 = vmatprep.subr.bf16.mxu0 0
    %1255 = vmatpush1.bf16.msra.mxu0 0
    %1256 = vmatprep.subr.bf16.mxu0 0
    %1257 = vmatpush1.bf16.msra.mxu0 0
    %1258 = vmatprep.subr.bf16.mxu0 0
    %1259 = vmatpush1.bf16.msra.mxu0 0
    %1260 = vmatprep.mubr.bf16.mxu0 0
    %1261 = vmatmul.mubr.bf16.gmra.mrb[0].mxu0 %v1223
    %v1262 = vpop.f32.mrb[0].mxu0
    %v1263 = vadd.f32 0.0, %v1262
    %v1264 = vpop.f32.mrb[0].mxu0
    %v1265 = vpop.f32.mrb[0].mxu0
    %v1266 = vadd.f32 0.0, %v1265
    %v1267 = vpop.f32.mrb[0].mxu0
    %1268 = vdwg.mxu0
    %v1269 = vadd.f32 %v999, %v1263
    %v1270 = vadd.f32 %v1000, %v1266
    %v1271 = vadd.f32 %v65, %v1269
    %v1272 = vadd.f32 %v66, %v1270
    %v1273 = vld [vmem:[%s8] sm:$0x1]
    %v1275 = vlaneseq
    %v1276 = vshrl.u32 %v1275, 7
    %v1277 = vsub.s32 0, %v1276
    %v1278 = vrot.slane %v1273, %v1277
    %v1280 = vadd.f32 %v1271, %v1278
    %v1281 = vadd.f32 %v1272, %v1278
    %v1282 = vld [vmem:[%s9] sm:$0x1]
    %v1283 = vld [vmem:[%s10] sm:$0x1]
    %v1284 = vsel %vm71, %v1280, 0.0
    %1285 = vadd.xlane.f32.xlu0 %v1284
    %v1286 = vpop.xlane.xlu0 %1285
    %v1287 = vsel %vm71, %v1281, 0.0
    %1288 = vadd.xlane.f32.xlu0 %v1287
    %v1289 = vpop.xlane.xlu0 %1288
    %v1290 = vmul.f32 %v1286, %v78
    %v1291 = vmul.f32 %v1289, %v78
    %v1292 = vsub.f32 %v1280, %v1290
    %v1293 = vsub.f32 %v1281, %v1291
    %v1294 = vmul.f32 %v1292, %v1292
    %v1295 = vmul.f32 %v1293, %v1293
    %v1296 = vsel %vm71, %v1294, 0.0
    %1297 = vadd.xlane.f32.xlu0 %v1296
    %v1298 = vpop.xlane.xlu0 %1297
    %v1299 = vsel %vm71, %v1295, 0.0
    %1300 = vadd.xlane.f32.xlu0 %v1299
    %v1301 = vpop.xlane.xlu0 %1300
    %v1302 = vmul.f32 %v1298, %v78
    %v1303 = vmul.f32 %v1301, %v78
    %v1304 = vadd.f32 %v1302, 1e-05
    %v1305 = vadd.f32 %v1303, 1e-05
    %v1306 = vrsqrt.pop %v1304
    %v1307 = vrsqrt.pop %v1305
    %v1308 = vmul.f32 %v1292, %v1306
    %v1309 = vmul.f32 %v1293, %v1307
    %v1311 = vlaneseq
    %v1312 = vshrl.u32 %v1311, 7
    %v1313 = vsub.s32 0, %v1312
    %v1314 = vrot.slane %v1282, %v1313
    %v1316 = vmul.f32 %v1308, %v1314
    %v1317 = vmul.f32 %v1309, %v1314
    %v1319 = vlaneseq
    %v1320 = vshrl.u32 %v1319, 7
    %v1321 = vsub.s32 0, %v1320
    %v1322 = vrot.slane %v1283, %v1321
    %v1324 = vadd.f32 %v1316, %v1322
    %v1325 = vadd.f32 %v1317, %v1322
    %v1326 = vld [vmem:[%s11] sm:$0xf]
    %v1327 = vld [vmem:[%s11 + $0x4] sm:$0xf]
    %v1328 = vld [vmem:[%s11 + $0x8] sm:$0xf]
    %v1329 = vld [vmem:[%s11 + $0xc] sm:$0xf]
    %v1330 = vpack.c.bf16 %v1325, %v1324
    %v1331 = vld [vmem:[%s12] sm:$0x1]
    %v1333 = vlaneseq
    %v1334 = vshrl.u32 %v1333, 7
    %v1335 = vsub.s32 0, %v1334
    %v1336 = vrot.slane %v1331, %v1335
    %v1342 = vunpack.c.l.b16 %v1326
    %v1343 = vunpack.c.l.b16 %v1327
    %v1344 = vunpack.c.l.b16 %v1328
    %v1345 = vunpack.c.l.b16 %v1329
    %v1346 = vpack.c.b16 %v1343, %v1342
    %v1347 = vpack.c.b16 %v1345, %v1344
    %v1351 = vsel %vm71, %v1330, 0
    %1353 = vmatprep.subr.bf16.mxu0 0
    %1354 = vmatpush1.bf16.msra.mxu0 %v1346
    %1355 = vmatprep.subr.bf16.mxu0 0
    %1356 = vmatpush1.bf16.msra.mxu0 %v1347
    %1357 = vmatprep.subr.bf16.mxu0 0
    %1358 = vmatpush1.bf16.msra.mxu0 0
    %1359 = vmatprep.subr.bf16.mxu0 0
    %1360 = vmatpush1.bf16.msra.mxu0 0
    %1361 = vmatprep.subr.bf16.mxu0 0
    %1362 = vmatpush1.bf16.msra.mxu0 0
    %1363 = vmatprep.subr.bf16.mxu0 0
    %1364 = vmatpush1.bf16.msra.mxu0 0
    %1365 = vmatprep.subr.bf16.mxu0 0
    %1366 = vmatpush1.bf16.msra.mxu0 0
    %1367 = vmatprep.subr.bf16.mxu0 0
    %1368 = vmatpush1.bf16.msra.mxu0 0
    %1369 = vmatprep.subr.bf16.mxu0 0
    %1370 = vmatpush1.bf16.msra.mxu0 0
    %1371 = vmatprep.subr.bf16.mxu0 0
    %1372 = vmatpush1.bf16.msra.mxu0 0
    %1373 = vmatprep.subr.bf16.mxu0 0
    %1374 = vmatpush1.bf16.msra.mxu0 0
    %1375 = vmatprep.subr.bf16.mxu0 0
    %1376 = vmatpush1.bf16.msra.mxu0 0
    %1377 = vmatprep.subr.bf16.mxu0 0
    %1378 = vmatpush1.bf16.msra.mxu0 0
    %1379 = vmatprep.subr.bf16.mxu0 0
    %1380 = vmatpush1.bf16.msra.mxu0 0
    %1381 = vmatprep.subr.bf16.mxu0 0
    %1382 = vmatpush1.bf16.msra.mxu0 0
    %1383 = vmatprep.subr.bf16.mxu0 0
    %1384 = vmatpush1.bf16.msra.mxu0 0
    %1385 = vmatprep.mubr.bf16.mxu0 0
    %1386 = vmatmul.mubr.bf16.gmra.mrb[0].mxu0 %v1351
    %v1387 = vpop.f32.mrb[0].mxu0
    %v1388 = vadd.f32 %v1336, %v1387
    %v1389 = vpop.f32.mrb[0].mxu0
    %v1390 = vpop.f32.mrb[0].mxu0
    %v1391 = vadd.f32 %v1336, %v1390
    %v1392 = vpop.f32.mrb[0].mxu0
    %1393 = vdwg.mxu0
    %v1394 = vmul.f32 %v1388, 1.702
    %v1395 = vmul.f32 %v1391, 1.702
    %v1396 = vxor.u32 %v1394, 2147483648
    %v1397 = vxor.u32 %v1395, 2147483648
    %v1398 = vmul.f32 %v1396, 1.442695
    %v1399 = vpow.pop %v1398
    %v1400 = vmul.f32 %v1397, 1.442695
    %v1401 = vpow.pop %v1400
    %v1402 = vadd.f32 %v1399, 1.0
    %v1403 = vadd.f32 %v1401, 1.0
    %v1404 = vrcp.pop %v1402
    %v1405 = vmul.f32 1.0, %v1404
    %v1406 = vrcp.pop %v1403
    %v1407 = vmul.f32 1.0, %v1406
    %v1408 = vmul.f32 %v1388, %v1405
    %v1409 = vmul.f32 %v1391, %v1407
    %v1410 = vld [vmem:[%s13] sm:$0xf]
    %v1411 = vld [vmem:[%s13 + $0x4] sm:$0xf]
    %v1412 = vld [vmem:[%s13 + $0x8] sm:$0xf]
    %v1413 = vld [vmem:[%s13 + $0xc] sm:$0xf]
    %v1414 = vld [vmem:[%s13 + $0x10] sm:$0xf]
    %v1415 = vld [vmem:[%s13 + $0x14] sm:$0xf]
    %v1416 = vld [vmem:[%s13 + $0x18] sm:$0xf]
    %v1417 = vld [vmem:[%s13 + $0x1c] sm:$0xf]
    %v1418 = vld [vmem:[%s13 + $0x20] sm:$0xf]
    %v1419 = vld [vmem:[%s13 + $0x24] sm:$0xf]
    %v1420 = vld [vmem:[%s13 + $0x28] sm:$0xf]
    %v1421 = vld [vmem:[%s13 + $0x2c] sm:$0xf]
    %v1422 = vld [vmem:[%s13 + $0x30] sm:$0xf]
    %v1423 = vld [vmem:[%s13 + $0x34] sm:$0xf]
    %v1424 = vld [vmem:[%s13 + $0x38] sm:$0xf]
    %v1425 = vld [vmem:[%s13 + $0x3c] sm:$0xf]
    %v1426 = vpack.c.bf16 %v1409, %v1408
    %v1443 = vunpack.c.l.b16 %v1410
    %v1444 = vunpack.c.l.b16 %v1411
    %v1445 = vunpack.c.l.b16 %v1412
    %v1446 = vunpack.c.l.b16 %v1413
    %v1447 = vunpack.c.l.b16 %v1414
    %v1448 = vunpack.c.l.b16 %v1415
    %v1449 = vunpack.c.l.b16 %v1416
    %v1450 = vunpack.c.l.b16 %v1417
    %v1451 = vunpack.c.l.b16 %v1418
    %v1452 = vunpack.c.l.b16 %v1419
    %v1453 = vunpack.c.l.b16 %v1420
    %v1454 = vunpack.c.l.b16 %v1421
    %v1455 = vunpack.c.l.b16 %v1422
    %v1456 = vunpack.c.l.b16 %v1423
    %v1457 = vunpack.c.l.b16 %v1424
    %v1458 = vunpack.c.l.b16 %v1425
    %v1459 = vpack.c.b16 %v1444, %v1443
    %v1460 = vpack.c.b16 %v1446, %v1445
    %v1461 = vpack.c.b16 %v1448, %v1447
    %v1462 = vpack.c.b16 %v1450, %v1449
    %v1463 = vpack.c.b16 %v1452, %v1451
    %v1464 = vpack.c.b16 %v1454, %v1453
    %v1465 = vpack.c.b16 %v1456, %v1455
    %v1466 = vpack.c.b16 %v1458, %v1457
    %1475 = vmatprep.subr.bf16.mxu0 0
    %1476 = vmatpush1.bf16.msra.mxu0 %v1459
    %1477 = vmatprep.subr.bf16.mxu0 0
    %1478 = vmatpush1.bf16.msra.mxu0 %v1460
    %1479 = vmatprep.subr.bf16.mxu0 0
    %1480 = vmatpush1.bf16.msra.mxu0 %v1461
    %1481 = vmatprep.subr.bf16.mxu0 0
    %1482 = vmatpush1.bf16.msra.mxu0 %v1462
    %1483 = vmatprep.subr.bf16.mxu0 0
    %1484 = vmatpush1.bf16.msra.mxu0 %v1463
    %1485 = vmatprep.subr.bf16.mxu0 0
    %1486 = vmatpush1.bf16.msra.mxu0 %v1464
    %1487 = vmatprep.subr.bf16.mxu0 0
    %1488 = vmatpush1.bf16.msra.mxu0 %v1465
    %1489 = vmatprep.subr.bf16.mxu0 0
    %1490 = vmatpush1.bf16.msra.mxu0 %v1466
    %1491 = vmatprep.subr.bf16.mxu0 0
    %1492 = vmatpush1.bf16.msra.mxu0 0
    %1493 = vmatprep.subr.bf16.mxu0 0
    %1494 = vmatpush1.bf16.msra.mxu0 0
    %1495 = vmatprep.subr.bf16.mxu0 0
    %1496 = vmatpush1.bf16.msra.mxu0 0
    %1497 = vmatprep.subr.bf16.mxu0 0
    %1498 = vmatpush1.bf16.msra.mxu0 0
    %1499 = vmatprep.subr.bf16.mxu0 0
    %1500 = vmatpush1.bf16.msra.mxu0 0
    %1501 = vmatprep.subr.bf16.mxu0 0
    %1502 = vmatpush1.bf16.msra.mxu0 0
    %1503 = vmatprep.subr.bf16.mxu0 0
    %1504 = vmatpush1.bf16.msra.mxu0 0
    %1505 = vmatprep.subr.bf16.mxu0 0
    %1506 = vmatpush1.bf16.msra.mxu0 0
    %1507 = vmatprep.mubr.bf16.mxu0 0
    %1508 = vmatmul.mubr.bf16.gmra.mrb[0].mxu0 %v1426
    %v1509 = vpop.f32.mrb[0].mxu0
    %v1510 = vadd.f32 0.0, %v1509
    %v1511 = vpop.f32.mrb[0].mxu0
    %v1512 = vpop.f32.mrb[0].mxu0
    %v1513 = vadd.f32 0.0, %v1512
    %v1514 = vpop.f32.mrb[0].mxu0
    %1515 = vdwg.mxu0
    %v1516 = vadd.f32 %v1280, %v1510
    %v1517 = vadd.f32 %v1281, %v1513
    %v1518 = vld [vmem:[%s14] sm:$0x1]
    %v1520 = vlaneseq
    %v1521 = vshrl.u32 %v1520, 7
    %v1522 = vsub.s32 0, %v1521
    %v1523 = vrot.slane %v1518, %v1522
    %v1525 = vadd.f32 %v1516, %v1523
    %v1526 = vadd.f32 %v1517, %v1523
    %s1527 = scalar_lea.vmem %s3, 1
    %v1528 = vld [vmem:[%s1527] sm:$0x1]
    %s1529 = scalar_lea.vmem %s4, 1
    %v1530 = vld [vmem:[%s1529] sm:$0x1]
    %v1531 = vsel %vm71, %v1525, 0.0
    %1532 = vadd.xlane.f32.xlu0 %v1531
    %v1533 = vpop.xlane.xlu0 %1532
    %v1534 = vsel %vm71, %v1526, 0.0
    %1535 = vadd.xlane.f32.xlu0 %v1534
    %v1536 = vpop.xlane.xlu0 %1535
    %v1537 = vmul.f32 %v1533, %v78
    %v1538 = vmul.f32 %v1536, %v78
    %v1539 = vsub.f32 %v1525, %v1537
    %v1540 = vsub.f32 %v1526, %v1538
    %v1541 = vmul.f32 %v1539, %v1539
    %v1542 = vmul.f32 %v1540, %v1540
    %v1543 = vsel %vm71, %v1541, 0.0
    %1544 = vadd.xlane.f32.xlu0 %v1543
    %v1545 = vpop.xlane.xlu0 %1544
    %v1546 = vsel %vm71, %v1542, 0.0
    %1547 = vadd.xlane.f32.xlu0 %v1546
    %v1548 = vpop.xlane.xlu0 %1547
    %v1549 = vmul.f32 %v1545, %v78
    %v1550 = vmul.f32 %v1548, %v78
    %v1551 = vadd.f32 %v1549, 1e-05
    %v1552 = vadd.f32 %v1550, 1e-05
    %v1553 = vrsqrt.pop %v1551
    %v1554 = vrsqrt.pop %v1552
    %v1555 = vmul.f32 %v1539, %v1553
    %v1556 = vmul.f32 %v1540, %v1554
    %v1558 = vlaneseq
    %v1559 = vshrl.u32 %v1558, 7
    %v1560 = vsub.s32 0, %v1559
    %v1561 = vrot.slane %v1528, %v1560
    %v1563 = vmul.f32 %v1555, %v1561
    %v1564 = vmul.f32 %v1556, %v1561
    %v1566 = vlaneseq
    %v1567 = vshrl.u32 %v1566, 7
    %v1568 = vsub.s32 0, %v1567
    %v1569 = vrot.slane %v1530, %v1568
    %v1571 = vadd.f32 %v1563, %v1569
    %v1572 = vadd.f32 %v1564, %v1569
    %s1573 = scalar_lea.vmem %s5, 16
    %v1574 = vld [vmem:[%s1573] sm:$0xf]
    %v1575 = vld [vmem:[%s1573 + $0x4] sm:$0xf]
    %v1576 = vld [vmem:[%s1573 + $0x8] sm:$0xf]
    %v1577 = vld [vmem:[%s1573 + $0xc] sm:$0xf]
    %v1578 = vpack.c.bf16 %v1572, %v1571
    %s1579 = scalar_lea.vmem %s6, 1
    %v1580 = vld [vmem:[%s1579] sm:$0x1]
    %v1582 = vlaneseq
    %v1583 = vshrl.u32 %v1582, 7
    %v1584 = vsub.s32 0, %v1583
    %v1585 = vrot.slane %v1580, %v1584
    %v1591 = vunpack.c.l.b16 %v1574
    %v1592 = vunpack.c.l.b16 %v1575
    %v1593 = vunpack.c.l.b16 %v1576
    %v1594 = vunpack.c.l.b16 %v1577
    %v1595 = vpack.c.b16 %v1592, %v1591
    %v1596 = vpack.c.b16 %v1594, %v1593
    %v1600 = vsel %vm71, %v1578, 0
    %1602 = vmatprep.subr.bf16.mxu0 0
    %1603 = vmatpush1.bf16.msra.mxu0 %v1595
    %1604 = vmatprep.subr.bf16.mxu0 0
    %1605 = vmatpush1.bf16.msra.mxu0 %v1596
    %1606 = vmatprep.subr.bf16.mxu0 0
    %1607 = vmatpush1.bf16.msra.mxu0 0
    %1608 = vmatprep.subr.bf16.mxu0 0
    %1609 = vmatpush1.bf16.msra.mxu0 0
    %1610 = vmatprep.subr.bf16.mxu0 0
    %1611 = vmatpush1.bf16.msra.mxu0 0
    %1612 = vmatprep.subr.bf16.mxu0 0
    %1613 = vmatpush1.bf16.msra.mxu0 0
    %1614 = vmatprep.subr.bf16.mxu0 0
    %1615 = vmatpush1.bf16.msra.mxu0 0
    %1616 = vmatprep.subr.bf16.mxu0 0
    %1617 = vmatpush1.bf16.msra.mxu0 0
    %1618 = vmatprep.subr.bf16.mxu0 0
    %1619 = vmatpush1.bf16.msra.mxu0 0
    %1620 = vmatprep.subr.bf16.mxu0 0
    %1621 = vmatpush1.bf16.msra.mxu0 0
    %1622 = vmatprep.subr.bf16.mxu0 0
    %1623 = vmatpush1.bf16.msra.mxu0 0
    %1624 = vmatprep.subr.bf16.mxu0 0
    %1625 = vmatpush1.bf16.msra.mxu0 0
    %1626 = vmatprep.subr.bf16.mxu0 0
    %1627 = vmatpush1.bf16.msra.mxu0 0
    %1628 = vmatprep.subr.bf16.mxu0 0
    %1629 = vmatpush1.bf16.msra.mxu0 0
    %1630 = vmatprep.subr.bf16.mxu0 0
    %1631 = vmatpush1.bf16.msra.mxu0 0
    %1632 = vmatprep.subr.bf16.mxu0 0
    %1633 = vmatpush1.bf16.msra.mxu0 0
    %1634 = vmatprep.mubr.bf16.mxu0 0
    %1635 = vmatmul.mubr.bf16.gmra.mrb[0].mxu0 %v1600
    %v1636 = vpop.f32.mrb[0].mxu0
    %v1637 = vadd.f32 %v1585, %v1636
    %v1638 = vpop.f32.mrb[0].mxu0
    %v1639 = vpop.f32.mrb[0].mxu0
    %v1640 = vadd.f32 %v1585, %v1639
    %v1641 = vpop.f32.mrb[0].mxu0
    %1642 = vdwg.mxu0
    %v1643 = vmul.f32 %v1637, 0.35355338
    %v1644 = vmul.f32 %v1640, 0.35355338
    %s1645 = scalar_lea.vmem %s7, 16
    %v1646 = vld [vmem:[%s1645] sm:$0xf]
    %v1647 = vld [vmem:[%s1645 + $0x4] sm:$0xf]
    %v1648 = vld [vmem:[%s1645 + $0x8] sm:$0xf]
    %v1649 = vld [vmem:[%s1645 + $0xc] sm:$0xf]
    %v1650 = vpack.c.bf16 %v1643, %v1643
    %v1651 = vpack.c.bf16 %v1644, %v1644
    %v1652 = vpack.c.bf16 %v1637, %v1637
    %v1653 = vpack.c.bf16 %v1640, %v1640
    %1655 = vrot.lane.b32.xlu0 %v1652, 96
    %v1656 = vpop.permute.xlu0 %1655
    %v1658 = vsel %vm196, %v1650, 0
    %v1661 = vsel %vm196, %v1656, 0
    %1663 = vmatprep.subr.bf16.mxu0 0
    %1664 = vmatpush1.bf16.xpose.msra.mxu0 %v1661
    %1665 = vmatprep.subr.bf16.mxu0 0
    %1666 = vmatpush1.bf16.xpose.msra.mxu0 0
    %1667 = vmatprep.subr.bf16.mxu0 0
    %1668 = vmatpush1.bf16.xpose.msra.mxu0 0
    %1669 = vmatprep.subr.bf16.mxu0 0
    %1670 = vmatpush1.bf16.xpose.msra.mxu0 0
    %1671 = vmatprep.subr.bf16.mxu0 0
    %1672 = vmatpush1.bf16.xpose.msra.mxu0 0
    %1673 = vmatprep.subr.bf16.mxu0 0
    %1674 = vmatpush1.bf16.xpose.msra.mxu0 0
    %1675 = vmatprep.subr.bf16.mxu0 0
    %1676 = vmatpush1.bf16.xpose.msra.mxu0 0
    %1677 = vmatprep.subr.bf16.mxu0 0
    %1678 = vmatpush1.bf16.xpose.msra.mxu0 0
    %1679 = vmatprep.subr.bf16.mxu0 0
    %1680 = vmatpush1.bf16.xpose.msra.mxu0 0
    %1681 = vmatprep.subr.bf16.mxu0 0
    %1682 = vmatpush1.bf16.xpose.msra.mxu0 0
    %1683 = vmatprep.subr.bf16.mxu0 0
    %1684 = vmatpush1.bf16.xpose.msra.mxu0 0
    %1685 = vmatprep.subr.bf16.mxu0 0
    %1686 = vmatpush1.bf16.xpose.msra.mxu0 0
    %1687 = vmatprep.subr.bf16.mxu0 0
    %1688 = vmatpush1.bf16.xpose.msra.mxu0 0
    %1689 = vmatprep.subr.bf16.mxu0 0
    %1690 = vmatpush1.bf16.xpose.msra.mxu0 0
    %1691 = vmatprep.subr.bf16.mxu0 0
    %1692 = vmatpush1.bf16.xpose.msra.mxu0 0
    %1693 = vmatprep.subr.bf16.mxu0 0
    %1694 = vmatpush1.bf16.xpose.msra.mxu0 0
    %1695 = vmatprep.mubr.bf16.mxu0 0
    %1696 = vmatmul.mubr.bf16.gmra.mrb[0].mxu0 %v1658
    %v1697 = vpop.f32.mrb[0].mxu0
    %v1698 = vadd.f32 %v67, %v1697
    %v1699 = vpop.f32.mrb[0].mxu0
    %v1700 = vpop.f32.mrb[0].mxu0
    %v1701 = vpop.f32.mrb[0].mxu0
    %1702 = vdwg.mxu0
    %1704 = vrot.lane.b32.xlu0 %v1653, 96
    %v1705 = vpop.permute.xlu0 %1704
    %v1707 = vsel %vm196, %v1651, 0
    %v1710 = vsel %vm196, %v1705, 0
    %1712 = vmatprep.subr.bf16.mxu0 0
    %1713 = vmatpush1.bf16.xpose.msra.mxu0 %v1710
    %1714 = vmatprep.subr.bf16.mxu0 0
    %1715 = vmatpush1.bf16.xpose.msra.mxu0 0
    %1716 = vmatprep.subr.bf16.mxu0 0
    %1717 = vmatpush1.bf16.xpose.msra.mxu0 0
    %1718 = vmatprep.subr.bf16.mxu0 0
    %1719 = vmatpush1.bf16.xpose.msra.mxu0 0
    %1720 = vmatprep.subr.bf16.mxu0 0
    %1721 = vmatpush1.bf16.xpose.msra.mxu0 0
    %1722 = vmatprep.subr.bf16.mxu0 0
    %1723 = vmatpush1.bf16.xpose.msra.mxu0 0
    %1724 = vmatprep.subr.bf16.mxu0 0
    %1725 = vmatpush1.bf16.xpose.msra.mxu0 0
    %1726 = vmatprep.subr.bf16.mxu0 0
    %1727 = vmatpush1.bf16.xpose.msra.mxu0 0
    %1728 = vmatprep.subr.bf16.mxu0 0
    %1729 = vmatpush1.bf16.xpose.msra.mxu0 0
    %1730 = vmatprep.subr.bf16.mxu0 0
    %1731 = vmatpush1.bf16.xpose.msra.mxu0 0
    %1732 = vmatprep.subr.bf16.mxu0 0
    %1733 = vmatpush1.bf16.xpose.msra.mxu0 0
    %1734 = vmatprep.subr.bf16.mxu0 0
    %1735 = vmatpush1.bf16.xpose.msra.mxu0 0
    %1736 = vmatprep.subr.bf16.mxu0 0
    %1737 = vmatpush1.bf16.xpose.msra.mxu0 0
    %1738 = vmatprep.subr.bf16.mxu0 0
    %1739 = vmatpush1.bf16.xpose.msra.mxu0 0
    %1740 = vmatprep.subr.bf16.mxu0 0
    %1741 = vmatpush1.bf16.xpose.msra.mxu0 0
    %1742 = vmatprep.subr.bf16.mxu0 0
    %1743 = vmatpush1.bf16.xpose.msra.mxu0 0
    %1744 = vmatprep.mubr.bf16.mxu0 0
    %1745 = vmatmul.mubr.bf16.gmra.mrb[0].mxu0 %v1707
    %v1746 = vpop.f32.mrb[0].mxu0
    %v1747 = vadd.f32 %v68, %v1746
    %v1748 = vpop.f32.mrb[0].mxu0
    %v1749 = vpop.f32.mrb[0].mxu0
    %v1750 = vpop.f32.mrb[0].mxu0
    %1751 = vdwg.mxu0
    %v1752 = vsel %vm196, %v1698, -inf
    %1753 = vmax.xlane.f32.xlu0 %v1752
    %v1754 = vpop.xlane.xlu0 %1753
    %v1755 = vsel %vm196, %v1747, -inf
    %1756 = vmax.xlane.f32.xlu0 %v1755
    %v1757 = vpop.xlane.xlu0 %1756
    %v1758 = vsub.f32 %v1698, %v1754
    %v1759 = vsub.f32 %v1747, %v1757
    %v1760 = vmul.f32 %v1758, 1.442695
    %v1761 = vpow.pop %v1760
    %v1762 = vmul.f32 %v1759, 1.442695
    %v1763 = vpow.pop %v1762
    %v1764 = vsel %vm196, %v1761, 0.0
    %1765 = vadd.xlane.f32.xlu0 %v1764
    %v1766 = vpop.xlane.xlu0 %1765
    %v1767 = vsel %vm196, %v1763, 0.0
    %1768 = vadd.xlane.f32.xlu0 %v1767
    %v1769 = vpop.xlane.xlu0 %1768
    %v1770 = vrcp.pop %v1766
    %v1771 = vrcp.pop %v1769
    %v1772 = vmul.f32 %v1761, %v1770
    %v1773 = vmul.f32 %v1763, %v1771
    %v1774 = vpack.c.bf16 %v1772, %v1772
    %v1775 = vpack.c.bf16 %v1773, %v1773
    %1776 = vrot.lane.b32.xlu0 %v1652, 64
    %v1777 = vpop.permute.xlu0 %1776
    %v1779 = vsel %vm196, %v1774, 0
    %v1782 = vsel %vm321, %v1777, 0
    %1784 = vmatprep.subr.bf16.mxu0 0
    %1785 = vmatpush1.bf16.msra.mxu0 %v1782
    %1786 = vmatprep.subr.bf16.mxu0 0
    %1787 = vmatpush1.bf16.msra.mxu0 0
    %1788 = vmatprep.subr.bf16.mxu0 0
    %1789 = vmatpush1.bf16.msra.mxu0 0
    %1790 = vmatprep.subr.bf16.mxu0 0
    %1791 = vmatpush1.bf16.msra.mxu0 0
    %1792 = vmatprep.subr.bf16.mxu0 0
    %1793 = vmatpush1.bf16.msra.mxu0 0
    %1794 = vmatprep.subr.bf16.mxu0 0
    %1795 = vmatpush1.bf16.msra.mxu0 0
    %1796 = vmatprep.subr.bf16.mxu0 0
    %1797 = vmatpush1.bf16.msra.mxu0 0
    %1798 = vmatprep.subr.bf16.mxu0 0
    %1799 = vmatpush1.bf16.msra.mxu0 0
    %1800 = vmatprep.subr.bf16.mxu0 0
    %1801 = vmatpush1.bf16.msra.mxu0 0
    %1802 = vmatprep.subr.bf16.mxu0 0
    %1803 = vmatpush1.bf16.msra.mxu0 0
    %1804 = vmatprep.subr.bf16.mxu0 0
    %1805 = vmatpush1.bf16.msra.mxu0 0
    %1806 = vmatprep.subr.bf16.mxu0 0
    %1807 = vmatpush1.bf16.msra.mxu0 0
    %1808 = vmatprep.subr.bf16.mxu0 0
    %1809 = vmatpush1.bf16.msra.mxu0 0
    %1810 = vmatprep.subr.bf16.mxu0 0
    %1811 = vmatpush1.bf16.msra.mxu0 0
    %1812 = vmatprep.subr.bf16.mxu0 0
    %1813 = vmatpush1.bf16.msra.mxu0 0
    %1814 = vmatprep.subr.bf16.mxu0 0
    %1815 = vmatpush1.bf16.msra.mxu0 0
    %1816 = vmatprep.mubr.bf16.mxu0 0
    %1817 = vmatmul.mubr.bf16.gmra.mrb[0].mxu0 %v1779
    %v1818 = vpop.f32.mrb[0].mxu0
    %v1819 = vadd.f32 0.0, %v1818
    %v1820 = vpop.f32.mrb[0].mxu0
    %v1821 = vpop.f32.mrb[0].mxu0
    %v1822 = vpop.f32.mrb[0].mxu0
    %1823 = vdwg.mxu0
    %1824 = vrot.lane.b32.xlu0 %v1653, 64
    %v1825 = vpop.permute.xlu0 %1824
    %v1827 = vsel %vm196, %v1775, 0
    %v1830 = vsel %vm321, %v1825, 0
    %1832 = vmatprep.subr.bf16.mxu0 0
    %1833 = vmatpush1.bf16.msra.mxu0 %v1830
    %1834 = vmatprep.subr.bf16.mxu0 0
    %1835 = vmatpush1.bf16.msra.mxu0 0
    %1836 = vmatprep.subr.bf16.mxu0 0
    %1837 = vmatpush1.bf16.msra.mxu0 0
    %1838 = vmatprep.subr.bf16.mxu0 0
    %1839 = vmatpush1.bf16.msra.mxu0 0
    %1840 = vmatprep.subr.bf16.mxu0 0
    %1841 = vmatpush1.bf16.msra.mxu0 0
    %1842 = vmatprep.subr.bf16.mxu0 0
    %1843 = vmatpush1.bf16.msra.mxu0 0
    %1844 = vmatprep.subr.bf16.mxu0 0
    %1845 = vmatpush1.bf16.msra.mxu0 0
    %1846 = vmatprep.subr.bf16.mxu0 0
    %1847 = vmatpush1.bf16.msra.mxu0 0
    %1848 = vmatprep.subr.bf16.mxu0 0
    %1849 = vmatpush1.bf16.msra.mxu0 0
    %1850 = vmatprep.subr.bf16.mxu0 0
    %1851 = vmatpush1.bf16.msra.mxu0 0
    %1852 = vmatprep.subr.bf16.mxu0 0
    %1853 = vmatpush1.bf16.msra.mxu0 0
    %1854 = vmatprep.subr.bf16.mxu0 0
    %1855 = vmatpush1.bf16.msra.mxu0 0
    %1856 = vmatprep.subr.bf16.mxu0 0
    %1857 = vmatpush1.bf16.msra.mxu0 0
    %1858 = vmatprep.subr.bf16.mxu0 0
    %1859 = vmatpush1.bf16.msra.mxu0 0
    %1860 = vmatprep.subr.bf16.mxu0 0
    %1861 = vmatpush1.bf16.msra.mxu0 0
    %1862 = vmatprep.subr.bf16.mxu0 0
    %1863 = vmatpush1.bf16.msra.mxu0 0
    %1864 = vmatprep.mubr.bf16.mxu0 0
    %1865 = vmatmul.mubr.bf16.gmra.mrb[0].mxu0 %v1827
    %v1866 = vpop.f32.mrb[0].mxu0
    %v1867 = vadd.f32 0.0, %v1866
    %v1868 = vpop.f32.mrb[0].mxu0
    %v1869 = vpop.f32.mrb[0].mxu0
    %v1870 = vpop.f32.mrb[0].mxu0
    %1871 = vdwg.mxu0
    %v1872 = vpack.c.bf16 %v1867, %v1819
    %1874 = vrot.lane.b32.xlu0 %v1650, 120
    %v1875 = vpop.permute.xlu0 %1874
    %1876 = vrot.lane.b32.xlu0 %v1652, 88
    %v1877 = vpop.permute.xlu0 %1876
    %v1879 = vsel %vm196, %v1875, 0
    %v1882 = vsel %vm196, %v1877, 0
    %1884 = vmatprep.subr.bf16.mxu0 0
    %1885 = vmatpush1.bf16.xpose.msra.mxu0 %v1882
    %1886 = vmatprep.subr.bf16.mxu0 0
    %1887 = vmatpush1.bf16.xpose.msra.mxu0 0
    %1888 = vmatprep.subr.bf16.mxu0 0
    %1889 = vmatpush1.bf16.xpose.msra.mxu0 0
    %1890 = vmatprep.subr.bf16.mxu0 0
    %1891 = vmatpush1.bf16.xpose.msra.mxu0 0
    %1892 = vmatprep.subr.bf16.mxu0 0
    %1893 = vmatpush1.bf16.xpose.msra.mxu0 0
    %1894 = vmatprep.subr.bf16.mxu0 0
    %1895 = vmatpush1.bf16.xpose.msra.mxu0 0
    %1896 = vmatprep.subr.bf16.mxu0 0
    %1897 = vmatpush1.bf16.xpose.msra.mxu0 0
    %1898 = vmatprep.subr.bf16.mxu0 0
    %1899 = vmatpush1.bf16.xpose.msra.mxu0 0
    %1900 = vmatprep.subr.bf16.mxu0 0
    %1901 = vmatpush1.bf16.xpose.msra.mxu0 0
    %1902 = vmatprep.subr.bf16.mxu0 0
    %1903 = vmatpush1.bf16.xpose.msra.mxu0 0
    %1904 = vmatprep.subr.bf16.mxu0 0
    %1905 = vmatpush1.bf16.xpose.msra.mxu0 0
    %1906 = vmatprep.subr.bf16.mxu0 0
    %1907 = vmatpush1.bf16.xpose.msra.mxu0 0
    %1908 = vmatprep.subr.bf16.mxu0 0
    %1909 = vmatpush1.bf16.xpose.msra.mxu0 0
    %1910 = vmatprep.subr.bf16.mxu0 0
    %1911 = vmatpush1.bf16.xpose.msra.mxu0 0
    %1912 = vmatprep.subr.bf16.mxu0 0
    %1913 = vmatpush1.bf16.xpose.msra.mxu0 0
    %1914 = vmatprep.subr.bf16.mxu0 0
    %1915 = vmatpush1.bf16.xpose.msra.mxu0 0
    %1916 = vmatprep.mubr.bf16.mxu0 0
    %1917 = vmatmul.mubr.bf16.gmra.mrb[0].mxu0 %v1879
    %v1918 = vpop.f32.mrb[0].mxu0
    %v1919 = vadd.f32 %v67, %v1918
    %v1920 = vpop.f32.mrb[0].mxu0
    %v1921 = vpop.f32.mrb[0].mxu0
    %v1922 = vpop.f32.mrb[0].mxu0
    %1923 = vdwg.mxu0
    %1925 = vrot.lane.b32.xlu0 %v1651, 120
    %v1926 = vpop.permute.xlu0 %1925
    %1927 = vrot.lane.b32.xlu0 %v1653, 88
    %v1928 = vpop.permute.xlu0 %1927
    %v1930 = vsel %vm196, %v1926, 0
    %v1933 = vsel %vm196, %v1928, 0
    %1935 = vmatprep.subr.bf16.mxu0 0
    %1936 = vmatpush1.bf16.xpose.msra.mxu0 %v1933
    %1937 = vmatprep.subr.bf16.mxu0 0
    %1938 = vmatpush1.bf16.xpose.msra.mxu0 0
    %1939 = vmatprep.subr.bf16.mxu0 0
    %1940 = vmatpush1.bf16.xpose.msra.mxu0 0
    %1941 = vmatprep.subr.bf16.mxu0 0
    %1942 = vmatpush1.bf16.xpose.msra.mxu0 0
    %1943 = vmatprep.subr.bf16.mxu0 0
    %1944 = vmatpush1.bf16.xpose.msra.mxu0 0
    %1945 = vmatprep.subr.bf16.mxu0 0
    %1946 = vmatpush1.bf16.xpose.msra.mxu0 0
    %1947 = vmatprep.subr.bf16.mxu0 0
    %1948 = vmatpush1.bf16.xpose.msra.mxu0 0
    %1949 = vmatprep.subr.bf16.mxu0 0
    %1950 = vmatpush1.bf16.xpose.msra.mxu0 0
    %1951 = vmatprep.subr.bf16.mxu0 0
    %1952 = vmatpush1.bf16.xpose.msra.mxu0 0
    %1953 = vmatprep.subr.bf16.mxu0 0
    %1954 = vmatpush1.bf16.xpose.msra.mxu0 0
    %1955 = vmatprep.subr.bf16.mxu0 0
    %1956 = vmatpush1.bf16.xpose.msra.mxu0 0
    %1957 = vmatprep.subr.bf16.mxu0 0
    %1958 = vmatpush1.bf16.xpose.msra.mxu0 0
    %1959 = vmatprep.subr.bf16.mxu0 0
    %1960 = vmatpush1.bf16.xpose.msra.mxu0 0
    %1961 = vmatprep.subr.bf16.mxu0 0
    %1962 = vmatpush1.bf16.xpose.msra.mxu0 0
    %1963 = vmatprep.subr.bf16.mxu0 0
    %1964 = vmatpush1.bf16.xpose.msra.mxu0 0
    %1965 = vmatprep.subr.bf16.mxu0 0
    %1966 = vmatpush1.bf16.xpose.msra.mxu0 0
    %1967 = vmatprep.mubr.bf16.mxu0 0
    %1968 = vmatmul.mubr.bf16.gmra.mrb[0].mxu0 %v1930
    %v1969 = vpop.f32.mrb[0].mxu0
    %v1970 = vadd.f32 %v68, %v1969
    %v1971 = vpop.f32.mrb[0].mxu0
    %v1972 = vpop.f32.mrb[0].mxu0
    %v1973 = vpop.f32.mrb[0].mxu0
    %1974 = vdwg.mxu0
    %v1975 = vsel %vm196, %v1919, -inf
    %1976 = vmax.xlane.f32.xlu0 %v1975
    %v1977 = vpop.xlane.xlu0 %1976
    %v1978 = vsel %vm196, %v1970, -inf
    %1979 = vmax.xlane.f32.xlu0 %v1978
    %v1980 = vpop.xlane.xlu0 %1979
    %v1981 = vsub.f32 %v1919, %v1977
    %v1982 = vsub.f32 %v1970, %v1980
    %v1983 = vmul.f32 %v1981, 1.442695
    %v1984 = vpow.pop %v1983
    %v1985 = vmul.f32 %v1982, 1.442695
    %v1986 = vpow.pop %v1985
    %v1987 = vsel %vm196, %v1984, 0.0
    %1988 = vadd.xlane.f32.xlu0 %v1987
    %v1989 = vpop.xlane.xlu0 %1988
    %v1990 = vsel %vm196, %v1986, 0.0
    %1991 = vadd.xlane.f32.xlu0 %v1990
    %v1992 = vpop.xlane.xlu0 %1991
    %v1993 = vrcp.pop %v1989
    %v1994 = vrcp.pop %v1992
    %v1995 = vmul.f32 %v1984, %v1993
    %v1996 = vmul.f32 %v1986, %v1994
    %v1997 = vpack.c.bf16 %v1995, %v1995
    %v1998 = vpack.c.bf16 %v1996, %v1996
    %1999 = vrot.lane.b32.xlu0 %v1652, 56
    %v2000 = vpop.permute.xlu0 %1999
    %v2002 = vsel %vm196, %v1997, 0
    %v2005 = vsel %vm321, %v2000, 0
    %2007 = vmatprep.subr.bf16.mxu0 0
    %2008 = vmatpush1.bf16.msra.mxu0 %v2005
    %2009 = vmatprep.subr.bf16.mxu0 0
    %2010 = vmatpush1.bf16.msra.mxu0 0
    %2011 = vmatprep.subr.bf16.mxu0 0
    %2012 = vmatpush1.bf16.msra.mxu0 0
    %2013 = vmatprep.subr.bf16.mxu0 0
    %2014 = vmatpush1.bf16.msra.mxu0 0
    %2015 = vmatprep.subr.bf16.mxu0 0
    %2016 = vmatpush1.bf16.msra.mxu0 0
    %2017 = vmatprep.subr.bf16.mxu0 0
    %2018 = vmatpush1.bf16.msra.mxu0 0
    %2019 = vmatprep.subr.bf16.mxu0 0
    %2020 = vmatpush1.bf16.msra.mxu0 0
    %2021 = vmatprep.subr.bf16.mxu0 0
    %2022 = vmatpush1.bf16.msra.mxu0 0
    %2023 = vmatprep.subr.bf16.mxu0 0
    %2024 = vmatpush1.bf16.msra.mxu0 0
    %2025 = vmatprep.subr.bf16.mxu0 0
    %2026 = vmatpush1.bf16.msra.mxu0 0
    %2027 = vmatprep.subr.bf16.mxu0 0
    %2028 = vmatpush1.bf16.msra.mxu0 0
    %2029 = vmatprep.subr.bf16.mxu0 0
    %2030 = vmatpush1.bf16.msra.mxu0 0
    %2031 = vmatprep.subr.bf16.mxu0 0
    %2032 = vmatpush1.bf16.msra.mxu0 0
    %2033 = vmatprep.subr.bf16.mxu0 0
    %2034 = vmatpush1.bf16.msra.mxu0 0
    %2035 = vmatprep.subr.bf16.mxu0 0
    %2036 = vmatpush1.bf16.msra.mxu0 0
    %2037 = vmatprep.subr.bf16.mxu0 0
    %2038 = vmatpush1.bf16.msra.mxu0 0
    %2039 = vmatprep.mubr.bf16.mxu0 0
    %2040 = vmatmul.mubr.bf16.gmra.mrb[0].mxu0 %v2002
    %v2041 = vpop.f32.mrb[0].mxu0
    %v2042 = vadd.f32 0.0, %v2041
    %v2043 = vpop.f32.mrb[0].mxu0
    %v2044 = vpop.f32.mrb[0].mxu0
    %v2045 = vpop.f32.mrb[0].mxu0
    %2046 = vdwg.mxu0
    %2047 = vrot.lane.b32.xlu0 %v1653, 56
    %v2048 = vpop.permute.xlu0 %2047
    %v2050 = vsel %vm196, %v1998, 0
    %v2053 = vsel %vm321, %v2048, 0
    %2055 = vmatprep.subr.bf16.mxu0 0
    %2056 = vmatpush1.bf16.msra.mxu0 %v2053
    %2057 = vmatprep.subr.bf16.mxu0 0
    %2058 = vmatpush1.bf16.msra.mxu0 0
    %2059 = vmatprep.subr.bf16.mxu0 0
    %2060 = vmatpush1.bf16.msra.mxu0 0
    %2061 = vmatprep.subr.bf16.mxu0 0
    %2062 = vmatpush1.bf16.msra.mxu0 0
    %2063 = vmatprep.subr.bf16.mxu0 0
    %2064 = vmatpush1.bf16.msra.mxu0 0
    %2065 = vmatprep.subr.bf16.mxu0 0
    %2066 = vmatpush1.bf16.msra.mxu0 0
    %2067 = vmatprep.subr.bf16.mxu0 0
    %2068 = vmatpush1.bf16.msra.mxu0 0
    %2069 = vmatprep.subr.bf16.mxu0 0
    %2070 = vmatpush1.bf16.msra.mxu0 0
    %2071 = vmatprep.subr.bf16.mxu0 0
    %2072 = vmatpush1.bf16.msra.mxu0 0
    %2073 = vmatprep.subr.bf16.mxu0 0
    %2074 = vmatpush1.bf16.msra.mxu0 0
    %2075 = vmatprep.subr.bf16.mxu0 0
    %2076 = vmatpush1.bf16.msra.mxu0 0
    %2077 = vmatprep.subr.bf16.mxu0 0
    %2078 = vmatpush1.bf16.msra.mxu0 0
    %2079 = vmatprep.subr.bf16.mxu0 0
    %2080 = vmatpush1.bf16.msra.mxu0 0
    %2081 = vmatprep.subr.bf16.mxu0 0
    %2082 = vmatpush1.bf16.msra.mxu0 0
    %2083 = vmatprep.subr.bf16.mxu0 0
    %2084 = vmatpush1.bf16.msra.mxu0 0
    %2085 = vmatprep.subr.bf16.mxu0 0
    %2086 = vmatpush1.bf16.msra.mxu0 0
    %2087 = vmatprep.mubr.bf16.mxu0 0
    %2088 = vmatmul.mubr.bf16.gmra.mrb[0].mxu0 %v2050
    %v2089 = vpop.f32.mrb[0].mxu0
    %v2090 = vadd.f32 0.0, %v2089
    %v2091 = vpop.f32.mrb[0].mxu0
    %v2092 = vpop.f32.mrb[0].mxu0
    %v2093 = vpop.f32.mrb[0].mxu0
    %2094 = vdwg.mxu0
    %v2095 = vpack.c.bf16 %v2090, %v2042
    %v2097 = vsel %vm196, %v2095, 0
    %v2100 = vsel %vm321, %v1647, 0
    %2102 = vmatprep.subr.bf16.mxu0 0
    %2103 = vmatpush1.bf16.msra.mxu0 %v2100
    %2104 = vmatprep.subr.bf16.mxu0 0
    %2105 = vmatpush1.bf16.msra.mxu0 0
    %2106 = vmatprep.subr.bf16.mxu0 0
    %2107 = vmatpush1.bf16.msra.mxu0 0
    %2108 = vmatprep.subr.bf16.mxu0 0
    %2109 = vmatpush1.bf16.msra.mxu0 0
    %2110 = vmatprep.subr.bf16.mxu0 0
    %2111 = vmatpush1.bf16.msra.mxu0 0
    %2112 = vmatprep.subr.bf16.mxu0 0
    %2113 = vmatpush1.bf16.msra.mxu0 0
    %2114 = vmatprep.subr.bf16.mxu0 0
    %2115 = vmatpush1.bf16.msra.mxu0 0
    %2116 = vmatprep.subr.bf16.mxu0 0
    %2117 = vmatpush1.bf16.msra.mxu0 0
    %2118 = vmatprep.subr.bf16.mxu0 0
    %2119 = vmatpush1.bf16.msra.mxu0 0
    %2120 = vmatprep.subr.bf16.mxu0 0
    %2121 = vmatpush1.bf16.msra.mxu0 0
    %2122 = vmatprep.subr.bf16.mxu0 0
    %2123 = vmatpush1.bf16.msra.mxu0 0
    %2124 = vmatprep.subr.bf16.mxu0 0
    %2125 = vmatpush1.bf16.msra.mxu0 0
    %2126 = vmatprep.subr.bf16.mxu0 0
    %2127 = vmatpush1.bf16.msra.mxu0 0
    %2128 = vmatprep.subr.bf16.mxu0 0
    %2129 = vmatpush1.bf16.msra.mxu0 0
    %2130 = vmatprep.subr.bf16.mxu0 0
    %2131 = vmatpush1.bf16.msra.mxu0 0
    %2132 = vmatprep.subr.bf16.mxu0 0
    %2133 = vmatpush1.bf16.msra.mxu0 0
    %2134 = vmatprep.mubr.bf16.mxu0 0
    %2135 = vmatmul.mubr.bf16.gmra.mrb[0].mxu0 %v2097
    %v2136 = vpop.f32.mrb[0].mxu0
    %v2137 = vadd.f32 0.0, %v2136
    %v2138 = vpop.f32.mrb[0].mxu0
    %v2139 = vpop.f32.mrb[0].mxu0
    %v2140 = vadd.f32 0.0, %v2139
    %v2141 = vpop.f32.mrb[0].mxu0
    %2142 = vdwg.mxu0
    %v2144 = vsel %vm196, %v1872, 0
    %v2147 = vsel %vm321, %v1646, 0
    %2149 = vmatprep.subr.bf16.mxu0 0
    %2150 = vmatpush1.bf16.msra.mxu0 %v2147
    %2151 = vmatprep.subr.bf16.mxu0 0
    %2152 = vmatpush1.bf16.msra.mxu0 0
    %2153 = vmatprep.subr.bf16.mxu0 0
    %2154 = vmatpush1.bf16.msra.mxu0 0
    %2155 = vmatprep.subr.bf16.mxu0 0
    %2156 = vmatpush1.bf16.msra.mxu0 0
    %2157 = vmatprep.subr.bf16.mxu0 0
    %2158 = vmatpush1.bf16.msra.mxu0 0
    %2159 = vmatprep.subr.bf16.mxu0 0
    %2160 = vmatpush1.bf16.msra.mxu0 0
    %2161 = vmatprep.subr.bf16.mxu0 0
    %2162 = vmatpush1.bf16.msra.mxu0 0
    %2163 = vmatprep.subr.bf16.mxu0 0
    %2164 = vmatpush1.bf16.msra.mxu0 0
    %2165 = vmatprep.subr.bf16.mxu0 0
    %2166 = vmatpush1.bf16.msra.mxu0 0
    %2167 = vmatprep.subr.bf16.mxu0 0
    %2168 = vmatpush1.bf16.msra.mxu0 0
    %2169 = vmatprep.subr.bf16.mxu0 0
    %2170 = vmatpush1.bf16.msra.mxu0 0
    %2171 = vmatprep.subr.bf16.mxu0 0
    %2172 = vmatpush1.bf16.msra.mxu0 0
    %2173 = vmatprep.subr.bf16.mxu0 0
    %2174 = vmatpush1.bf16.msra.mxu0 0
    %2175 = vmatprep.subr.bf16.mxu0 0
    %2176 = vmatpush1.bf16.msra.mxu0 0
    %2177 = vmatprep.subr.bf16.mxu0 0
    %2178 = vmatpush1.bf16.msra.mxu0 0
    %2179 = vmatprep.subr.bf16.mxu0 0
    %2180 = vmatpush1.bf16.msra.mxu0 0
    %2181 = vmatprep.mubr.bf16.mxu0 0
    %2182 = vmatmul.mubr.bf16.gmra.mrb[0].mxu0 %v2144
    %v2183 = vpop.f32.mrb[0].mxu0
    %v2184 = vadd.f32 %v2137, %v2183
    %v2185 = vpop.f32.mrb[0].mxu0
    %v2186 = vpop.f32.mrb[0].mxu0
    %v2187 = vadd.f32 %v2140, %v2186
    %v2188 = vpop.f32.mrb[0].mxu0
    %2189 = vdwg.mxu0
    %2190 = vrot.lane.b32.xlu0 %v1650, 112
    %v2191 = vpop.permute.xlu0 %2190
    %2192 = vrot.lane.b32.xlu0 %v1652, 80
    %v2193 = vpop.permute.xlu0 %2192
    %v2195 = vsel %vm196, %v2191, 0
    %v2198 = vsel %vm196, %v2193, 0
    %2200 = vmatprep.subr.bf16.mxu0 0
    %2201 = vmatpush1.bf16.xpose.msra.mxu0 %v2198
    %2202 = vmatprep.subr.bf16.mxu0 0
    %2203 = vmatpush1.bf16.xpose.msra.mxu0 0
    %2204 = vmatprep.subr.bf16.mxu0 0
    %2205 = vmatpush1.bf16.xpose.msra.mxu0 0
    %2206 = vmatprep.subr.bf16.mxu0 0
    %2207 = vmatpush1.bf16.xpose.msra.mxu0 0
    %2208 = vmatprep.subr.bf16.mxu0 0
    %2209 = vmatpush1.bf16.xpose.msra.mxu0 0
    %2210 = vmatprep.subr.bf16.mxu0 0
    %2211 = vmatpush1.bf16.xpose.msra.mxu0 0
    %2212 = vmatprep.subr.bf16.mxu0 0
    %2213 = vmatpush1.bf16.xpose.msra.mxu0 0
    %2214 = vmatprep.subr.bf16.mxu0 0
    %2215 = vmatpush1.bf16.xpose.msra.mxu0 0
    %2216 = vmatprep.subr.bf16.mxu0 0
    %2217 = vmatpush1.bf16.xpose.msra.mxu0 0
    %2218 = vmatprep.subr.bf16.mxu0 0
    %2219 = vmatpush1.bf16.xpose.msra.mxu0 0
    %2220 = vmatprep.subr.bf16.mxu0 0
    %2221 = vmatpush1.bf16.xpose.msra.mxu0 0
    %2222 = vmatprep.subr.bf16.mxu0 0
    %2223 = vmatpush1.bf16.xpose.msra.mxu0 0
    %2224 = vmatprep.subr.bf16.mxu0 0
    %2225 = vmatpush1.bf16.xpose.msra.mxu0 0
    %2226 = vmatprep.subr.bf16.mxu0 0
    %2227 = vmatpush1.bf16.xpose.msra.mxu0 0
    %2228 = vmatprep.subr.bf16.mxu0 0
    %2229 = vmatpush1.bf16.xpose.msra.mxu0 0
    %2230 = vmatprep.subr.bf16.mxu0 0
    %2231 = vmatpush1.bf16.xpose.msra.mxu0 0
    %2232 = vmatprep.mubr.bf16.mxu0 0
    %2233 = vmatmul.mubr.bf16.gmra.mrb[0].mxu0 %v2195
    %v2234 = vpop.f32.mrb[0].mxu0
    %v2235 = vadd.f32 %v67, %v2234
    %v2236 = vpop.f32.mrb[0].mxu0
    %v2237 = vpop.f32.mrb[0].mxu0
    %v2238 = vpop.f32.mrb[0].mxu0
    %2239 = vdwg.mxu0
    %2240 = vrot.lane.b32.xlu0 %v1651, 112
    %v2241 = vpop.permute.xlu0 %2240
    %2242 = vrot.lane.b32.xlu0 %v1653, 80
    %v2243 = vpop.permute.xlu0 %2242
    %v2245 = vsel %vm196, %v2241, 0
    %v2248 = vsel %vm196, %v2243, 0
    %2250 = vmatprep.subr.bf16.mxu0 0
    %2251 = vmatpush1.bf16.xpose.msra.mxu0 %v2248
    %2252 = vmatprep.subr.bf16.mxu0 0
    %2253 = vmatpush1.bf16.xpose.msra.mxu0 0
    %2254 = vmatprep.subr.bf16.mxu0 0
    %2255 = vmatpush1.bf16.xpose.msra.mxu0 0
    %2256 = vmatprep.subr.bf16.mxu0 0
    %2257 = vmatpush1.bf16.xpose.msra.mxu0 0
    %2258 = vmatprep.subr.bf16.mxu0 0
    %2259 = vmatpush1.bf16.xpose.msra.mxu0 0
    %2260 = vmatprep.subr.bf16.mxu0 0
    %2261 = vmatpush1.bf16.xpose.msra.mxu0 0
    %2262 = vmatprep.subr.bf16.mxu0 0
    %2263 = vmatpush1.bf16.xpose.msra.mxu0 0
    %2264 = vmatprep.subr.bf16.mxu0 0
    %2265 = vmatpush1.bf16.xpose.msra.mxu0 0
    %2266 = vmatprep.subr.bf16.mxu0 0
    %2267 = vmatpush1.bf16.xpose.msra.mxu0 0
    %2268 = vmatprep.subr.bf16.mxu0 0
    %2269 = vmatpush1.bf16.xpose.msra.mxu0 0
    %2270 = vmatprep.subr.bf16.mxu0 0
    %2271 = vmatpush1.bf16.xpose.msra.mxu0 0
    %2272 = vmatprep.subr.bf16.mxu0 0
    %2273 = vmatpush1.bf16.xpose.msra.mxu0 0
    %2274 = vmatprep.subr.bf16.mxu0 0
    %2275 = vmatpush1.bf16.xpose.msra.mxu0 0
    %2276 = vmatprep.subr.bf16.mxu0 0
    %2277 = vmatpush1.bf16.xpose.msra.mxu0 0
    %2278 = vmatprep.subr.bf16.mxu0 0
    %2279 = vmatpush1.bf16.xpose.msra.mxu0 0
    %2280 = vmatprep.subr.bf16.mxu0 0
    %2281 = vmatpush1.bf16.xpose.msra.mxu0 0
    %2282 = vmatprep.mubr.bf16.mxu0 0
    %2283 = vmatmul.mubr.bf16.gmra.mrb[0].mxu0 %v2245
    %v2284 = vpop.f32.mrb[0].mxu0
    %v2285 = vadd.f32 %v68, %v2284
    %v2286 = vpop.f32.mrb[0].mxu0
    %v2287 = vpop.f32.mrb[0].mxu0
    %v2288 = vpop.f32.mrb[0].mxu0
    %2289 = vdwg.mxu0
    %v2290 = vsel %vm196, %v2235, -inf
    %2291 = vmax.xlane.f32.xlu0 %v2290
    %v2292 = vpop.xlane.xlu0 %2291
    %v2293 = vsel %vm196, %v2285, -inf
    %2294 = vmax.xlane.f32.xlu0 %v2293
    %v2295 = vpop.xlane.xlu0 %2294
    %v2296 = vsub.f32 %v2235, %v2292
    %v2297 = vsub.f32 %v2285, %v2295
    %v2298 = vmul.f32 %v2296, 1.442695
    %v2299 = vpow.pop %v2298
    %v2300 = vmul.f32 %v2297, 1.442695
    %v2301 = vpow.pop %v2300
    %v2302 = vsel %vm196, %v2299, 0.0
    %2303 = vadd.xlane.f32.xlu0 %v2302
    %v2304 = vpop.xlane.xlu0 %2303
    %v2305 = vsel %vm196, %v2301, 0.0
    %2306 = vadd.xlane.f32.xlu0 %v2305
    %v2307 = vpop.xlane.xlu0 %2306
    %v2308 = vrcp.pop %v2304
    %v2309 = vrcp.pop %v2307
    %v2310 = vmul.f32 %v2299, %v2308
    %v2311 = vmul.f32 %v2301, %v2309
    %v2312 = vpack.c.bf16 %v2310, %v2310
    %v2313 = vpack.c.bf16 %v2311, %v2311
    %2314 = vrot.lane.b32.xlu0 %v1652, 48
    %v2315 = vpop.permute.xlu0 %2314
    %v2317 = vsel %vm196, %v2312, 0
    %v2320 = vsel %vm321, %v2315, 0
    %2322 = vmatprep.subr.bf16.mxu0 0
    %2323 = vmatpush1.bf16.msra.mxu0 %v2320
    %2324 = vmatprep.subr.bf16.mxu0 0
    %2325 = vmatpush1.bf16.msra.mxu0 0
    %2326 = vmatprep.subr.bf16.mxu0 0
    %2327 = vmatpush1.bf16.msra.mxu0 0
    %2328 = vmatprep.subr.bf16.mxu0 0
    %2329 = vmatpush1.bf16.msra.mxu0 0
    %2330 = vmatprep.subr.bf16.mxu0 0
    %2331 = vmatpush1.bf16.msra.mxu0 0
    %2332 = vmatprep.subr.bf16.mxu0 0
    %2333 = vmatpush1.bf16.msra.mxu0 0
    %2334 = vmatprep.subr.bf16.mxu0 0
    %2335 = vmatpush1.bf16.msra.mxu0 0
    %2336 = vmatprep.subr.bf16.mxu0 0
    %2337 = vmatpush1.bf16.msra.mxu0 0
    %2338 = vmatprep.subr.bf16.mxu0 0
    %2339 = vmatpush1.bf16.msra.mxu0 0
    %2340 = vmatprep.subr.bf16.mxu0 0
    %2341 = vmatpush1.bf16.msra.mxu0 0
    %2342 = vmatprep.subr.bf16.mxu0 0
    %2343 = vmatpush1.bf16.msra.mxu0 0
    %2344 = vmatprep.subr.bf16.mxu0 0
    %2345 = vmatpush1.bf16.msra.mxu0 0
    %2346 = vmatprep.subr.bf16.mxu0 0
    %2347 = vmatpush1.bf16.msra.mxu0 0
    %2348 = vmatprep.subr.bf16.mxu0 0
    %2349 = vmatpush1.bf16.msra.mxu0 0
    %2350 = vmatprep.subr.bf16.mxu0 0
    %2351 = vmatpush1.bf16.msra.mxu0 0
    %2352 = vmatprep.subr.bf16.mxu0 0
    %2353 = vmatpush1.bf16.msra.mxu0 0
    %2354 = vmatprep.mubr.bf16.mxu0 0
    %2355 = vmatmul.mubr.bf16.gmra.mrb[0].mxu0 %v2317
    %v2356 = vpop.f32.mrb[0].mxu0
    %v2357 = vadd.f32 0.0, %v2356
    %v2358 = vpop.f32.mrb[0].mxu0
    %v2359 = vpop.f32.mrb[0].mxu0
    %v2360 = vpop.f32.mrb[0].mxu0
    %2361 = vdwg.mxu0
    %2362 = vrot.lane.b32.xlu0 %v1653, 48
    %v2363 = vpop.permute.xlu0 %2362
    %v2365 = vsel %vm196, %v2313, 0
    %v2368 = vsel %vm321, %v2363, 0
    %2370 = vmatprep.subr.bf16.mxu0 0
    %2371 = vmatpush1.bf16.msra.mxu0 %v2368
    %2372 = vmatprep.subr.bf16.mxu0 0
    %2373 = vmatpush1.bf16.msra.mxu0 0
    %2374 = vmatprep.subr.bf16.mxu0 0
    %2375 = vmatpush1.bf16.msra.mxu0 0
    %2376 = vmatprep.subr.bf16.mxu0 0
    %2377 = vmatpush1.bf16.msra.mxu0 0
    %2378 = vmatprep.subr.bf16.mxu0 0
    %2379 = vmatpush1.bf16.msra.mxu0 0
    %2380 = vmatprep.subr.bf16.mxu0 0
    %2381 = vmatpush1.bf16.msra.mxu0 0
    %2382 = vmatprep.subr.bf16.mxu0 0
    %2383 = vmatpush1.bf16.msra.mxu0 0
    %2384 = vmatprep.subr.bf16.mxu0 0
    %2385 = vmatpush1.bf16.msra.mxu0 0
    %2386 = vmatprep.subr.bf16.mxu0 0
    %2387 = vmatpush1.bf16.msra.mxu0 0
    %2388 = vmatprep.subr.bf16.mxu0 0
    %2389 = vmatpush1.bf16.msra.mxu0 0
    %2390 = vmatprep.subr.bf16.mxu0 0
    %2391 = vmatpush1.bf16.msra.mxu0 0
    %2392 = vmatprep.subr.bf16.mxu0 0
    %2393 = vmatpush1.bf16.msra.mxu0 0
    %2394 = vmatprep.subr.bf16.mxu0 0
    %2395 = vmatpush1.bf16.msra.mxu0 0
    %2396 = vmatprep.subr.bf16.mxu0 0
    %2397 = vmatpush1.bf16.msra.mxu0 0
    %2398 = vmatprep.subr.bf16.mxu0 0
    %2399 = vmatpush1.bf16.msra.mxu0 0
    %2400 = vmatprep.subr.bf16.mxu0 0
    %2401 = vmatpush1.bf16.msra.mxu0 0
    %2402 = vmatprep.mubr.bf16.mxu0 0
    %2403 = vmatmul.mubr.bf16.gmra.mrb[0].mxu0 %v2365
    %v2404 = vpop.f32.mrb[0].mxu0
    %v2405 = vadd.f32 0.0, %v2404
    %v2406 = vpop.f32.mrb[0].mxu0
    %v2407 = vpop.f32.mrb[0].mxu0
    %v2408 = vpop.f32.mrb[0].mxu0
    %2409 = vdwg.mxu0
    %v2410 = vpack.c.bf16 %v2405, %v2357
    %v2412 = vsel %vm196, %v2410, 0
    %v2415 = vsel %vm321, %v1648, 0
    %2417 = vmatprep.subr.bf16.mxu0 0
    %2418 = vmatpush1.bf16.msra.mxu0 %v2415
    %2419 = vmatprep.subr.bf16.mxu0 0
    %2420 = vmatpush1.bf16.msra.mxu0 0
    %2421 = vmatprep.subr.bf16.mxu0 0
    %2422 = vmatpush1.bf16.msra.mxu0 0
    %2423 = vmatprep.subr.bf16.mxu0 0
    %2424 = vmatpush1.bf16.msra.mxu0 0
    %2425 = vmatprep.subr.bf16.mxu0 0
    %2426 = vmatpush1.bf16.msra.mxu0 0
    %2427 = vmatprep.subr.bf16.mxu0 0
    %2428 = vmatpush1.bf16.msra.mxu0 0
    %2429 = vmatprep.subr.bf16.mxu0 0
    %2430 = vmatpush1.bf16.msra.mxu0 0
    %2431 = vmatprep.subr.bf16.mxu0 0
    %2432 = vmatpush1.bf16.msra.mxu0 0
    %2433 = vmatprep.subr.bf16.mxu0 0
    %2434 = vmatpush1.bf16.msra.mxu0 0
    %2435 = vmatprep.subr.bf16.mxu0 0
    %2436 = vmatpush1.bf16.msra.mxu0 0
    %2437 = vmatprep.subr.bf16.mxu0 0
    %2438 = vmatpush1.bf16.msra.mxu0 0
    %2439 = vmatprep.subr.bf16.mxu0 0
    %2440 = vmatpush1.bf16.msra.mxu0 0
    %2441 = vmatprep.subr.bf16.mxu0 0
    %2442 = vmatpush1.bf16.msra.mxu0 0
    %2443 = vmatprep.subr.bf16.mxu0 0
    %2444 = vmatpush1.bf16.msra.mxu0 0
    %2445 = vmatprep.subr.bf16.mxu0 0
    %2446 = vmatpush1.bf16.msra.mxu0 0
    %2447 = vmatprep.subr.bf16.mxu0 0
    %2448 = vmatpush1.bf16.msra.mxu0 0
    %2449 = vmatprep.mubr.bf16.mxu0 0
    %2450 = vmatmul.mubr.bf16.gmra.mrb[0].mxu0 %v2412
    %v2451 = vpop.f32.mrb[0].mxu0
    %v2452 = vadd.f32 0.0, %v2451
    %v2453 = vpop.f32.mrb[0].mxu0
    %v2454 = vpop.f32.mrb[0].mxu0
    %v2455 = vadd.f32 0.0, %v2454
    %v2456 = vpop.f32.mrb[0].mxu0
    %2457 = vdwg.mxu0
    %v2458 = vadd.f32 %v2184, %v2452
    %v2459 = vadd.f32 %v2187, %v2455
    %2460 = vrot.lane.b32.xlu0 %v1650, 104
    %v2461 = vpop.permute.xlu0 %2460
    %2462 = vrot.lane.b32.xlu0 %v1652, 72
    %v2463 = vpop.permute.xlu0 %2462
    %v2465 = vsel %vm196, %v2461, 0
    %v2468 = vsel %vm196, %v2463, 0
    %2470 = vmatprep.subr.bf16.mxu0 0
    %2471 = vmatpush1.bf16.xpose.msra.mxu0 %v2468
    %2472 = vmatprep.subr.bf16.mxu0 0
    %2473 = vmatpush1.bf16.xpose.msra.mxu0 0
    %2474 = vmatprep.subr.bf16.mxu0 0
    %2475 = vmatpush1.bf16.xpose.msra.mxu0 0
    %2476 = vmatprep.subr.bf16.mxu0 0
    %2477 = vmatpush1.bf16.xpose.msra.mxu0 0
    %2478 = vmatprep.subr.bf16.mxu0 0
    %2479 = vmatpush1.bf16.xpose.msra.mxu0 0
    %2480 = vmatprep.subr.bf16.mxu0 0
    %2481 = vmatpush1.bf16.xpose.msra.mxu0 0
    %2482 = vmatprep.subr.bf16.mxu0 0
    %2483 = vmatpush1.bf16.xpose.msra.mxu0 0
    %2484 = vmatprep.subr.bf16.mxu0 0
    %2485 = vmatpush1.bf16.xpose.msra.mxu0 0
    %2486 = vmatprep.subr.bf16.mxu0 0
    %2487 = vmatpush1.bf16.xpose.msra.mxu0 0
    %2488 = vmatprep.subr.bf16.mxu0 0
    %2489 = vmatpush1.bf16.xpose.msra.mxu0 0
    %2490 = vmatprep.subr.bf16.mxu0 0
    %2491 = vmatpush1.bf16.xpose.msra.mxu0 0
    %2492 = vmatprep.subr.bf16.mxu0 0
    %2493 = vmatpush1.bf16.xpose.msra.mxu0 0
    %2494 = vmatprep.subr.bf16.mxu0 0
    %2495 = vmatpush1.bf16.xpose.msra.mxu0 0
    %2496 = vmatprep.subr.bf16.mxu0 0
    %2497 = vmatpush1.bf16.xpose.msra.mxu0 0
    %2498 = vmatprep.subr.bf16.mxu0 0
    %2499 = vmatpush1.bf16.xpose.msra.mxu0 0
    %2500 = vmatprep.subr.bf16.mxu0 0
    %2501 = vmatpush1.bf16.xpose.msra.mxu0 0
    %2502 = vmatprep.mubr.bf16.mxu0 0
    %2503 = vmatmul.mubr.bf16.gmra.mrb[0].mxu0 %v2465
    %v2504 = vpop.f32.mrb[0].mxu0
    %v2505 = vadd.f32 %v67, %v2504
    %v2506 = vpop.f32.mrb[0].mxu0
    %v2507 = vpop.f32.mrb[0].mxu0
    %v2508 = vpop.f32.mrb[0].mxu0
    %2509 = vdwg.mxu0
    %2510 = vrot.lane.b32.xlu0 %v1651, 104
    %v2511 = vpop.permute.xlu0 %2510
    %2512 = vrot.lane.b32.xlu0 %v1653, 72
    %v2513 = vpop.permute.xlu0 %2512
    %v2515 = vsel %vm196, %v2511, 0
    %v2518 = vsel %vm196, %v2513, 0
    %2520 = vmatprep.subr.bf16.mxu0 0
    %2521 = vmatpush1.bf16.xpose.msra.mxu0 %v2518
    %2522 = vmatprep.subr.bf16.mxu0 0
    %2523 = vmatpush1.bf16.xpose.msra.mxu0 0
    %2524 = vmatprep.subr.bf16.mxu0 0
    %2525 = vmatpush1.bf16.xpose.msra.mxu0 0
    %2526 = vmatprep.subr.bf16.mxu0 0
    %2527 = vmatpush1.bf16.xpose.msra.mxu0 0
    %2528 = vmatprep.subr.bf16.mxu0 0
    %2529 = vmatpush1.bf16.xpose.msra.mxu0 0
    %2530 = vmatprep.subr.bf16.mxu0 0
    %2531 = vmatpush1.bf16.xpose.msra.mxu0 0
    %2532 = vmatprep.subr.bf16.mxu0 0
    %2533 = vmatpush1.bf16.xpose.msra.mxu0 0
    %2534 = vmatprep.subr.bf16.mxu0 0
    %2535 = vmatpush1.bf16.xpose.msra.mxu0 0
    %2536 = vmatprep.subr.bf16.mxu0 0
    %2537 = vmatpush1.bf16.xpose.msra.mxu0 0
    %2538 = vmatprep.subr.bf16.mxu0 0
    %2539 = vmatpush1.bf16.xpose.msra.mxu0 0
    %2540 = vmatprep.subr.bf16.mxu0 0
    %2541 = vmatpush1.bf16.xpose.msra.mxu0 0
    %2542 = vmatprep.subr.bf16.mxu0 0
    %2543 = vmatpush1.bf16.xpose.msra.mxu0 0
    %2544 = vmatprep.subr.bf16.mxu0 0
    %2545 = vmatpush1.bf16.xpose.msra.mxu0 0
    %2546 = vmatprep.subr.bf16.mxu0 0
    %2547 = vmatpush1.bf16.xpose.msra.mxu0 0
    %2548 = vmatprep.subr.bf16.mxu0 0
    %2549 = vmatpush1.bf16.xpose.msra.mxu0 0
    %2550 = vmatprep.subr.bf16.mxu0 0
    %2551 = vmatpush1.bf16.xpose.msra.mxu0 0
    %2552 = vmatprep.mubr.bf16.mxu0 0
    %2553 = vmatmul.mubr.bf16.gmra.mrb[0].mxu0 %v2515
    %v2554 = vpop.f32.mrb[0].mxu0
    %v2555 = vadd.f32 %v68, %v2554
    %v2556 = vpop.f32.mrb[0].mxu0
    %v2557 = vpop.f32.mrb[0].mxu0
    %v2558 = vpop.f32.mrb[0].mxu0
    %2559 = vdwg.mxu0
    %v2560 = vsel %vm196, %v2505, -inf
    %2561 = vmax.xlane.f32.xlu0 %v2560
    %v2562 = vpop.xlane.xlu0 %2561
    %v2563 = vsel %vm196, %v2555, -inf
    %2564 = vmax.xlane.f32.xlu0 %v2563
    %v2565 = vpop.xlane.xlu0 %2564
    %v2566 = vsub.f32 %v2505, %v2562
    %v2567 = vsub.f32 %v2555, %v2565
    %v2568 = vmul.f32 %v2566, 1.442695
    %v2569 = vpow.pop %v2568
    %v2570 = vmul.f32 %v2567, 1.442695
    %v2571 = vpow.pop %v2570
    %v2572 = vsel %vm196, %v2569, 0.0
    %2573 = vadd.xlane.f32.xlu0 %v2572
    %v2574 = vpop.xlane.xlu0 %2573
    %v2575 = vsel %vm196, %v2571, 0.0
    %2576 = vadd.xlane.f32.xlu0 %v2575
    %v2577 = vpop.xlane.xlu0 %2576
    %v2578 = vrcp.pop %v2574
    %v2579 = vrcp.pop %v2577
    %v2580 = vmul.f32 %v2569, %v2578
    %v2581 = vmul.f32 %v2571, %v2579
    %v2582 = vpack.c.bf16 %v2580, %v2580
    %v2583 = vpack.c.bf16 %v2581, %v2581
    %2584 = vrot.lane.b32.xlu0 %v1652, 40
    %v2585 = vpop.permute.xlu0 %2584
    %v2587 = vsel %vm196, %v2582, 0
    %v2590 = vsel %vm321, %v2585, 0
    %2592 = vmatprep.subr.bf16.mxu0 0
    %2593 = vmatpush1.bf16.msra.mxu0 %v2590
    %2594 = vmatprep.subr.bf16.mxu0 0
    %2595 = vmatpush1.bf16.msra.mxu0 0
    %2596 = vmatprep.subr.bf16.mxu0 0
    %2597 = vmatpush1.bf16.msra.mxu0 0
    %2598 = vmatprep.subr.bf16.mxu0 0
    %2599 = vmatpush1.bf16.msra.mxu0 0
    %2600 = vmatprep.subr.bf16.mxu0 0
    %2601 = vmatpush1.bf16.msra.mxu0 0
    %2602 = vmatprep.subr.bf16.mxu0 0
    %2603 = vmatpush1.bf16.msra.mxu0 0
    %2604 = vmatprep.subr.bf16.mxu0 0
    %2605 = vmatpush1.bf16.msra.mxu0 0
    %2606 = vmatprep.subr.bf16.mxu0 0
    %2607 = vmatpush1.bf16.msra.mxu0 0
    %2608 = vmatprep.subr.bf16.mxu0 0
    %2609 = vmatpush1.bf16.msra.mxu0 0
    %2610 = vmatprep.subr.bf16.mxu0 0
    %2611 = vmatpush1.bf16.msra.mxu0 0
    %2612 = vmatprep.subr.bf16.mxu0 0
    %2613 = vmatpush1.bf16.msra.mxu0 0
    %2614 = vmatprep.subr.bf16.mxu0 0
    %2615 = vmatpush1.bf16.msra.mxu0 0
    %2616 = vmatprep.subr.bf16.mxu0 0
    %2617 = vmatpush1.bf16.msra.mxu0 0
    %2618 = vmatprep.subr.bf16.mxu0 0
    %2619 = vmatpush1.bf16.msra.mxu0 0
    %2620 = vmatprep.subr.bf16.mxu0 0
    %2621 = vmatpush1.bf16.msra.mxu0 0
    %2622 = vmatprep.subr.bf16.mxu0 0
    %2623 = vmatpush1.bf16.msra.mxu0 0
    %2624 = vmatprep.mubr.bf16.mxu0 0
    %2625 = vmatmul.mubr.bf16.gmra.mrb[0].mxu0 %v2587
    %v2626 = vpop.f32.mrb[0].mxu0
    %v2627 = vadd.f32 0.0, %v2626
    %v2628 = vpop.f32.mrb[0].mxu0
    %v2629 = vpop.f32.mrb[0].mxu0
    %v2630 = vpop.f32.mrb[0].mxu0
    %2631 = vdwg.mxu0
    %2632 = vrot.lane.b32.xlu0 %v1653, 40
    %v2633 = vpop.permute.xlu0 %2632
    %v2635 = vsel %vm196, %v2583, 0
    %v2638 = vsel %vm321, %v2633, 0
    %2640 = vmatprep.subr.bf16.mxu0 0
    %2641 = vmatpush1.bf16.msra.mxu0 %v2638
    %2642 = vmatprep.subr.bf16.mxu0 0
    %2643 = vmatpush1.bf16.msra.mxu0 0
    %2644 = vmatprep.subr.bf16.mxu0 0
    %2645 = vmatpush1.bf16.msra.mxu0 0
    %2646 = vmatprep.subr.bf16.mxu0 0
    %2647 = vmatpush1.bf16.msra.mxu0 0
    %2648 = vmatprep.subr.bf16.mxu0 0
    %2649 = vmatpush1.bf16.msra.mxu0 0
    %2650 = vmatprep.subr.bf16.mxu0 0
    %2651 = vmatpush1.bf16.msra.mxu0 0
    %2652 = vmatprep.subr.bf16.mxu0 0
    %2653 = vmatpush1.bf16.msra.mxu0 0
    %2654 = vmatprep.subr.bf16.mxu0 0
    %2655 = vmatpush1.bf16.msra.mxu0 0
    %2656 = vmatprep.subr.bf16.mxu0 0
    %2657 = vmatpush1.bf16.msra.mxu0 0
    %2658 = vmatprep.subr.bf16.mxu0 0
    %2659 = vmatpush1.bf16.msra.mxu0 0
    %2660 = vmatprep.subr.bf16.mxu0 0
    %2661 = vmatpush1.bf16.msra.mxu0 0
    %2662 = vmatprep.subr.bf16.mxu0 0
    %2663 = vmatpush1.bf16.msra.mxu0 0
    %2664 = vmatprep.subr.bf16.mxu0 0
    %2665 = vmatpush1.bf16.msra.mxu0 0
    %2666 = vmatprep.subr.bf16.mxu0 0
    %2667 = vmatpush1.bf16.msra.mxu0 0
    %2668 = vmatprep.subr.bf16.mxu0 0
    %2669 = vmatpush1.bf16.msra.mxu0 0
    %2670 = vmatprep.subr.bf16.mxu0 0
    %2671 = vmatpush1.bf16.msra.mxu0 0
    %2672 = vmatprep.mubr.bf16.mxu0 0
    %2673 = vmatmul.mubr.bf16.gmra.mrb[0].mxu0 %v2635
    %v2674 = vpop.f32.mrb[0].mxu0
    %v2675 = vadd.f32 0.0, %v2674
    %v2676 = vpop.f32.mrb[0].mxu0
    %v2677 = vpop.f32.mrb[0].mxu0
    %v2678 = vpop.f32.mrb[0].mxu0
    %2679 = vdwg.mxu0
    %v2680 = vpack.c.bf16 %v2675, %v2627
    %v2682 = vsel %vm196, %v2680, 0
    %v2685 = vsel %vm321, %v1649, 0
    %2687 = vmatprep.subr.bf16.mxu0 0
    %2688 = vmatpush1.bf16.msra.mxu0 %v2685
    %2689 = vmatprep.subr.bf16.mxu0 0
    %2690 = vmatpush1.bf16.msra.mxu0 0
    %2691 = vmatprep.subr.bf16.mxu0 0
    %2692 = vmatpush1.bf16.msra.mxu0 0
    %2693 = vmatprep.subr.bf16.mxu0 0
    %2694 = vmatpush1.bf16.msra.mxu0 0
    %2695 = vmatprep.subr.bf16.mxu0 0
    %2696 = vmatpush1.bf16.msra.mxu0 0
    %2697 = vmatprep.subr.bf16.mxu0 0
    %2698 = vmatpush1.bf16.msra.mxu0 0
    %2699 = vmatprep.subr.bf16.mxu0 0
    %2700 = vmatpush1.bf16.msra.mxu0 0
    %2701 = vmatprep.subr.bf16.mxu0 0
    %2702 = vmatpush1.bf16.msra.mxu0 0
    %2703 = vmatprep.subr.bf16.mxu0 0
    %2704 = vmatpush1.bf16.msra.mxu0 0
    %2705 = vmatprep.subr.bf16.mxu0 0
    %2706 = vmatpush1.bf16.msra.mxu0 0
    %2707 = vmatprep.subr.bf16.mxu0 0
    %2708 = vmatpush1.bf16.msra.mxu0 0
    %2709 = vmatprep.subr.bf16.mxu0 0
    %2710 = vmatpush1.bf16.msra.mxu0 0
    %2711 = vmatprep.subr.bf16.mxu0 0
    %2712 = vmatpush1.bf16.msra.mxu0 0
    %2713 = vmatprep.subr.bf16.mxu0 0
    %2714 = vmatpush1.bf16.msra.mxu0 0
    %2715 = vmatprep.subr.bf16.mxu0 0
    %2716 = vmatpush1.bf16.msra.mxu0 0
    %2717 = vmatprep.subr.bf16.mxu0 0
    %2718 = vmatpush1.bf16.msra.mxu0 0
    %2719 = vmatprep.mubr.bf16.mxu0 0
    %2720 = vmatmul.mubr.bf16.gmra.mrb[0].mxu0 %v2682
    %v2721 = vpop.f32.mrb[0].mxu0
    %v2722 = vadd.f32 0.0, %v2721
    %v2723 = vpop.f32.mrb[0].mxu0
    %v2724 = vpop.f32.mrb[0].mxu0
    %v2725 = vadd.f32 0.0, %v2724
    %v2726 = vpop.f32.mrb[0].mxu0
    %2727 = vdwg.mxu0
    %v2728 = vadd.f32 %v2458, %v2722
    %v2729 = vadd.f32 %v2459, %v2725
    %v2730 = vadd.f32 %v1525, %v2728
    %v2731 = vadd.f32 %v1526, %v2729
    %s2732 = scalar_lea.vmem %s8, 1
    %v2733 = vld [vmem:[%s2732] sm:$0x1]
    %v2735 = vlaneseq
    %v2736 = vshrl.u32 %v2735, 7
    %v2737 = vsub.s32 0, %v2736
    %v2738 = vrot.slane %v2733, %v2737
    %v2740 = vadd.f32 %v2730, %v2738
    %v2741 = vadd.f32 %v2731, %v2738
    %s2742 = scalar_lea.vmem %s9, 1
    %v2743 = vld [vmem:[%s2742] sm:$0x1]
    %s2744 = scalar_lea.vmem %s10, 1
    %v2745 = vld [vmem:[%s2744] sm:$0x1]
    %v2746 = vsel %vm71, %v2740, 0.0
    %2747 = vadd.xlane.f32.xlu0 %v2746
    %v2748 = vpop.xlane.xlu0 %2747
    %v2749 = vsel %vm71, %v2741, 0.0
    %2750 = vadd.xlane.f32.xlu0 %v2749
    %v2751 = vpop.xlane.xlu0 %2750
    %v2752 = vmul.f32 %v2748, %v78
    %v2753 = vmul.f32 %v2751, %v78
    %v2754 = vsub.f32 %v2740, %v2752
    %v2755 = vsub.f32 %v2741, %v2753
    %v2756 = vmul.f32 %v2754, %v2754
    %v2757 = vmul.f32 %v2755, %v2755
    %v2758 = vsel %vm71, %v2756, 0.0
    %2759 = vadd.xlane.f32.xlu0 %v2758
    %v2760 = vpop.xlane.xlu0 %2759
    %v2761 = vsel %vm71, %v2757, 0.0
    %2762 = vadd.xlane.f32.xlu0 %v2761
    %v2763 = vpop.xlane.xlu0 %2762
    %v2764 = vmul.f32 %v2760, %v78
    %v2765 = vmul.f32 %v2763, %v78
    %v2766 = vadd.f32 %v2764, 1e-05
    %v2767 = vadd.f32 %v2765, 1e-05
    %v2768 = vrsqrt.pop %v2766
    %v2769 = vrsqrt.pop %v2767
    %v2770 = vmul.f32 %v2754, %v2768
    %v2771 = vmul.f32 %v2755, %v2769
    %v2773 = vlaneseq
    %v2774 = vshrl.u32 %v2773, 7
    %v2775 = vsub.s32 0, %v2774
    %v2776 = vrot.slane %v2743, %v2775
    %v2778 = vmul.f32 %v2770, %v2776
    %v2779 = vmul.f32 %v2771, %v2776
    %v2781 = vlaneseq
    %v2782 = vshrl.u32 %v2781, 7
    %v2783 = vsub.s32 0, %v2782
    %v2784 = vrot.slane %v2745, %v2783
    %v2786 = vadd.f32 %v2778, %v2784
    %v2787 = vadd.f32 %v2779, %v2784
    %s2788 = scalar_lea.vmem %s11, 16
    %v2789 = vld [vmem:[%s2788] sm:$0xf]
    %v2790 = vld [vmem:[%s2788 + $0x4] sm:$0xf]
    %v2791 = vld [vmem:[%s2788 + $0x8] sm:$0xf]
    %v2792 = vld [vmem:[%s2788 + $0xc] sm:$0xf]
    %v2793 = vpack.c.bf16 %v2787, %v2786
    %s2794 = scalar_lea.vmem %s12, 1
    %v2795 = vld [vmem:[%s2794] sm:$0x1]
    %v2797 = vlaneseq
    %v2798 = vshrl.u32 %v2797, 7
    %v2799 = vsub.s32 0, %v2798
    %v2800 = vrot.slane %v2795, %v2799
    %v2806 = vunpack.c.l.b16 %v2789
    %v2807 = vunpack.c.l.b16 %v2790
    %v2808 = vunpack.c.l.b16 %v2791
    %v2809 = vunpack.c.l.b16 %v2792
    %v2810 = vpack.c.b16 %v2807, %v2806
    %v2811 = vpack.c.b16 %v2809, %v2808
    %v2815 = vsel %vm71, %v2793, 0
    %2817 = vmatprep.subr.bf16.mxu0 0
    %2818 = vmatpush1.bf16.msra.mxu0 %v2810
    %2819 = vmatprep.subr.bf16.mxu0 0
    %2820 = vmatpush1.bf16.msra.mxu0 %v2811
    %2821 = vmatprep.subr.bf16.mxu0 0
    %2822 = vmatpush1.bf16.msra.mxu0 0
    %2823 = vmatprep.subr.bf16.mxu0 0
    %2824 = vmatpush1.bf16.msra.mxu0 0
    %2825 = vmatprep.subr.bf16.mxu0 0
    %2826 = vmatpush1.bf16.msra.mxu0 0
    %2827 = vmatprep.subr.bf16.mxu0 0
    %2828 = vmatpush1.bf16.msra.mxu0 0
    %2829 = vmatprep.subr.bf16.mxu0 0
    %2830 = vmatpush1.bf16.msra.mxu0 0
    %2831 = vmatprep.subr.bf16.mxu0 0
    %2832 = vmatpush1.bf16.msra.mxu0 0
    %2833 = vmatprep.subr.bf16.mxu0 0
    %2834 = vmatpush1.bf16.msra.mxu0 0
    %2835 = vmatprep.subr.bf16.mxu0 0
    %2836 = vmatpush1.bf16.msra.mxu0 0
    %2837 = vmatprep.subr.bf16.mxu0 0
    %2838 = vmatpush1.bf16.msra.mxu0 0
    %2839 = vmatprep.subr.bf16.mxu0 0
    %2840 = vmatpush1.bf16.msra.mxu0 0
    %2841 = vmatprep.subr.bf16.mxu0 0
    %2842 = vmatpush1.bf16.msra.mxu0 0
    %2843 = vmatprep.subr.bf16.mxu0 0
    %2844 = vmatpush1.bf16.msra.mxu0 0
    %2845 = vmatprep.subr.bf16.mxu0 0
    %2846 = vmatpush1.bf16.msra.mxu0 0
    %2847 = vmatprep.subr.bf16.mxu0 0
    %2848 = vmatpush1.bf16.msra.mxu0 0
    %2849 = vmatprep.mubr.bf16.mxu0 0
    %2850 = vmatmul.mubr.bf16.gmra.mrb[0].mxu0 %v2815
    %v2851 = vpop.f32.mrb[0].mxu0
    %v2852 = vadd.f32 %v2800, %v2851
    %v2853 = vpop.f32.mrb[0].mxu0
    %v2854 = vpop.f32.mrb[0].mxu0
    %v2855 = vadd.f32 %v2800, %v2854
    %v2856 = vpop.f32.mrb[0].mxu0
    %2857 = vdwg.mxu0
    %v2858 = vmul.f32 %v2852, 1.702
    %v2859 = vmul.f32 %v2855, 1.702
    %v2860 = vxor.u32 %v2858, 2147483648
    %v2861 = vxor.u32 %v2859, 2147483648
    %v2862 = vmul.f32 %v2860, 1.442695
    %v2863 = vpow.pop %v2862
    %v2864 = vmul.f32 %v2861, 1.442695
    %v2865 = vpow.pop %v2864
    %v2866 = vadd.f32 %v2863, 1.0
    %v2867 = vadd.f32 %v2865, 1.0
    %v2868 = vrcp.pop %v2866
    %v2869 = vmul.f32 1.0, %v2868
    %v2870 = vrcp.pop %v2867
    %v2871 = vmul.f32 1.0, %v2870
    %v2872 = vmul.f32 %v2852, %v2869
    %v2873 = vmul.f32 %v2855, %v2871
    %s2874 = scalar_lea.vmem %s13, 64
    %v2875 = vld [vmem:[%s2874] sm:$0xf]
    %v2876 = vld [vmem:[%s2874 + $0x4] sm:$0xf]
    %v2877 = vld [vmem:[%s2874 + $0x8] sm:$0xf]
    %v2878 = vld [vmem:[%s2874 + $0xc] sm:$0xf]
    %v2879 = vld [vmem:[%s2874 + $0x10] sm:$0xf]
    %v2880 = vld [vmem:[%s2874 + $0x14] sm:$0xf]
    %v2881 = vld [vmem:[%s2874 + $0x18] sm:$0xf]
    %v2882 = vld [vmem:[%s2874 + $0x1c] sm:$0xf]
    %v2883 = vld [vmem:[%s2874 + $0x20] sm:$0xf]
    %v2884 = vld [vmem:[%s2874 + $0x24] sm:$0xf]
    %v2885 = vld [vmem:[%s2874 + $0x28] sm:$0xf]
    %v2886 = vld [vmem:[%s2874 + $0x2c] sm:$0xf]
    %v2887 = vld [vmem:[%s2874 + $0x30] sm:$0xf]
    %v2888 = vld [vmem:[%s2874 + $0x34] sm:$0xf]
    %v2889 = vld [vmem:[%s2874 + $0x38] sm:$0xf]
    %v2890 = vld [vmem:[%s2874 + $0x3c] sm:$0xf]
    %v2891 = vpack.c.bf16 %v2873, %v2872
    %v2908 = vunpack.c.l.b16 %v2875
    %v2909 = vunpack.c.l.b16 %v2876
    %v2910 = vunpack.c.l.b16 %v2877
    %v2911 = vunpack.c.l.b16 %v2878
    %v2912 = vunpack.c.l.b16 %v2879
    %v2913 = vunpack.c.l.b16 %v2880
    %v2914 = vunpack.c.l.b16 %v2881
    %v2915 = vunpack.c.l.b16 %v2882
    %v2916 = vunpack.c.l.b16 %v2883
    %v2917 = vunpack.c.l.b16 %v2884
    %v2918 = vunpack.c.l.b16 %v2885
    %v2919 = vunpack.c.l.b16 %v2886
    %v2920 = vunpack.c.l.b16 %v2887
    %v2921 = vunpack.c.l.b16 %v2888
    %v2922 = vunpack.c.l.b16 %v2889
    %v2923 = vunpack.c.l.b16 %v2890
    %v2924 = vpack.c.b16 %v2909, %v2908
    %v2925 = vpack.c.b16 %v2911, %v2910
    %v2926 = vpack.c.b16 %v2913, %v2912
    %v2927 = vpack.c.b16 %v2915, %v2914
    %v2928 = vpack.c.b16 %v2917, %v2916
    %v2929 = vpack.c.b16 %v2919, %v2918
    %v2930 = vpack.c.b16 %v2921, %v2920
    %v2931 = vpack.c.b16 %v2923, %v2922
    %2940 = vmatprep.subr.bf16.mxu0 0
    %2941 = vmatpush1.bf16.msra.mxu0 %v2924
    %2942 = vmatprep.subr.bf16.mxu0 0
    %2943 = vmatpush1.bf16.msra.mxu0 %v2925
    %2944 = vmatprep.subr.bf16.mxu0 0
    %2945 = vmatpush1.bf16.msra.mxu0 %v2926
    %2946 = vmatprep.subr.bf16.mxu0 0
    %2947 = vmatpush1.bf16.msra.mxu0 %v2927
    %2948 = vmatprep.subr.bf16.mxu0 0
    %2949 = vmatpush1.bf16.msra.mxu0 %v2928
    %2950 = vmatprep.subr.bf16.mxu0 0
    %2951 = vmatpush1.bf16.msra.mxu0 %v2929
    %2952 = vmatprep.subr.bf16.mxu0 0
    %2953 = vmatpush1.bf16.msra.mxu0 %v2930
    %2954 = vmatprep.subr.bf16.mxu0 0
    %2955 = vmatpush1.bf16.msra.mxu0 %v2931
    %2956 = vmatprep.subr.bf16.mxu0 0
    %2957 = vmatpush1.bf16.msra.mxu0 0
    %2958 = vmatprep.subr.bf16.mxu0 0
    %2959 = vmatpush1.bf16.msra.mxu0 0
    %2960 = vmatprep.subr.bf16.mxu0 0
    %2961 = vmatpush1.bf16.msra.mxu0 0
    %2962 = vmatprep.subr.bf16.mxu0 0
    %2963 = vmatpush1.bf16.msra.mxu0 0
    %2964 = vmatprep.subr.bf16.mxu0 0
    %2965 = vmatpush1.bf16.msra.mxu0 0
    %2966 = vmatprep.subr.bf16.mxu0 0
    %2967 = vmatpush1.bf16.msra.mxu0 0
    %2968 = vmatprep.subr.bf16.mxu0 0
    %2969 = vmatpush1.bf16.msra.mxu0 0
    %2970 = vmatprep.subr.bf16.mxu0 0
    %2971 = vmatpush1.bf16.msra.mxu0 0
    %2972 = vmatprep.mubr.bf16.mxu0 0
    %2973 = vmatmul.mubr.bf16.gmra.mrb[0].mxu0 %v2891
    %v2974 = vpop.f32.mrb[0].mxu0
    %v2975 = vadd.f32 0.0, %v2974
    %v2976 = vpop.f32.mrb[0].mxu0
    %v2977 = vpop.f32.mrb[0].mxu0
    %v2978 = vadd.f32 0.0, %v2977
    %v2979 = vpop.f32.mrb[0].mxu0
    %2980 = vdwg.mxu0
    %v2981 = vadd.f32 %v2740, %v2975
    %v2982 = vadd.f32 %v2741, %v2978
    %s2983 = scalar_lea.vmem %s14, 1
    %v2984 = vld [vmem:[%s2983] sm:$0x1]
    %v2986 = vlaneseq
    %v2987 = vshrl.u32 %v2986, 7
    %v2988 = vsub.s32 0, %v2987
    %v2989 = vrot.slane %v2984, %v2988
    %v2991 = vadd.f32 %v2981, %v2989
    %v2992 = vadd.f32 %v2982, %v2989
    %v2993 = vld [vmem:[%s15] sm:$0x1]
    %v2994 = vld [vmem:[%s16] sm:$0x1]
    %v2995 = vsel %vm71, %v2991, 0.0
    %2996 = vadd.xlane.f32.xlu0 %v2995
    %v2997 = vpop.xlane.xlu0 %2996
    %v2998 = vsel %vm71, %v2992, 0.0
    %2999 = vadd.xlane.f32.xlu0 %v2998
    %v3000 = vpop.xlane.xlu0 %2999
    %v3001 = vmul.f32 %v2997, %v78
    %v3002 = vmul.f32 %v3000, %v78
    %v3003 = vsub.f32 %v2991, %v3001
    %v3004 = vsub.f32 %v2992, %v3002
    %v3005 = vmul.f32 %v3003, %v3003
    %v3006 = vmul.f32 %v3004, %v3004
    %v3007 = vsel %vm71, %v3005, 0.0
    %3008 = vadd.xlane.f32.xlu0 %v3007
    %v3009 = vpop.xlane.xlu0 %3008
    %v3010 = vsel %vm71, %v3006, 0.0
    %3011 = vadd.xlane.f32.xlu0 %v3010
    %v3012 = vpop.xlane.xlu0 %3011
    %v3013 = vmul.f32 %v3009, %v78
    %v3014 = vmul.f32 %v3012, %v78
    %v3015 = vadd.f32 %v3013, 1e-05
    %v3016 = vadd.f32 %v3014, 1e-05
    %v3017 = vrsqrt.pop %v3015
    %v3018 = vrsqrt.pop %v3016
    %v3019 = vmul.f32 %v3003, %v3017
    %v3020 = vmul.f32 %v3004, %v3018
    %v3022 = vlaneseq
    %v3023 = vshrl.u32 %v3022, 7
    %v3024 = vsub.s32 0, %v3023
    %v3025 = vrot.slane %v2993, %v3024
    %v3027 = vmul.f32 %v3019, %v3025
    %v3028 = vmul.f32 %v3020, %v3025
    %v3030 = vlaneseq
    %v3031 = vshrl.u32 %v3030, 7
    %v3032 = vsub.s32 0, %v3031
    %v3033 = vrot.slane %v2994, %v3032
    %v3035 = vadd.f32 %v3027, %v3033
    %v3036 = vadd.f32 %v3028, %v3033
    %3037 = vst.msk [vmem:[#allocation2] sm:$0xff] %vm71, %v3035
    %3038 = vst.msk [vmem:[#allocation2 + $0x8] sm:$0xff] %vm71, %v3036
    %s3039 = sld [smem:[#allocation4]]
    %s3040 = scalar_lea.vmem [#allocation2], %s3039
    %v3041 = vld [vmem:[%s3040] sm:$0x1]
    %s3042 = sld [smem:[#allocation4 + $0x1]]
    %s3043 = sadd.s32 %s3042, 8
    %s3044 = scalar_lea.vmem [#allocation2], %s3043
    %v3045 = vld [vmem:[%s3044] sm:$0x1]
    %v3047 = vrot.slane %v3045, 7
    %vm3049 = vcmask 1040384
    %v3050 = vsel %vm3049, %v3041, %v3047
    %v3051 = vld [vmem:[%s17] sm:$0xf]
    %v3052 = vld [vmem:[%s17 + $0x4] sm:$0xf]
    %v3053 = vld [vmem:[%s17 + $0x8] sm:$0xf]
    %v3054 = vld [vmem:[%s17 + $0xc] sm:$0xf]
    %v3055 = vpack.c.bf16 %v3050, %v3050
    %v3060 = vunpack.c.l.b16 %v3051
    %v3061 = vunpack.c.l.b16 %v3052
    %v3062 = vunpack.c.l.b16 %v3053
    %v3063 = vunpack.c.l.b16 %v3054
    %v3064 = vpack.c.b16 %v3061, %v3060
    %v3065 = vpack.c.b16 %v3063, %v3062
    %v3069 = vsel %vm71, %v3055, 0
    %3071 = vmatprep.subr.bf16.mxu0 0
    %3072 = vmatpush1.bf16.msra.mxu0 %v3064
    %3073 = vmatprep.subr.bf16.mxu0 0
    %3074 = vmatpush1.bf16.msra.mxu0 %v3065
    %3075 = vmatprep.subr.bf16.mxu0 0
    %3076 = vmatpush1.bf16.msra.mxu0 0
    %3077 = vmatprep.subr.bf16.mxu0 0
    %3078 = vmatpush1.bf16.msra.mxu0 0
    %3079 = vmatprep.subr.bf16.mxu0 0
    %3080 = vmatpush1.bf16.msra.mxu0 0
    %3081 = vmatprep.subr.bf16.mxu0 0
    %3082 = vmatpush1.bf16.msra.mxu0 0
    %3083 = vmatprep.subr.bf16.mxu0 0
    %3084 = vmatpush1.bf16.msra.mxu0 0
    %3085 = vmatprep.subr.bf16.mxu0 0
    %3086 = vmatpush1.bf16.msra.mxu0 0
    %3087 = vmatprep.subr.bf16.mxu0 0
    %3088 = vmatpush1.bf16.msra.mxu0 0
    %3089 = vmatprep.subr.bf16.mxu0 0
    %3090 = vmatpush1.bf16.msra.mxu0 0
    %3091 = vmatprep.subr.bf16.mxu0 0
    %3092 = vmatpush1.bf16.msra.mxu0 0
    %3093 = vmatprep.subr.bf16.mxu0 0
    %3094 = vmatpush1.bf16.msra.mxu0 0
    %3095 = vmatprep.subr.bf16.mxu0 0
    %3096 = vmatpush1.bf16.msra.mxu0 0
    %3097 = vmatprep.subr.bf16.mxu0 0
    %3098 = vmatpush1.bf16.msra.mxu0 0
    %3099 = vmatprep.subr.bf16.mxu0 0
    %3100 = vmatpush1.bf16.msra.mxu0 0
    %3101 = vmatprep.subr.bf16.mxu0 0
    %3102 = vmatpush1.bf16.msra.mxu0 0
    %3103 = vmatprep.mubr.bf16.mxu0 0
    %3104 = vmatmul.mubr.bf16.gmra.mrb[0].mxu0 %v3069
    %v3105 = vpop.f32.mrb[0].mxu0
    %v3106 = vadd.f32 0.0, %v3105
    %v3107 = vpop.f32.mrb[0].mxu0
    %v3108 = vpop.f32.mrb[0].mxu0
    %v3109 = vpop.f32.mrb[0].mxu0
    %3110 = vdwg.mxu0
    %vm3111 = vcmask 123904
    %3112 = vst.msk [vmem:[#allocation5] sm:$0x3] %vm3111, %v3106
    // Predicated region
    $region70: #{clip_text_encoder_forward.1} parent=1 // pred_check
      _
    $region71: #{clip_text_encoder_forward.1} parent=1 // pred_check_branch
      %3114 = sbr.rel (0) target = $region73
    $region72: #{clip_text_encoder_forward.1} parent=1 // pred_region
      %s3116 = ssub.s32 32, 32
      %3117 = vsyncadd [#allocation6], %s3116
      %s3119 = sshll.u32 [#allocation5], 4
      %s3120 = int_to_ptr.vmem [resolvable:$true] %s3119
      %3122 = dma.vmem_to_hbm [thread:$0]  %s3120, 32, %s18, [#allocation6]
    $region73: #{clip_text_encoder_forward.1} parent=1 // pred_fallthru
      _
    // Predicated region
    $region74: #{clip_text_encoder_forward.1} parent=1 // pred_check
      _
    $region75: #{clip_text_encoder_forward.1} parent=1 // pred_check_branch
      %3124 = sbr.rel (0) target = $region77
    $region76: #{clip_text_encoder_forward.1} parent=1 // pred_region
      %3125 = dma.done [#allocation6], 32
    $region77: #{clip_text_encoder_forward.1} parent=1 // pred_fallthru
      _
    %3126 = vsyncpa [#allocation6], 1

</llo_original>
